<compile_context>
chip_gen: v6e
topology: v6e:2x2x1
jax: 0.10.0
libtpu: 0.0.40
codegen_flags: <defaults>
</compile_context>

<pallas_src>
import math
from functools import partial

import jax
import jax.numpy as jnp
from jax import lax
from jax.experimental import pallas as pl
from jax.experimental.pallas import tpu as pltpu

PAD = 0


# --------------------------------------------------------------------------
# helpers
# --------------------------------------------------------------------------
def _round_up(x, m):
    return ((x + m - 1) // m) * m


def _pick_tile(dim, candidates):
    """Largest candidate that divides dim; otherwise the full dim (always legal)."""
    for c in candidates:
        if c <= dim and dim % c == 0:
            return c
    return dim


# --------------------------------------------------------------------------
# Pallas kernels
# --------------------------------------------------------------------------
def _linear_kernel(x_ref, w_ref, b_ref, o_ref, acc_ref, *, relu):
    # grid = (M/tm, N/tn, K/tk); K is the innermost ("arbitrary") reduction axis.
    @pl.when(pl.program_id(2) == 0)
    def _():
        acc_ref[...] = jnp.zeros_like(acc_ref)

    acc_ref[...] += jnp.dot(x_ref[...], w_ref[...],
                            preferred_element_type=jnp.float32)

    @pl.when(pl.program_id(2) == pl.num_programs(2) - 1)
    def _():
        y = acc_ref[...] + b_ref[...]
        if relu:
            y = jnp.maximum(y, 0.0)
        o_ref[...] = y.astype(o_ref.dtype)


def pallas_linear(x2d, w_t, b, relu=False, out_dtype=jnp.bfloat16):
    """x2d: (M, K), w_t: (K, N) pre-transposed, b: (N,)  ->  (M, N) in out_dtype."""
    M, K = x2d.shape
    K2, N = w_t.shape
    assert K == K2
    tm = min(128, _round_up(M, 16))          # 128 row tile at scale, full rows when tiny
    Mp = _round_up(M, tm)
    if Mp != M:
        x2d = jnp.pad(x2d, ((0, Mp - M), (0, 0)))
    tn = _pick_tile(N, (512, 384, 256, 128))
    tk = _pick_tile(K, (512, 256, 128))
    b2 = b.reshape(1, N).astype(jnp.float32)

    out = pl.pallas_call(
        partial(_linear_kernel, relu=relu),
        out_shape=jax.ShapeDtypeStruct((Mp, N), out_dtype),
        grid=(Mp // tm, N // tn, K // tk),
        in_specs=[
            pl.BlockSpec((tm, tk), lambda i, j, k: (i, k)),
            pl.BlockSpec((tk, tn), lambda i, j, k: (k, j)),
            pl.BlockSpec((1, tn), lambda i, j, k: (0, j)),
        ],
        out_specs=pl.BlockSpec((tm, tn), lambda i, j, k: (i, j)),
        scratch_shapes=[pltpu.VMEM((tm, tn), jnp.float32)],
        compiler_params=pltpu.CompilerParams(
            dimension_semantics=("parallel", "parallel", "arbitrary")),
    )(x2d.astype(jnp.bfloat16), w_t.astype(jnp.bfloat16), b2)
    return out[:M] if Mp != M else out


def _linear_add_ln_kernel(x_ref, w_ref, b_ref, r_ref, g_ref, be_ref, o_ref, acc_ref, *, eps):
    # grid = (M/tm, K/tk); full hidden dim N per block (needed for the LN row statistics).
    @pl.when(pl.program_id(1) == 0)
    def _():
        acc_ref[...] = jnp.zeros_like(acc_ref)

    acc_ref[...] += jnp.dot(x_ref[...], w_ref[...],
                            preferred_element_type=jnp.float32)

    @pl.when(pl.program_id(1) == pl.num_programs(1) - 1)
    def _():
        # dropout(p=0)(linear) + residual, then LayerNorm1d (biased variance), f32 stats.
        y = acc_ref[...] + b_ref[...] + r_ref[...].astype(jnp.float32)
        mean = jnp.mean(y, axis=-1, keepdims=True)
        yc = y - mean
        var = jnp.mean(yc * yc, axis=-1, keepdims=True)
        yn = yc * lax.rsqrt(var + eps)
        o_ref[...] = (yn * g_ref[...] + be_ref[...]).astype(o_ref.dtype)


def pallas_linear_add_ln(x2d, w_t, b, res2d, gamma, beta, eps=1e-6, out_dtype=jnp.bfloat16):
    """LN((x2d @ w_t + b) + res2d) fused in one kernel.  w_t: (K, N), N = hidden."""
    M, K = x2d.shape
    K2, N = w_t.shape
    assert K == K2 and res2d.shape == (M, N)
    tm = min(128, _round_up(M, 16))
    Mp = _round_up(M, tm)
    if Mp != M:
        x2d = jnp.pad(x2d, ((0, Mp - M), (0, 0)))
        res2d = jnp.pad(res2d, ((0, Mp - M), (0, 0)))
    tk = _pick_tile(K, (512, 256, 128))
    b2 = b.reshape(1, N).astype(jnp.float32)
    g2 = gamma.reshape(1, N).astype(jnp.float32)
    be2 = beta.reshape(1, N).astype(jnp.float32)

    out = pl.pallas_call(
        partial(_linear_add_ln_kernel, eps=eps),
        out_shape=jax.ShapeDtypeStruct((Mp, N), out_dtype),
        grid=(Mp // tm, K // tk),
        in_specs=[
            pl.BlockSpec((tm, tk), lambda i, k: (i, k)),
            pl.BlockSpec((tk, N), lambda i, k: (k, 0)),
            pl.BlockSpec((1, N), lambda i, k: (0, 0)),
            pl.BlockSpec((tm, N), lambda i, k: (i, 0)),
            pl.BlockSpec((1, N), lambda i, k: (0, 0)),
            pl.BlockSpec((1, N), lambda i, k: (0, 0)),
        ],
        out_specs=pl.BlockSpec((tm, N), lambda i, k: (i, 0)),
        scratch_shapes=[pltpu.VMEM((tm, N), jnp.float32)],
        compiler_params=pltpu.CompilerParams(
            dimension_semantics=("parallel", "arbitrary")),
    )(x2d.astype(jnp.bfloat16), w_t.astype(jnp.bfloat16), b2,
      res2d.astype(jnp.bfloat16), g2, be2)
    return out[:M] if Mp != M else out


def _attn_kernel(q_ref, k_ref, v_ref, mq_ref, mk_ref, o_ref, *, num_heads, dh, scale, causal):
    # q_ref: (tq, Hd), k_ref/v_ref: (Tk, Hd), mq_ref: (tq, 1), mk_ref: (1, Tk), o_ref: (tq, Hd)
    tq = q_ref.shape[0]
    Tk = k_ref.shape[0]

    # mask built in-kernel: key padding | query padding | causal (col > row)
    masked = (mk_ref[...] > 0.5) | (mq_ref[...] > 0.5)          # broadcasts to (tq, Tk)
    if causal:
        row = lax.broadcasted_iota(jnp.int32, (tq, Tk), 0) + pl.program_id(1) * tq
        col = lax.broadcasted_iota(jnp.int32, (tq, Tk), 1)
        masked = masked | (col > row)
    masked = jnp.broadcast_to(masked, (tq, Tk))
    neg = jnp.float32(-1e9)

    outs = []
    for h in range(num_heads):                                   # static unroll over heads
        sl = pl.ds(h * dh, dh)
        qh = q_ref[:, sl]
        kh = k_ref[:, sl]
        vh = v_ref[:, sl]
        # contract last dims directly (no k.T relayout)
        s = lax.dot_general(qh, kh, (((1,), (1,)), ((), ())),
                            preferred_element_type=jnp.float32) * scale
        s = jnp.where(masked, neg, s)                            # masked_fill_(mask, -1e9)
        s = s - jnp.max(s, axis=-1, keepdims=True)
        p = jnp.exp(s)
        p = p * pl.reciprocal(jnp.sum(p, axis=-1, keepdims=True), approx=True)
        outs.append(jnp.dot(p.astype(vh.dtype), vh, preferred_element_type=jnp.float32))
    # single lane-dense (tq, Hd) store
    o_ref[...] = jnp.concatenate(outs, axis=-1).astype(o_ref.dtype)


def pallas_attention(q, k, v, mq, mk, *, num_heads, causal):
    """q: (B,Tq,Hd), k/v: (B,Tk,Hd), mq: (B,Tq,1), mk: (B,1,Tk) (1.0 == masked)."""
    B, Tq, Hd = q.shape
    Tk = k.shape[1]
    dh = Hd // num_heads
    scale = 1.0 / math.sqrt(dh)
    tq = _pick_tile(Tq, (256, 128))          # tile queries; full K/V per batch
    # TODO(synk): for very long Tk, switch to flash-style online softmax over Tk blocks.
    return pl.pallas_call(
        partial(_attn_kernel, num_heads=num_heads, dh=dh, scale=scale, causal=causal),
        out_shape=jax.ShapeDtypeStruct((B, Tq, Hd), jnp.bfloat16),
        grid=(B, Tq // tq),
        in_specs=[
            pl.BlockSpec((None, tq, Hd), lambda b, i: (b, i, 0)),
            pl.BlockSpec((None, Tk, Hd), lambda b, i: (b, 0, 0)),
            pl.BlockSpec((None, Tk, Hd), lambda b, i: (b, 0, 0)),
            pl.BlockSpec((None, tq, 1), lambda b, i: (b, i, 0)),
            pl.BlockSpec((None, 1, Tk), lambda b, i: (b, 0, 0)),
        ],
        out_specs=pl.BlockSpec((None, tq, Hd), lambda b, i: (b, i, 0)),
        compiler_params=pltpu.CompilerParams(
            dimension_semantics=("parallel", "parallel")),
    )(q.astype(jnp.bfloat16), k.astype(jnp.bfloat16), v.astype(jnp.bfloat16), mq, mk)


# --------------------------------------------------------------------------
# Model (glue in plain JAX, compute in the kernels above)
# --------------------------------------------------------------------------
def positional_embedding(length, channels, min_timescale=1.0, max_timescale=10000.0):
    assert channels % 2 == 0
    num_ts = channels // 2
    log_inc = math.log(float(max_timescale) / float(min_timescale)) / (float(num_ts) - 1.0)
    position = jnp.arange(length, dtype=jnp.float32)
    inv_ts = jnp.exp(jnp.arange(num_ts, dtype=jnp.float32) * (-log_inc)) * min_timescale
    scaled = position[:, None] * inv_ts[None, :]
    return jnp.concatenate([jnp.sin(scaled), jnp.cos(scaled)], axis=1)  # (length, channels)


def decoder_block(x, context, bp, mq_self, mk_self, mq_cross, mk_cross, num_heads):
    B, T, Hd = x.shape
    Tk = context.shape[1]
    x2 = x.reshape(B * T, Hd)

    # ---- masked self-attention + fused out-proj/residual/LayerNorm1 ----
    qkv = pallas_linear(x2, bp["sa_w_qkv"], bp["sa_b_qkv"])              # fused QKV
    q = qkv[:, :Hd].reshape(B, T, Hd)
    k = qkv[:, Hd:2 * Hd].reshape(B, T, Hd)
    v = qkv[:, 2 * Hd:].reshape(B, T, Hd)
    a = pallas_attention(q, k, v, mq_self, mk_self, num_heads=num_heads, causal=True)
    x2 = pallas_linear_add_ln(a.reshape(B * T, Hd), bp["sa_wo"], bp["sa_bo"],
                              x2, bp["ln1_g"], bp["ln1_b"])

    # ---- cross-attention + fused out-proj/residual/LayerNorm2 ----
    q = pallas_linear(x2, bp["ca_wq"], bp["ca_bq"]).reshape(B, T, Hd)
    kv = pallas_linear(context.reshape(B * Tk, Hd), bp["ca_w_kv"], bp["ca_b_kv"])  # fused KV
    k = kv[:, :Hd].reshape(B, Tk, Hd)
    v = kv[:, Hd:].reshape(B, Tk, Hd)
    a = pallas_attention(q, k, v, mq_cross, mk_cross, num_heads=num_heads, causal=False)
    x2 = pallas_linear_add_ln(a.reshape(B * T, Hd), bp["ca_wo"], bp["ca_bo"],
                              x2, bp["ln2_g"], bp["ln2_b"])

    # ---- FFN + fused residual/LayerNorm3 ----
    h = pallas_linear(x2, bp["fc1_w"], bp["fc1_b"], relu=True)
    x2 = pallas_linear_add_ln(h, bp["fc2_w"], bp["fc2_b"],
                              x2, bp["ln3_g"], bp["ln3_b"])
    return x2.reshape(B, T, Hd)


def transformer_decoder_forward(params, inputs, context_outputs, context_mask, *, num_heads):
    B, T = inputs.shape
    vocab, Hd = params["embedding"].shape
    Tsrc = context_outputs.shape[1]

    pad = (inputs == PAD)                                        # (B, T) bool
    # embedding gather + positional table kept in plain JAX glue
    x = params["embedding"][inputs] * (Hd ** 0.5)
    x = x + positional_embedding(T, Hd)[None, :, :]              # dropout p=0 -> identity
    x = x.astype(jnp.bfloat16)
    context = context_outputs.astype(jnp.bfloat16)

    # tiny per-row/per-col mask vectors (the full (B,T,T) mask is never built)
    mq_self = pad[:, :, None].astype(jnp.float32)                # (B, T, 1)
    mk_self = pad[:, None, :].astype(jnp.float32)                # (B, 1, T)
    mq_cross = jnp.zeros((B, T, 1), jnp.float32)                 # no query mask for cross-attn
    if context_mask is not None:
        mk_cross = context_mask[:, None, :].astype(jnp.float32)  # (B, 1, Tsrc)
    else:
        mk_cross = jnp.zeros((B, 1, Tsrc), jnp.float32)

    for bp in params["blocks"]:
        x = decoder_block(x, context, bp, mq_self, mk_self, mq_cross, mk_cross, num_heads)

    # tied classifier: weight == embedding, pre-transposed once at init (no in-jit .T)
    logits = pallas_linear(x.reshape(B * T, Hd), params["cls_w_t"], params["cls_b"],
                           out_dtype=jnp.float32).reshape(B, T, vocab)
    return logits


# --------------------------------------------------------------------------
# Deterministic parameter init (synthetic; shapes from the module __init__)
# Weights stored bf16, pre-transposed [in, out]; QKV / KV pre-concatenated.
# --------------------------------------------------------------------------
def init_params(key, vocab, hidden, inner, num_layers):
    keys = iter(jax.random.split(key, 2 + num_layers * 12))

    def lin(in_f, out_f):
        w = jax.random.normal(next(keys), (in_f, out_f), jnp.float32) * 0.05
        return w.astype(jnp.bfloat16), jnp.zeros((out_f,), jnp.float32)

    emb = jax.random.normal(next(keys), (vocab, hidden), jnp.float32) * 0.05
    emb = emb.at[PAD].set(0.0)                                   # padding_idx=PAD

    blocks = []
    for _ in range(num_layers):
        # masked self-attention: fused QKV
        wq, bq = lin(hidden, hidden)
        wk, bk = lin(hidden, hidden)
        wv, bv = lin(hidden, hidden)
        sa_wo, sa_bo = lin(hidden, hidden)
        # cross-attention: Q separate, fused KV (applied to encoder context)
        ca_wq, ca_bq = lin(hidden, hidden)
        cwk, cbk = lin(hidden, hidden)
        cwv, cbv = lin(hidden, hidden)
        ca_wo, ca_bo = lin(hidden, hidden)
        fc1_w, fc1_b = lin(hidden, inner)
        fc2_w, fc2_b = lin(inner, hidden)
        blocks.append(dict(
            sa_w_qkv=jnp.concatenate([wq, wk, wv], axis=1),
            sa_b_qkv=jnp.concatenate([bq, bk, bv]),
            sa_wo=sa_wo, sa_bo=sa_bo,
            ca_wq=ca_wq, ca_bq=ca_bq,
            ca_w_kv=jnp.concatenate([cwk, cwv], axis=1),
            ca_b_kv=jnp.concatenate([cbk, cbv]),
            ca_wo=ca_wo, ca_bo=ca_bo,
            ln1_g=jnp.ones(hidden, jnp.float32), ln1_b=jnp.zeros(hidden, jnp.float32),
            ln2_g=jnp.ones(hidden, jnp.float32), ln2_b=jnp.zeros(hidden, jnp.float32),
            ln3_g=jnp.ones(hidden, jnp.float32), ln3_b=jnp.zeros(hidden, jnp.float32),
            fc1_w=fc1_w, fc1_b=fc1_b, fc2_w=fc2_w, fc2_b=fc2_b,
        ))
    return dict(
        embedding=emb,                                           # f32 for the gather
        cls_w_t=emb.T.astype(jnp.bfloat16),                      # tied classifier, pre-transposed
        cls_b=jnp.zeros((vocab,), jnp.float32),
        blocks=blocks,
    )


# --------------------------------------------------------------------------
if __name__ == "__main__":
    key = jax.random.PRNGKey(0)
    B, T, Tsrc = 2, 8, 8
    vocab, hidden, inner, num_layers, num_heads = 256, 128, 256, 2, 4

    kp, ki, kc = jax.random.split(key, 3)
    params = init_params(kp, vocab, hidden, inner, num_layers)

    inputs = jax.random.randint(ki, (B, T), 1, vocab, dtype=jnp.int32)
    inputs = inputs.at[0, -2:].set(PAD)                          # some padded target tokens
    context_outputs = jax.random.normal(kc, (B, Tsrc, hidden), jnp.float32)
    context_mask = jnp.zeros((B, Tsrc), dtype=bool).at[1, -1].set(True)

    fwd = jax.jit(partial(transformer_decoder_forward, num_heads=num_heads))
    logits = fwd(params, inputs, context_outputs, context_mask)
    jax.block_until_ready(logits)
    assert logits.shape == (B, T, vocab) and logits.dtype == jnp.float32
    assert bool(jnp.all(jnp.isfinite(logits)))
    print("KERNEL_OK")
</pallas_src>

<mosaic_0001>
module attributes {stable_mosaic.version = 11 : i64} {
  func.func @_linear_kernel(%arg0: i32, %arg1: i32, %arg2: i32, %arg3: memref<16x128xbf16, #tpu.memory_space<vmem>>, %arg4: memref<128x384xbf16, #tpu.memory_space<vmem>>, %arg5: memref<1x384xf32, #tpu.memory_space<vmem>>, %arg6: memref<16x384xbf16, #tpu.memory_space<vmem>>, %arg7: memref<16x384xf32, #tpu.memory_space<vmem>>) attributes {dimension_semantics = [#tpu.dimension_semantics<parallel>, #tpu.dimension_semantics<parallel>, #tpu.dimension_semantics<arbitrary>], iteration_bounds = array<i64: 1, 1, 1>, scalar_prefetch = 0 : i64, scratch_operands = 1 : i64, tpu.core_type = #tpu.core_type<tc>, window_params = [{transform_indices = @transform_0, window_bounds = array<i64: 16, 128>}, {transform_indices = @transform_1, window_bounds = array<i64: 128, 384>}, {transform_indices = @transform_2, window_bounds = array<i64: 1, 384>}, {transform_indices = @transform_3, window_bounds = array<i64: 16, 384>}]} {
    %c0_i32 = arith.constant 0 : i32
    %0 = arith.cmpi eq, %arg2, %c0_i32 : i32
    %1 = arith.extui %0 : i1 to i32
    %c0_i32_0 = arith.constant 0 : i32
    %2 = arith.cmpi ne, %1, %c0_i32_0 : i32
    scf.if %2 {
      %cst_10 = arith.constant 0.000000e+00 : f32
      %12 = vector.broadcast %cst_10 : f32 to vector<16x384xf32>
      %c0_11 = arith.constant 0 : index
      %c0_12 = arith.constant 0 : index
      %13 = vector.load %arg7[%c0_11, %c0_12] : memref<16x384xf32, #tpu.memory_space<vmem>>, vector<16x384xf32>
      tpu.vector_store %arg7[%c0_11, %c0_12], %12 {strides = array<i32>} : memref<16x384xf32, #tpu.memory_space<vmem>>, vector<16x384xf32>,
    } else {
    }
    %c0 = arith.constant 0 : index
    %c0_1 = arith.constant 0 : index
    %3 = vector.load %arg7[%c0, %c0_1] : memref<16x384xf32, #tpu.memory_space<vmem>>, vector<16x384xf32>
    %c0_2 = arith.constant 0 : index
    %c0_3 = arith.constant 0 : index
    %4 = vector.load %arg3[%c0_2, %c0_3] : memref<16x128xbf16, #tpu.memory_space<vmem>>, vector<16x128xbf16>
    %c0_4 = arith.constant 0 : index
    %c0_5 = arith.constant 0 : index
    %5 = vector.load %arg4[%c0_4, %c0_5] : memref<128x384xbf16, #tpu.memory_space<vmem>>, vector<128x384xbf16>
    %cst = arith.constant dense<0.000000e+00> : vector<16x384xf32>
    %6 = tpu.matmul %4, %5, %cst {dimension_numbers = #tpu.dot_dimension_numbers<[1], [0], [0], [1], [0, 0, 1, 1], [], []>} : vector<16x128xbf16>, vector<128x384xbf16>, vector<16x384xf32> -> vector<16x384xf32>
    %7 = arith.addf %3, %6 : vector<16x384xf32>
    %c0_6 = arith.constant 0 : index
    %c0_7 = arith.constant 0 : index
    %8 = vector.load %arg7[%c0_6, %c0_7] : memref<16x384xf32, #tpu.memory_space<vmem>>, vector<16x384xf32>
    tpu.vector_store %arg7[%c0_6, %c0_7], %7 {strides = array<i32>} : memref<16x384xf32, #tpu.memory_space<vmem>>, vector<16x384xf32>,
    %c0_i32_8 = arith.constant 0 : i32
    %9 = arith.cmpi eq, %arg2, %c0_i32_8 : i32
    %10 = arith.extui %9 : i1 to i32
    %c0_i32_9 = arith.constant 0 : i32
    %11 = arith.cmpi ne, %10, %c0_i32_9 : i32
    scf.if %11 {
      %c0_10 = arith.constant 0 : index
      %c0_11 = arith.constant 0 : index
      %12 = vector.load %arg7[%c0_10, %c0_11] : memref<16x384xf32, #tpu.memory_space<vmem>>, vector<16x384xf32>
      %c0_12 = arith.constant 0 : index
      %c0_13 = arith.constant 0 : index
      %13 = vector.load %arg5[%c0_12, %c0_13] : memref<1x384xf32, #tpu.memory_space<vmem>>, vector<1x384xf32>
      %14 = vector.broadcast %13 : vector<1x384xf32> to vector<16x384xf32>
      %15 = arith.addf %12, %14 : vector<16x384xf32>
      %16 = arith.truncf %15 : vector<16x384xf32> to vector<16x384xbf16>
      %c0_14 = arith.constant 0 : index
      %c0_15 = arith.constant 0 : index
      %17 = vector.load %arg6[%c0_14, %c0_15] : memref<16x384xbf16, #tpu.memory_space<vmem>>, vector<16x384xbf16>
      tpu.vector_store %arg6[%c0_14, %c0_15], %16 {strides = array<i32>} : memref<16x384xbf16, #tpu.memory_space<vmem>>, vector<16x384xbf16>,
    } else {
    }
    return
  }
  func.func @transform_0(%arg0: i32, %arg1: i32, %arg2: i32) -> (i32, i32) {
    %c0_i32 = arith.constant 0 : i32
    return %arg0, %arg2 : i32, i32
  }
  func.func @transform_1(%arg0: i32, %arg1: i32, %arg2: i32) -> (i32, i32) {
    %c0_i32 = arith.constant 0 : i32
    return %arg2, %arg1 : i32, i32
  }
  func.func @transform_2(%arg0: i32, %arg1: i32, %arg2: i32) -> (i32, i32) {
    %c0_i32 = arith.constant 0 : i32
    %c0_i32_0 = arith.constant 0 : i32
    return %c0_i32, %arg1 : i32, i32
  }
  func.func @transform_3(%arg0: i32, %arg1: i32, %arg2: i32) -> (i32, i32) {
    %c0_i32 = arith.constant 0 : i32
    return %arg0, %arg1 : i32, i32
  }
}

module attributes {stable_mosaic.version = 11 : i64} {
  func.func @_linear_add_ln_kernel(%arg0: i32, %arg1: i32, %arg2: memref<16x128xbf16, #tpu.memory_space<vmem>>, %arg3: memref<128x128xbf16, #tpu.memory_space<vmem>>, %arg4: memref<1x128xf32, #tpu.memory_space<vmem>>, %arg5: memref<16x128xbf16, #tpu.memory_space<vmem>>, %arg6: memref<1x128xf32, #tpu.memory_space<vmem>>, %arg7: memref<1x128xf32, #tpu.memory_space<vmem>>, %arg8: memref<16x128xbf16, #tpu.memory_space<vmem>>, %arg9: memref<16x128xf32, #tpu.memory_space<vmem>>) attributes {dimension_semantics = [#tpu.dimension_semantics<parallel>, #tpu.dimension_semantics<arbitrary>], iteration_bounds = array<i64: 1, 1>, scalar_prefetch = 0 : i64, scratch_operands = 1 : i64, tpu.core_type = #tpu.core_type<tc>, window_params = [{transform_indices = @transform_0, window_bounds = array<i64: 16, 128>}, {transform_indices = @transform_1, window_bounds = array<i64: 128, 128>}, {pipeline_mode = #tpu.pipeline_mode<synchronous>, transform_indices = @transform_2, window_bounds = array<i64: 1, 128>}, {transform_indices = @transform_3, window_bounds = array<i64: 16, 128>}, {pipeline_mode = #tpu.pipeline_mode<synchronous>, transform_indices = @transform_4, window_bounds = array<i64: 1, 128>}, {pipeline_mode = #tpu.pipeline_mode<synchronous>, transform_indices = @transform_5, window_bounds = array<i64: 1, 128>}, {transform_indices = @transform_6, window_bounds = array<i64: 16, 128>}]} {
    %c0_i32 = arith.constant 0 : i32
    %0 = arith.cmpi eq, %arg1, %c0_i32 : i32
    %1 = arith.extui %0 : i1 to i32
    %c0_i32_0 = arith.constant 0 : i32
    %2 = arith.cmpi ne, %1, %c0_i32_0 : i32
    scf.if %2 {
      %cst_10 = arith.constant 0.000000e+00 : f32
      %12 = vector.broadcast %cst_10 : f32 to vector<16x128xf32>
      %c0_11 = arith.constant 0 : index
      %c0_12 = arith.constant 0 : index
      %13 = vector.load %arg9[%c0_11, %c0_12] : memref<16x128xf32, #tpu.memory_space<vmem>>, vector<16x128xf32>
      tpu.vector_store %arg9[%c0_11, %c0_12], %12 {strides = array<i32>} : memref<16x128xf32, #tpu.memory_space<vmem>>, vector<16x128xf32>,
    } else {
    }
    %c0 = arith.constant 0 : index
    %c0_1 = arith.constant 0 : index
    %3 = vector.load %arg9[%c0, %c0_1] : memref<16x128xf32, #tpu.memory_space<vmem>>, vector<16x128xf32>
    %c0_2 = arith.constant 0 : index
    %c0_3 = arith.constant 0 : index
    %4 = vector.load %arg2[%c0_2, %c0_3] : memref<16x128xbf16, #tpu.memory_space<vmem>>, vector<16x128xbf16>
    %c0_4 = arith.constant 0 : index
    %c0_5 = arith.constant 0 : index
    %5 = vector.load %arg3[%c0_4, %c0_5] : memref<128x128xbf16, #tpu.memory_space<vmem>>, vector<128x128xbf16>
    %cst = arith.constant dense<0.000000e+00> : vector<16x128xf32>
    %6 = tpu.matmul %4, %5, %cst {dimension_numbers = #tpu.dot_dimension_numbers<[1], [0], [0], [1], [0, 0, 1, 1], [], []>} : vector<16x128xbf16>, vector<128x128xbf16>, vector<16x128xf32> -> vector<16x128xf32>
    %7 = arith.addf %3, %6 : vector<16x128xf32>
    %c0_6 = arith.constant 0 : index
    %c0_7 = arith.constant 0 : index
    %8 = vector.load %arg9[%c0_6, %c0_7] : memref<16x128xf32, #tpu.memory_space<vmem>>, vector<16x128xf32>
    tpu.vector_store %arg9[%c0_6, %c0_7], %7 {strides = array<i32>} : memref<16x128xf32, #tpu.memory_space<vmem>>, vector<16x128xf32>,
    %c0_i32_8 = arith.constant 0 : i32
    %9 = arith.cmpi eq, %arg1, %c0_i32_8 : i32
    %10 = arith.extui %9 : i1 to i32
    %c0_i32_9 = arith.constant 0 : i32
    %11 = arith.cmpi ne, %10, %c0_i32_9 : i32
    scf.if %11 {
      %c0_10 = arith.constant 0 : index
      %c0_11 = arith.constant 0 : index
      %12 = vector.load %arg9[%c0_10, %c0_11] : memref<16x128xf32, #tpu.memory_space<vmem>>, vector<16x128xf32>
      %c0_12 = arith.constant 0 : index
      %c0_13 = arith.constant 0 : index
      %13 = vector.load %arg4[%c0_12, %c0_13] : memref<1x128xf32, #tpu.memory_space<vmem>>, vector<1x128xf32>
      %14 = vector.broadcast %13 : vector<1x128xf32> to vector<16x128xf32>
      %15 = arith.addf %12, %14 : vector<16x128xf32>
      %c0_14 = arith.constant 0 : index
      %c0_15 = arith.constant 0 : index
      %16 = vector.load %arg5[%c0_14, %c0_15] : memref<16x128xbf16, #tpu.memory_space<vmem>>, vector<16x128xbf16>
      %17 = arith.extf %16 : vector<16x128xbf16> to vector<16x128xf32>
      %18 = arith.addf %15, %17 : vector<16x128xf32>
      %cst_16 = arith.constant dense<0.000000e+00> : vector<16xf32>
      %19 = vector.multi_reduction <add>, %18, %cst_16 [1] : vector<16x128xf32> to vector<16xf32>
      %20 = vector.shape_cast %19 : vector<16xf32> to vector<16x1xf32>
      %cst_17 = arith.constant 1.280000e+02 : f32
      %21 = vector.broadcast %cst_17 : f32 to vector<16x1xf32>
      %22 = arith.divf %20, %21 : vector<16x1xf32>
      %23 = vector.broadcast %22 : vector<16x1xf32> to vector<16x128xf32>
      %24 = arith.subf %18, %23 : vector<16x128xf32>
      %25 = arith.mulf %24, %24 : vector<16x128xf32>
      %cst_18 = arith.constant dense<0.000000e+00> : vector<16xf32>
      %26 = vector.multi_reduction <add>, %25, %cst_18 [1] : vector<16x128xf32> to vector<16xf32>
      %27 = vector.shape_cast %26 : vector<16xf32> to vector<16x1xf32>
      %cst_19 = arith.constant 1.280000e+02 : f32
      %28 = vector.broadcast %cst_19 : f32 to vector<16x1xf32>
      %29 = arith.divf %27, %28 : vector<16x1xf32>
      %cst_20 = arith.constant 9.99999997E-7 : f32
      %30 = vector.broadcast %cst_20 : f32 to vector<16x1xf32>
      %31 = arith.addf %29, %30 : vector<16x1xf32>
      %32 = math.rsqrt %31 : vector<16x1xf32>
      %33 = vector.broadcast %32 : vector<16x1xf32> to vector<16x128xf32>
      %34 = arith.mulf %24, %33 : vector<16x128xf32>
      %c0_21 = arith.constant 0 : index
      %c0_22 = arith.constant 0 : index
      %35 = vector.load %arg6[%c0_21, %c0_22] : memref<1x128xf32, #tpu.memory_space<vmem>>, vector<1x128xf32>
      %36 = vector.broadcast %35 : vector<1x128xf32> to vector<16x128xf32>
      %37 = arith.mulf %34, %36 : vector<16x128xf32>
      %c0_23 = arith.constant 0 : index
      %c0_24 = arith.constant 0 : index
      %38 = vector.load %arg7[%c0_23, %c0_24] : memref<1x128xf32, #tpu.memory_space<vmem>>, vector<1x128xf32>
      %39 = vector.broadcast %38 : vector<1x128xf32> to vector<16x128xf32>
      %40 = arith.addf %37, %39 : vector<16x128xf32>
      %41 = arith.truncf %40 : vector<16x128xf32> to vector<16x128xbf16>
      %c0_25 = arith.constant 0 : index
      %c0_26 = arith.constant 0 : index
      %42 = vector.load %arg8[%c0_25, %c0_26] : memref<16x128xbf16, #tpu.memory_space<vmem>>, vector<16x128xbf16>
      tpu.vector_store %arg8[%c0_25, %c0_26], %41 {strides = array<i32>} : memref<16x128xbf16, #tpu.memory_space<vmem>>, vector<16x128xbf16>,
    } else {
    }
    return
  }
  func.func @transform_0(%arg0: i32, %arg1: i32) -> (i32, i32) {
    %c0_i32 = arith.constant 0 : i32
    return %arg0, %arg1 : i32, i32
  }
  func.func @transform_1(%arg0: i32, %arg1: i32) -> (i32, i32) {
    %c0_i32 = arith.constant 0 : i32
    %c0_i32_0 = arith.constant 0 : i32
    return %arg1, %c0_i32 : i32, i32
  }
  func.func @transform_2(%arg0: i32, %arg1: i32) -> (i32, i32) {
    %c0_i32 = arith.constant 0 : i32
    %c0_i32_0 = arith.constant 0 : i32
    %c0_i32_1 = arith.constant 0 : i32
    return %c0_i32, %c0_i32_0 : i32, i32
  }
  func.func @transform_3(%arg0: i32, %arg1: i32) -> (i32, i32) {
    %c0_i32 = arith.constant 0 : i32
    %c0_i32_0 = arith.constant 0 : i32
    return %arg0, %c0_i32 : i32, i32
  }
  func.func @transform_4(%arg0: i32, %arg1: i32) -> (i32, i32) {
    %c0_i32 = arith.constant 0 : i32
    %c0_i32_0 = arith.constant 0 : i32
    %c0_i32_1 = arith.constant 0 : i32
    return %c0_i32, %c0_i32_0 : i32, i32
  }
  func.func @transform_5(%arg0: i32, %arg1: i32) -> (i32, i32) {
    %c0_i32 = arith.constant 0 : i32
    %c0_i32_0 = arith.constant 0 : i32
    %c0_i32_1 = arith.constant 0 : i32
    return %c0_i32, %c0_i32_0 : i32, i32
  }
  func.func @transform_6(%arg0: i32, %arg1: i32) -> (i32, i32) {
    %c0_i32 = arith.constant 0 : i32
    %c0_i32_0 = arith.constant 0 : i32
    return %arg0, %c0_i32 : i32, i32
  }
}

module attributes {stable_mosaic.version = 11 : i64} {
  func.func @_attn_kernel(%arg0: i32, %arg1: i32, %arg2: memref<1x8x128xbf16, #tpu.memory_space<vmem>>, %arg3: memref<1x8x128xbf16, #tpu.memory_space<vmem>>, %arg4: memref<1x8x128xbf16, #tpu.memory_space<vmem>>, %arg5: memref<1x8x1xf32, #tpu.memory_space<vmem>>, %arg6: memref<1x1x8xf32, #tpu.memory_space<vmem>>, %arg7: memref<1x8x128xbf16, #tpu.memory_space<vmem>>) attributes {dimension_semantics = [#tpu.dimension_semantics<parallel>, #tpu.dimension_semantics<parallel>], iteration_bounds = array<i64: 2, 1>, scalar_prefetch = 0 : i64, scratch_operands = 0 : i64, tpu.core_type = #tpu.core_type<tc>, window_params = [{transform_indices = @transform_0, window_bounds = array<i64: 1, 8, 128>}, {transform_indices = @transform_1, window_bounds = array<i64: 1, 8, 128>}, {transform_indices = @transform_2, window_bounds = array<i64: 1, 8, 128>}, {transform_indices = @transform_3, window_bounds = array<i64: 1, 8, 1>}, {transform_indices = @transform_4, window_bounds = array<i64: 1, 1, 8>}, {transform_indices = @transform_5, window_bounds = array<i64: 1, 8, 128>}]} {
    %c0 = arith.constant 0 : index
    %c0_0 = arith.constant 0 : index
    %c0_1 = arith.constant 0 : index
    %0 = vector.load %arg6[%c0, %c0_0, %c0_1] : memref<1x1x8xf32, #tpu.memory_space<vmem>>, vector<1x1x8xf32>
    %1 = vector.shape_cast %0 : vector<1x1x8xf32> to vector<1x8xf32>
    %cst = arith.constant 5.000000e-01 : f32
    %2 = vector.broadcast %cst : f32 to vector<1x8xf32>
    %3 = arith.cmpf ogt, %1, %2 : vector<1x8xf32>
    %c0_2 = arith.constant 0 : index
    %c0_3 = arith.constant 0 : index
    %c0_4 = arith.constant 0 : index
    %4 = vector.load %arg5[%c0_2, %c0_3, %c0_4] : memref<1x8x1xf32, #tpu.memory_space<vmem>>, vector<1x8x1xf32>
    %5 = vector.shape_cast %4 : vector<1x8x1xf32> to vector<8x1xf32>
    %cst_5 = arith.constant 5.000000e-01 : f32
    %6 = vector.broadcast %cst_5 : f32 to vector<8x1xf32>
    %7 = arith.cmpf ogt, %5, %6 : vector<8x1xf32>
    %8 = vector.broadcast %3 : vector<1x8xi1> to vector<8x8xi1>
    %9 = vector.broadcast %7 : vector<8x1xi1> to vector<8x8xi1>
    %10 = arith.ori %8, %9 : vector<8x8xi1>
    %11 = tpu.iota {dimensions = array<i32: 0>} : vector<8x8xi32>
    %c8_i32 = arith.constant 8 : i32
    %12 = arith.muli %arg1, %c8_i32 : i32
    %13 = vector.broadcast %12 : i32 to vector<8x8xi32>
    %14 = arith.addi %11, %13 : vector<8x8xi32>
    %15 = tpu.iota {dimensions = array<i32: 1>} : vector<8x8xi32>
    %16 = arith.cmpi sgt, %15, %14 : vector<8x8xi32>
    %17 = arith.ori %10, %16 : vector<8x8xi1>
    %c0_6 = arith.constant 0 : index
    %c0_7 = arith.constant 0 : index
    %c0_8 = arith.constant 0 : index
    %18 = vector.load %arg2[%c0_6, %c0_7, %c0_8] : memref<1x8x128xbf16, #tpu.memory_space<vmem>>, vector<1x8x32xbf16>
    %19 = vector.shape_cast %18 : vector<1x8x32xbf16> to vector<8x32xbf16>
    %c0_9 = arith.constant 0 : index
    %c0_10 = arith.constant 0 : index
    %c0_11 = arith.constant 0 : index
    %20 = vector.load %arg3[%c0_9, %c0_10, %c0_11] : memref<1x8x128xbf16, #tpu.memory_space<vmem>>, vector<1x8x32xbf16>
    %21 = vector.shape_cast %20 : vector<1x8x32xbf16> to vector<8x32xbf16>
    %c0_12 = arith.constant 0 : index
    %c0_13 = arith.constant 0 : index
    %c0_14 = arith.constant 0 : index
    %22 = vector.load %arg4[%c0_12, %c0_13, %c0_14] : memref<1x8x128xbf16, #tpu.memory_space<vmem>>, vector<1x8x32xbf16>
    %23 = vector.shape_cast %22 : vector<1x8x32xbf16> to vector<8x32xbf16>
    %cst_15 = arith.constant dense<0.000000e+00> : vector<8x8xf32>
    %24 = tpu.matmul %19, %21, %cst_15 {dimension_numbers = #tpu.dot_dimension_numbers<[1], [1], [0], [0], [0, 0, 1, 0], [], []>} : vector<8x32xbf16>, vector<8x32xbf16>, vector<8x8xf32> -> vector<8x8xf32>
    %cst_16 = arith.constant 0.176776692 : f32
    %25 = vector.broadcast %cst_16 : f32 to vector<8x8xf32>
    %26 = arith.mulf %24, %25 : vector<8x8xf32>
    %cst_17 = arith.constant -1.000000e+09 : f32
    %27 = vector.broadcast %cst_17 : f32 to vector<8x8xf32>
    %28 = arith.select %17, %27, %26 : vector<8x8xi1>, vector<8x8xf32>
    %cst_18 = arith.constant dense<0xFF800000> : vector<8xf32>
    %29 = vector.multi_reduction <maximumf>, %28, %cst_18 [1] : vector<8x8xf32> to vector<8xf32>
    %30 = vector.shape_cast %29 : vector<8xf32> to vector<8x1xf32>
    %31 = vector.broadcast %30 : vector<8x1xf32> to vector<8x8xf32>
    %32 = arith.subf %28, %31 : vector<8x8xf32>
    %33 = math.exp %32 : vector<8x8xf32>
    %cst_19 = arith.constant dense<0.000000e+00> : vector<8xf32>
    %34 = vector.multi_reduction <add>, %33, %cst_19 [1] : vector<8x8xf32> to vector<8xf32>
    %35 = vector.shape_cast %34 : vector<8xf32> to vector<8x1xf32>
    %36 = tpu.reciprocal %35 {approx = true} : vector<8x1xf32> -> vector<8x1xf32>
    %37 = vector.broadcast %36 : vector<8x1xf32> to vector<8x8xf32>
    %38 = arith.mulf %33, %37 : vector<8x8xf32>
    %39 = arith.truncf %38 : vector<8x8xf32> to vector<8x8xbf16>
    %cst_20 = arith.constant dense<0.000000e+00> : vector<8x32xf32>
    %40 = tpu.matmul %39, %23, %cst_20 {dimension_numbers = #tpu.dot_dimension_numbers<[1], [0], [0], [1], [0, 0, 1, 1], [], []>} : vector<8x8xbf16>, vector<8x32xbf16>, vector<8x32xf32> -> vector<8x32xf32>
    %c0_21 = arith.constant 0 : index
    %c0_22 = arith.constant 0 : index
    %c32 = arith.constant 32 : index
    %41 = vector.load %arg2[%c0_21, %c0_22, %c32] : memref<1x8x128xbf16, #tpu.memory_space<vmem>>, vector<1x8x32xbf16>
    %42 = vector.shape_cast %41 : vector<1x8x32xbf16> to vector<8x32xbf16>
    %c0_23 = arith.constant 0 : index
    %c0_24 = arith.constant 0 : index
    %c32_25 = arith.constant 32 : index
    %43 = vector.load %arg3[%c0_23, %c0_24, %c32_25] : memref<1x8x128xbf16, #tpu.memory_space<vmem>>, vector<1x8x32xbf16>
    %44 = vector.shape_cast %43 : vector<1x8x32xbf16> to vector<8x32xbf16>
    %c0_26 = arith.constant 0 : index
    %c0_27 = arith.constant 0 : index
    %c32_28 = arith.constant 32 : index
    %45 = vector.load %arg4[%c0_26, %c0_27, %c32_28] : memref<1x8x128xbf16, #tpu.memory_space<vmem>>, vector<1x8x32xbf16>
    %46 = vector.shape_cast %45 : vector<1x8x32xbf16> to vector<8x32xbf16>
    %cst_29 = arith.constant dense<0.000000e+00> : vector<8x8xf32>
    %47 = tpu.matmul %42, %44, %cst_29 {dimension_numbers = #tpu.dot_dimension_numbers<[1], [1], [0], [0], [0, 0, 1, 0], [], []>} : vector<8x32xbf16>, vector<8x32xbf16>, vector<8x8xf32> -> vector<8x8xf32>
    %cst_30 = arith.constant 0.176776692 : f32
    %48 = vector.broadcast %cst_30 : f32 to vector<8x8xf32>
    %49 = arith.mulf %47, %48 : vector<8x8xf32>
    %cst_31 = arith.constant -1.000000e+09 : f32
    %50 = vector.broadcast %cst_31 : f32 to vector<8x8xf32>
    %51 = arith.select %17, %50, %49 : vector<8x8xi1>, vector<8x8xf32>
    %cst_32 = arith.constant dense<0xFF800000> : vector<8xf32>
    %52 = vector.multi_reduction <maximumf>, %51, %cst_32 [1] : vector<8x8xf32> to vector<8xf32>
    %53 = vector.shape_cast %52 : vector<8xf32> to vector<8x1xf32>
    %54 = vector.broadcast %53 : vector<8x1xf32> to vector<8x8xf32>
    %55 = arith.subf %51, %54 : vector<8x8xf32>
    %56 = math.exp %55 : vector<8x8xf32>
    %cst_33 = arith.constant dense<0.000000e+00> : vector<8xf32>
    %57 = vector.multi_reduction <add>, %56, %cst_33 [1] : vector<8x8xf32> to vector<8xf32>
    %58 = vector.shape_cast %57 : vector<8xf32> to vector<8x1xf32>
    %59 = tpu.reciprocal %58 {approx = true} : vector<8x1xf32> -> vector<8x1xf32>
    %60 = vector.broadcast %59 : vector<8x1xf32> to vector<8x8xf32>
    %61 = arith.mulf %56, %60 : vector<8x8xf32>
    %62 = arith.truncf %61 : vector<8x8xf32> to vector<8x8xbf16>
    %cst_34 = arith.constant dense<0.000000e+00> : vector<8x32xf32>
    %63 = tpu.matmul %62, %46, %cst_34 {dimension_numbers = #tpu.dot_dimension_numbers<[1], [0], [0], [1], [0, 0, 1, 1], [], []>} : vector<8x8xbf16>, vector<8x32xbf16>, vector<8x32xf32> -> vector<8x32xf32>
    %c0_35 = arith.constant 0 : index
    %c0_36 = arith.constant 0 : index
    %c64 = arith.constant 64 : index
    %64 = vector.load %arg2[%c0_35, %c0_36, %c64] : memref<1x8x128xbf16, #tpu.memory_space<vmem>>, vector<1x8x32xbf16>
    %65 = vector.shape_cast %64 : vector<1x8x32xbf16> to vector<8x32xbf16>
    %c0_37 = arith.constant 0 : index
    %c0_38 = arith.constant 0 : index
    %c64_39 = arith.constant 64 : index
    %66 = vector.load %arg3[%c0_37, %c0_38, %c64_39] : memref<1x8x128xbf16, #tpu.memory_space<vmem>>, vector<1x8x32xbf16>
    %67 = vector.shape_cast %66 : vector<1x8x32xbf16> to vector<8x32xbf16>
    %c0_40 = arith.constant 0 : index
    %c0_41 = arith.constant 0 : index
    %c64_42 = arith.constant 64 : index
    %68 = vector.load %arg4[%c0_40, %c0_41, %c64_42] : memref<1x8x128xbf16, #tpu.memory_space<vmem>>, vector<1x8x32xbf16>
    %69 = vector.shape_cast %68 : vector<1x8x32xbf16> to vector<8x32xbf16>
    %cst_43 = arith.constant dense<0.000000e+00> : vector<8x8xf32>
    %70 = tpu.matmul %65, %67, %cst_43 {dimension_numbers = #tpu.dot_dimension_numbers<[1], [1], [0], [0], [0, 0, 1, 0], [], []>} : vector<8x32xbf16>, vector<8x32xbf16>, vector<8x8xf32> -> vector<8x8xf32>
    %cst_44 = arith.constant 0.176776692 : f32
    %71 = vector.broadcast %cst_44 : f32 to vector<8x8xf32>
    %72 = arith.mulf %70, %71 : vector<8x8xf32>
    %cst_45 = arith.constant -1.000000e+09 : f32
    %73 = vector.broadcast %cst_45 : f32 to vector<8x8xf32>
    %74 = arith.select %17, %73, %72 : vector<8x8xi1>, vector<8x8xf32>
    %cst_46 = arith.constant dense<0xFF800000> : vector<8xf32>
    %75 = vector.multi_reduction <maximumf>, %74, %cst_46 [1] : vector<8x8xf32> to vector<8xf32>
    %76 = vector.shape_cast %75 : vector<8xf32> to vector<8x1xf32>
    %77 = vector.broadcast %76 : vector<8x1xf32> to vector<8x8xf32>
    %78 = arith.subf %74, %77 : vector<8x8xf32>
    %79 = math.exp %78 : vector<8x8xf32>
    %cst_47 = arith.constant dense<0.000000e+00> : vector<8xf32>
    %80 = vector.multi_reduction <add>, %79, %cst_47 [1] : vector<8x8xf32> to vector<8xf32>
    %81 = vector.shape_cast %80 : vector<8xf32> to vector<8x1xf32>
    %82 = tpu.reciprocal %81 {approx = true} : vector<8x1xf32> -> vector<8x1xf32>
    %83 = vector.broadcast %82 : vector<8x1xf32> to vector<8x8xf32>
    %84 = arith.mulf %79, %83 : vector<8x8xf32>
    %85 = arith.truncf %84 : vector<8x8xf32> to vector<8x8xbf16>
    %cst_48 = arith.constant dense<0.000000e+00> : vector<8x32xf32>
    %86 = tpu.matmul %85, %69, %cst_48 {dimension_numbers = #tpu.dot_dimension_numbers<[1], [0], [0], [1], [0, 0, 1, 1], [], []>} : vector<8x8xbf16>, vector<8x32xbf16>, vector<8x32xf32> -> vector<8x32xf32>
    %c0_49 = arith.constant 0 : index
    %c0_50 = arith.constant 0 : index
    %c96 = arith.constant 96 : index
    %87 = vector.load %arg2[%c0_49, %c0_50, %c96] : memref<1x8x128xbf16, #tpu.memory_space<vmem>>, vector<1x8x32xbf16>
    %88 = vector.shape_cast %87 : vector<1x8x32xbf16> to vector<8x32xbf16>
    %c0_51 = arith.constant 0 : index
    %c0_52 = arith.constant 0 : index
    %c96_53 = arith.constant 96 : index
    %89 = vector.load %arg3[%c0_51, %c0_52, %c96_53] : memref<1x8x128xbf16, #tpu.memory_space<vmem>>, vector<1x8x32xbf16>
    %90 = vector.shape_cast %89 : vector<1x8x32xbf16> to vector<8x32xbf16>
    %c0_54 = arith.constant 0 : index
    %c0_55 = arith.constant 0 : index
    %c96_56 = arith.constant 96 : index
    %91 = vector.load %arg4[%c0_54, %c0_55, %c96_56] : memref<1x8x128xbf16, #tpu.memory_space<vmem>>, vector<1x8x32xbf16>
    %92 = vector.shape_cast %91 : vector<1x8x32xbf16> to vector<8x32xbf16>
    %cst_57 = arith.constant dense<0.000000e+00> : vector<8x8xf32>
    %93 = tpu.matmul %88, %90, %cst_57 {dimension_numbers = #tpu.dot_dimension_numbers<[1], [1], [0], [0], [0, 0, 1, 0], [], []>} : vector<8x32xbf16>, vector<8x32xbf16>, vector<8x8xf32> -> vector<8x8xf32>
    %cst_58 = arith.constant 0.176776692 : f32
    %94 = vector.broadcast %cst_58 : f32 to vector<8x8xf32>
    %95 = arith.mulf %93, %94 : vector<8x8xf32>
    %cst_59 = arith.constant -1.000000e+09 : f32
    %96 = vector.broadcast %cst_59 : f32 to vector<8x8xf32>
    %97 = arith.select %17, %96, %95 : vector<8x8xi1>, vector<8x8xf32>
    %cst_60 = arith.constant dense<0xFF800000> : vector<8xf32>
    %98 = vector.multi_reduction <maximumf>, %97, %cst_60 [1] : vector<8x8xf32> to vector<8xf32>
    %99 = vector.shape_cast %98 : vector<8xf32> to vector<8x1xf32>
    %100 = vector.broadcast %99 : vector<8x1xf32> to vector<8x8xf32>
    %101 = arith.subf %97, %100 : vector<8x8xf32>
    %102 = math.exp %101 : vector<8x8xf32>
    %cst_61 = arith.constant dense<0.000000e+00> : vector<8xf32>
    %103 = vector.multi_reduction <add>, %102, %cst_61 [1] : vector<8x8xf32> to vector<8xf32>
    %104 = vector.shape_cast %103 : vector<8xf32> to vector<8x1xf32>
    %105 = tpu.reciprocal %104 {approx = true} : vector<8x1xf32> -> vector<8x1xf32>
    %106 = vector.broadcast %105 : vector<8x1xf32> to vector<8x8xf32>
    %107 = arith.mulf %102, %106 : vector<8x8xf32>
    %108 = arith.truncf %107 : vector<8x8xf32> to vector<8x8xbf16>
    %cst_62 = arith.constant dense<0.000000e+00> : vector<8x32xf32>
    %109 = tpu.matmul %108, %92, %cst_62 {dimension_numbers = #tpu.dot_dimension_numbers<[1], [0], [0], [1], [0, 0, 1, 1], [], []>} : vector<8x8xbf16>, vector<8x32xbf16>, vector<8x32xf32> -> vector<8x32xf32>
    %110 = tpu.concatenate %40, %63, %86, %109 in 1 : vector<8x32xf32>, vector<8x32xf32>, vector<8x32xf32>, vector<8x32xf32> -> vector<8x128xf32>
    %111 = arith.truncf %110 : vector<8x128xf32> to vector<8x128xbf16>
    %c0_63 = arith.constant 0 : index
    %c0_64 = arith.constant 0 : index
    %c0_65 = arith.constant 0 : index
    %112 = vector.load %arg7[%c0_63, %c0_64, %c0_65] : memref<1x8x128xbf16, #tpu.memory_space<vmem>>, vector<1x8x128xbf16>
    %113 = vector.shape_cast %112 : vector<1x8x128xbf16> to vector<8x128xbf16>
    %114 = vector.shape_cast %111 : vector<8x128xbf16> to vector<1x8x128xbf16>
    tpu.vector_store %arg7[%c0_63, %c0_64, %c0_65], %114 {strides = array<i32>} : memref<1x8x128xbf16, #tpu.memory_space<vmem>>, vector<1x8x128xbf16>,
    return
  }
  func.func @transform_0(%arg0: i32, %arg1: i32) -> (i32, i32, i32) {
    %c0_i32 = arith.constant 0 : i32
    %c0_i32_0 = arith.constant 0 : i32
    return %arg0, %arg1, %c0_i32 : i32, i32, i32
  }
  func.func @transform_1(%arg0: i32, %arg1: i32) -> (i32, i32, i32) {
    %c0_i32 = arith.constant 0 : i32
    %c0_i32_0 = arith.constant 0 : i32
    %c0_i32_1 = arith.constant 0 : i32
    return %arg0, %c0_i32, %c0_i32_0 : i32, i32, i32
  }
  func.func @transform_2(%arg0: i32, %arg1: i32) -> (i32, i32, i32) {
    %c0_i32 = arith.constant 0 : i32
    %c0_i32_0 = arith.constant 0 : i32
    %c0_i32_1 = arith.constant 0 : i32
    return %arg0, %c0_i32, %c0_i32_0 : i32, i32, i32
  }
  func.func @transform_3(%arg0: i32, %arg1: i32) -> (i32, i32, i32) {
    %c0_i32 = arith.constant 0 : i32
    %c0_i32_0 = arith.constant 0 : i32
    return %arg0, %arg1, %c0_i32 : i32, i32, i32
  }
  func.func @transform_4(%arg0: i32, %arg1: i32) -> (i32, i32, i32) {
    %c0_i32 = arith.constant 0 : i32
    %c0_i32_0 = arith.constant 0 : i32
    %c0_i32_1 = arith.constant 0 : i32
    return %arg0, %c0_i32, %c0_i32_0 : i32, i32, i32
  }
  func.func @transform_5(%arg0: i32, %arg1: i32) -> (i32, i32, i32) {
    %c0_i32 = arith.constant 0 : i32
    %c0_i32_0 = arith.constant 0 : i32
    return %arg0, %arg1, %c0_i32 : i32, i32, i32
  }
}

module attributes {stable_mosaic.version = 11 : i64} {
  func.func @_linear_kernel(%arg0: i32, %arg1: i32, %arg2: i32, %arg3: memref<16x128xbf16, #tpu.memory_space<vmem>>, %arg4: memref<128x128xbf16, #tpu.memory_space<vmem>>, %arg5: memref<1x128xf32, #tpu.memory_space<vmem>>, %arg6: memref<16x128xbf16, #tpu.memory_space<vmem>>, %arg7: memref<16x128xf32, #tpu.memory_space<vmem>>) attributes {dimension_semantics = [#tpu.dimension_semantics<parallel>, #tpu.dimension_semantics<parallel>, #tpu.dimension_semantics<arbitrary>], iteration_bounds = array<i64: 1, 1, 1>, scalar_prefetch = 0 : i64, scratch_operands = 1 : i64, tpu.core_type = #tpu.core_type<tc>, window_params = [{transform_indices = @transform_0, window_bounds = array<i64: 16, 128>}, {transform_indices = @transform_1, window_bounds = array<i64: 128, 128>}, {transform_indices = @transform_2, window_bounds = array<i64: 1, 128>}, {transform_indices = @transform_3, window_bounds = array<i64: 16, 128>}]} {
    %c0_i32 = arith.constant 0 : i32
    %0 = arith.cmpi eq, %arg2, %c0_i32 : i32
    %1 = arith.extui %0 : i1 to i32
    %c0_i32_0 = arith.constant 0 : i32
    %2 = arith.cmpi ne, %1, %c0_i32_0 : i32
    scf.if %2 {
      %cst_10 = arith.constant 0.000000e+00 : f32
      %12 = vector.broadcast %cst_10 : f32 to vector<16x128xf32>
      %c0_11 = arith.constant 0 : index
      %c0_12 = arith.constant 0 : index
      %13 = vector.load %arg7[%c0_11, %c0_12] : memref<16x128xf32, #tpu.memory_space<vmem>>, vector<16x128xf32>
      tpu.vector_store %arg7[%c0_11, %c0_12], %12 {strides = array<i32>} : memref<16x128xf32, #tpu.memory_space<vmem>>, vector<16x128xf32>,
    } else {
    }
    %c0 = arith.constant 0 : index
    %c0_1 = arith.constant 0 : index
    %3 = vector.load %arg7[%c0, %c0_1] : memref<16x128xf32, #tpu.memory_space<vmem>>, vector<16x128xf32>
    %c0_2 = arith.constant 0 : index
    %c0_3 = arith.constant 0 : index
    %4 = vector.load %arg3[%c0_2, %c0_3] : memref<16x128xbf16, #tpu.memory_space<vmem>>, vector<16x128xbf16>
    %c0_4 = arith.constant 0 : index
    %c0_5 = arith.constant 0 : index
    %5 = vector.load %arg4[%c0_4, %c0_5] : memref<128x128xbf16, #tpu.memory_space<vmem>>, vector<128x128xbf16>
    %cst = arith.constant dense<0.000000e+00> : vector<16x128xf32>
    %6 = tpu.matmul %4, %5, %cst {dimension_numbers = #tpu.dot_dimension_numbers<[1], [0], [0], [1], [0, 0, 1, 1], [], []>} : vector<16x128xbf16>, vector<128x128xbf16>, vector<16x128xf32> -> vector<16x128xf32>
    %7 = arith.addf %3, %6 : vector<16x128xf32>
    %c0_6 = arith.constant 0 : index
    %c0_7 = arith.constant 0 : index
    %8 = vector.load %arg7[%c0_6, %c0_7] : memref<16x128xf32, #tpu.memory_space<vmem>>, vector<16x128xf32>
    tpu.vector_store %arg7[%c0_6, %c0_7], %7 {strides = array<i32>} : memref<16x128xf32, #tpu.memory_space<vmem>>, vector<16x128xf32>,
    %c0_i32_8 = arith.constant 0 : i32
    %9 = arith.cmpi eq, %arg2, %c0_i32_8 : i32
    %10 = arith.extui %9 : i1 to i32
    %c0_i32_9 = arith.constant 0 : i32
    %11 = arith.cmpi ne, %10, %c0_i32_9 : i32
    scf.if %11 {
      %c0_10 = arith.constant 0 : index
      %c0_11 = arith.constant 0 : index
      %12 = vector.load %arg7[%c0_10, %c0_11] : memref<16x128xf32, #tpu.memory_space<vmem>>, vector<16x128xf32>
      %c0_12 = arith.constant 0 : index
      %c0_13 = arith.constant 0 : index
      %13 = vector.load %arg5[%c0_12, %c0_13] : memref<1x128xf32, #tpu.memory_space<vmem>>, vector<1x128xf32>
      %14 = vector.broadcast %13 : vector<1x128xf32> to vector<16x128xf32>
      %15 = arith.addf %12, %14 : vector<16x128xf32>
      %16 = arith.truncf %15 : vector<16x128xf32> to vector<16x128xbf16>
      %c0_14 = arith.constant 0 : index
      %c0_15 = arith.constant 0 : index
      %17 = vector.load %arg6[%c0_14, %c0_15] : memref<16x128xbf16, #tpu.memory_space<vmem>>, vector<16x128xbf16>
      tpu.vector_store %arg6[%c0_14, %c0_15], %16 {strides = array<i32>} : memref<16x128xbf16, #tpu.memory_space<vmem>>, vector<16x128xbf16>,
    } else {
    }
    return
  }
  func.func @transform_0(%arg0: i32, %arg1: i32, %arg2: i32) -> (i32, i32) {
    %c0_i32 = arith.constant 0 : i32
    return %arg0, %arg2 : i32, i32
  }
  func.func @transform_1(%arg0: i32, %arg1: i32, %arg2: i32) -> (i32, i32) {
    %c0_i32 = arith.constant 0 : i32
    return %arg2, %arg1 : i32, i32
  }
  func.func @transform_2(%arg0: i32, %arg1: i32, %arg2: i32) -> (i32, i32) {
    %c0_i32 = arith.constant 0 : i32
    %c0_i32_0 = arith.constant 0 : i32
    return %c0_i32, %arg1 : i32, i32
  }
  func.func @transform_3(%arg0: i32, %arg1: i32, %arg2: i32) -> (i32, i32) {
    %c0_i32 = arith.constant 0 : i32
    return %arg0, %arg1 : i32, i32
  }
}

module attributes {stable_mosaic.version = 11 : i64} {
  func.func @_linear_kernel(%arg0: i32, %arg1: i32, %arg2: i32, %arg3: memref<16x128xbf16, #tpu.memory_space<vmem>>, %arg4: memref<128x256xbf16, #tpu.memory_space<vmem>>, %arg5: memref<1x256xf32, #tpu.memory_space<vmem>>, %arg6: memref<16x256xbf16, #tpu.memory_space<vmem>>, %arg7: memref<16x256xf32, #tpu.memory_space<vmem>>) attributes {dimension_semantics = [#tpu.dimension_semantics<parallel>, #tpu.dimension_semantics<parallel>, #tpu.dimension_semantics<arbitrary>], iteration_bounds = array<i64: 1, 1, 1>, scalar_prefetch = 0 : i64, scratch_operands = 1 : i64, tpu.core_type = #tpu.core_type<tc>, window_params = [{transform_indices = @transform_0, window_bounds = array<i64: 16, 128>}, {transform_indices = @transform_1, window_bounds = array<i64: 128, 256>}, {transform_indices = @transform_2, window_bounds = array<i64: 1, 256>}, {transform_indices = @transform_3, window_bounds = array<i64: 16, 256>}]} {
    %c0_i32 = arith.constant 0 : i32
    %0 = arith.cmpi eq, %arg2, %c0_i32 : i32
    %1 = arith.extui %0 : i1 to i32
    %c0_i32_0 = arith.constant 0 : i32
    %2 = arith.cmpi ne, %1, %c0_i32_0 : i32
    scf.if %2 {
      %cst_10 = arith.constant 0.000000e+00 : f32
      %12 = vector.broadcast %cst_10 : f32 to vector<16x256xf32>
      %c0_11 = arith.constant 0 : index
      %c0_12 = arith.constant 0 : index
      %13 = vector.load %arg7[%c0_11, %c0_12] : memref<16x256xf32, #tpu.memory_space<vmem>>, vector<16x256xf32>
      tpu.vector_store %arg7[%c0_11, %c0_12], %12 {strides = array<i32>} : memref<16x256xf32, #tpu.memory_space<vmem>>, vector<16x256xf32>,
    } else {
    }
    %c0 = arith.constant 0 : index
    %c0_1 = arith.constant 0 : index
    %3 = vector.load %arg7[%c0, %c0_1] : memref<16x256xf32, #tpu.memory_space<vmem>>, vector<16x256xf32>
    %c0_2 = arith.constant 0 : index
    %c0_3 = arith.constant 0 : index
    %4 = vector.load %arg3[%c0_2, %c0_3] : memref<16x128xbf16, #tpu.memory_space<vmem>>, vector<16x128xbf16>
    %c0_4 = arith.constant 0 : index
    %c0_5 = arith.constant 0 : index
    %5 = vector.load %arg4[%c0_4, %c0_5] : memref<128x256xbf16, #tpu.memory_space<vmem>>, vector<128x256xbf16>
    %cst = arith.constant dense<0.000000e+00> : vector<16x256xf32>
    %6 = tpu.matmul %4, %5, %cst {dimension_numbers = #tpu.dot_dimension_numbers<[1], [0], [0], [1], [0, 0, 1, 1], [], []>} : vector<16x128xbf16>, vector<128x256xbf16>, vector<16x256xf32> -> vector<16x256xf32>
    %7 = arith.addf %3, %6 : vector<16x256xf32>
    %c0_6 = arith.constant 0 : index
    %c0_7 = arith.constant 0 : index
    %8 = vector.load %arg7[%c0_6, %c0_7] : memref<16x256xf32, #tpu.memory_space<vmem>>, vector<16x256xf32>
    tpu.vector_store %arg7[%c0_6, %c0_7], %7 {strides = array<i32>} : memref<16x256xf32, #tpu.memory_space<vmem>>, vector<16x256xf32>,
    %c0_i32_8 = arith.constant 0 : i32
    %9 = arith.cmpi eq, %arg2, %c0_i32_8 : i32
    %10 = arith.extui %9 : i1 to i32
    %c0_i32_9 = arith.constant 0 : i32
    %11 = arith.cmpi ne, %10, %c0_i32_9 : i32
    scf.if %11 {
      %c0_10 = arith.constant 0 : index
      %c0_11 = arith.constant 0 : index
      %12 = vector.load %arg7[%c0_10, %c0_11] : memref<16x256xf32, #tpu.memory_space<vmem>>, vector<16x256xf32>
      %c0_12 = arith.constant 0 : index
      %c0_13 = arith.constant 0 : index
      %13 = vector.load %arg5[%c0_12, %c0_13] : memref<1x256xf32, #tpu.memory_space<vmem>>, vector<1x256xf32>
      %14 = vector.broadcast %13 : vector<1x256xf32> to vector<16x256xf32>
      %15 = arith.addf %12, %14 : vector<16x256xf32>
      %16 = arith.truncf %15 : vector<16x256xf32> to vector<16x256xbf16>
      %c0_14 = arith.constant 0 : index
      %c0_15 = arith.constant 0 : index
      %17 = vector.load %arg6[%c0_14, %c0_15] : memref<16x256xbf16, #tpu.memory_space<vmem>>, vector<16x256xbf16>
      tpu.vector_store %arg6[%c0_14, %c0_15], %16 {strides = array<i32>} : memref<16x256xbf16, #tpu.memory_space<vmem>>, vector<16x256xbf16>,
    } else {
    }
    return
  }
  func.func @transform_0(%arg0: i32, %arg1: i32, %arg2: i32) -> (i32, i32) {
    %c0_i32 = arith.constant 0 : i32
    return %arg0, %arg2 : i32, i32
  }
  func.func @transform_1(%arg0: i32, %arg1: i32, %arg2: i32) -> (i32, i32) {
    %c0_i32 = arith.constant 0 : i32
    return %arg2, %arg1 : i32, i32
  }
  func.func @transform_2(%arg0: i32, %arg1: i32, %arg2: i32) -> (i32, i32) {
    %c0_i32 = arith.constant 0 : i32
    %c0_i32_0 = arith.constant 0 : i32
    return %c0_i32, %arg1 : i32, i32
  }
  func.func @transform_3(%arg0: i32, %arg1: i32, %arg2: i32) -> (i32, i32) {
    %c0_i32 = arith.constant 0 : i32
    return %arg0, %arg1 : i32, i32
  }
}

module attributes {stable_mosaic.version = 11 : i64} {
  func.func @_linear_add_ln_kernel(%arg0: i32, %arg1: i32, %arg2: memref<16x256xbf16, #tpu.memory_space<vmem>>, %arg3: memref<256x128xbf16, #tpu.memory_space<vmem>>, %arg4: memref<1x128xf32, #tpu.memory_space<vmem>>, %arg5: memref<16x128xbf16, #tpu.memory_space<vmem>>, %arg6: memref<1x128xf32, #tpu.memory_space<vmem>>, %arg7: memref<1x128xf32, #tpu.memory_space<vmem>>, %arg8: memref<16x128xbf16, #tpu.memory_space<vmem>>, %arg9: memref<16x128xf32, #tpu.memory_space<vmem>>) attributes {dimension_semantics = [#tpu.dimension_semantics<parallel>, #tpu.dimension_semantics<arbitrary>], iteration_bounds = array<i64: 1, 1>, scalar_prefetch = 0 : i64, scratch_operands = 1 : i64, tpu.core_type = #tpu.core_type<tc>, window_params = [{transform_indices = @transform_0, window_bounds = array<i64: 16, 256>}, {transform_indices = @transform_1, window_bounds = array<i64: 256, 128>}, {pipeline_mode = #tpu.pipeline_mode<synchronous>, transform_indices = @transform_2, window_bounds = array<i64: 1, 128>}, {transform_indices = @transform_3, window_bounds = array<i64: 16, 128>}, {pipeline_mode = #tpu.pipeline_mode<synchronous>, transform_indices = @transform_4, window_bounds = array<i64: 1, 128>}, {pipeline_mode = #tpu.pipeline_mode<synchronous>, transform_indices = @transform_5, window_bounds = array<i64: 1, 128>}, {transform_indices = @transform_6, window_bounds = array<i64: 16, 128>}]} {
    %c0_i32 = arith.constant 0 : i32
    %0 = arith.cmpi eq, %arg1, %c0_i32 : i32
    %1 = arith.extui %0 : i1 to i32
    %c0_i32_0 = arith.constant 0 : i32
    %2 = arith.cmpi ne, %1, %c0_i32_0 : i32
    scf.if %2 {
      %cst_10 = arith.constant 0.000000e+00 : f32
      %12 = vector.broadcast %cst_10 : f32 to vector<16x128xf32>
      %c0_11 = arith.constant 0 : index
      %c0_12 = arith.constant 0 : index
      %13 = vector.load %arg9[%c0_11, %c0_12] : memref<16x128xf32, #tpu.memory_space<vmem>>, vector<16x128xf32>
      tpu.vector_store %arg9[%c0_11, %c0_12], %12 {strides = array<i32>} : memref<16x128xf32, #tpu.memory_space<vmem>>, vector<16x128xf32>,
    } else {
    }
    %c0 = arith.constant 0 : index
    %c0_1 = arith.constant 0 : index
    %3 = vector.load %arg9[%c0, %c0_1] : memref<16x128xf32, #tpu.memory_space<vmem>>, vector<16x128xf32>
    %c0_2 = arith.constant 0 : index
    %c0_3 = arith.constant 0 : index
    %4 = vector.load %arg2[%c0_2, %c0_3] : memref<16x256xbf16, #tpu.memory_space<vmem>>, vector<16x256xbf16>
    %c0_4 = arith.constant 0 : index
    %c0_5 = arith.constant 0 : index
    %5 = vector.load %arg3[%c0_4, %c0_5] : memref<256x128xbf16, #tpu.memory_space<vmem>>, vector<256x128xbf16>
    %cst = arith.constant dense<0.000000e+00> : vector<16x128xf32>
    %6 = tpu.matmul %4, %5, %cst {dimension_numbers = #tpu.dot_dimension_numbers<[1], [0], [0], [1], [0, 0, 1, 1], [], []>} : vector<16x256xbf16>, vector<256x128xbf16>, vector<16x128xf32> -> vector<16x128xf32>
    %7 = arith.addf %3, %6 : vector<16x128xf32>
    %c0_6 = arith.constant 0 : index
    %c0_7 = arith.constant 0 : index
    %8 = vector.load %arg9[%c0_6, %c0_7] : memref<16x128xf32, #tpu.memory_space<vmem>>, vector<16x128xf32>
    tpu.vector_store %arg9[%c0_6, %c0_7], %7 {strides = array<i32>} : memref<16x128xf32, #tpu.memory_space<vmem>>, vector<16x128xf32>,
    %c0_i32_8 = arith.constant 0 : i32
    %9 = arith.cmpi eq, %arg1, %c0_i32_8 : i32
    %10 = arith.extui %9 : i1 to i32
    %c0_i32_9 = arith.constant 0 : i32
    %11 = arith.cmpi ne, %10, %c0_i32_9 : i32
    scf.if %11 {
      %c0_10 = arith.constant 0 : index
      %c0_11 = arith.constant 0 : index
      %12 = vector.load %arg9[%c0_10, %c0_11] : memref<16x128xf32, #tpu.memory_space<vmem>>, vector<16x128xf32>
      %c0_12 = arith.constant 0 : index
      %c0_13 = arith.constant 0 : index
      %13 = vector.load %arg4[%c0_12, %c0_13] : memref<1x128xf32, #tpu.memory_space<vmem>>, vector<1x128xf32>
      %14 = vector.broadcast %13 : vector<1x128xf32> to vector<16x128xf32>
      %15 = arith.addf %12, %14 : vector<16x128xf32>
      %c0_14 = arith.constant 0 : index
      %c0_15 = arith.constant 0 : index
      %16 = vector.load %arg5[%c0_14, %c0_15] : memref<16x128xbf16, #tpu.memory_space<vmem>>, vector<16x128xbf16>
      %17 = arith.extf %16 : vector<16x128xbf16> to vector<16x128xf32>
      %18 = arith.addf %15, %17 : vector<16x128xf32>
      %cst_16 = arith.constant dense<0.000000e+00> : vector<16xf32>
      %19 = vector.multi_reduction <add>, %18, %cst_16 [1] : vector<16x128xf32> to vector<16xf32>
      %20 = vector.shape_cast %19 : vector<16xf32> to vector<16x1xf32>
      %cst_17 = arith.constant 1.280000e+02 : f32
      %21 = vector.broadcast %cst_17 : f32 to vector<16x1xf32>
      %22 = arith.divf %20, %21 : vector<16x1xf32>
      %23 = vector.broadcast %22 : vector<16x1xf32> to vector<16x128xf32>
      %24 = arith.subf %18, %23 : vector<16x128xf32>
      %25 = arith.mulf %24, %24 : vector<16x128xf32>
      %cst_18 = arith.constant dense<0.000000e+00> : vector<16xf32>
      %26 = vector.multi_reduction <add>, %25, %cst_18 [1] : vector<16x128xf32> to vector<16xf32>
      %27 = vector.shape_cast %26 : vector<16xf32> to vector<16x1xf32>
      %cst_19 = arith.constant 1.280000e+02 : f32
      %28 = vector.broadcast %cst_19 : f32 to vector<16x1xf32>
      %29 = arith.divf %27, %28 : vector<16x1xf32>
      %cst_20 = arith.constant 9.99999997E-7 : f32
      %30 = vector.broadcast %cst_20 : f32 to vector<16x1xf32>
      %31 = arith.addf %29, %30 : vector<16x1xf32>
      %32 = math.rsqrt %31 : vector<16x1xf32>
      %33 = vector.broadcast %32 : vector<16x1xf32> to vector<16x128xf32>
      %34 = arith.mulf %24, %33 : vector<16x128xf32>
      %c0_21 = arith.constant 0 : index
      %c0_22 = arith.constant 0 : index
      %35 = vector.load %arg6[%c0_21, %c0_22] : memref<1x128xf32, #tpu.memory_space<vmem>>, vector<1x128xf32>
      %36 = vector.broadcast %35 : vector<1x128xf32> to vector<16x128xf32>
      %37 = arith.mulf %34, %36 : vector<16x128xf32>
      %c0_23 = arith.constant 0 : index
      %c0_24 = arith.constant 0 : index
      %38 = vector.load %arg7[%c0_23, %c0_24] : memref<1x128xf32, #tpu.memory_space<vmem>>, vector<1x128xf32>
      %39 = vector.broadcast %38 : vector<1x128xf32> to vector<16x128xf32>
      %40 = arith.addf %37, %39 : vector<16x128xf32>
      %41 = arith.truncf %40 : vector<16x128xf32> to vector<16x128xbf16>
      %c0_25 = arith.constant 0 : index
      %c0_26 = arith.constant 0 : index
      %42 = vector.load %arg8[%c0_25, %c0_26] : memref<16x128xbf16, #tpu.memory_space<vmem>>, vector<16x128xbf16>
      tpu.vector_store %arg8[%c0_25, %c0_26], %41 {strides = array<i32>} : memref<16x128xbf16, #tpu.memory_space<vmem>>, vector<16x128xbf16>,
    } else {
    }
    return
  }
  func.func @transform_0(%arg0: i32, %arg1: i32) -> (i32, i32) {
    %c0_i32 = arith.constant 0 : i32
    return %arg0, %arg1 : i32, i32
  }
  func.func @transform_1(%arg0: i32, %arg1: i32) -> (i32, i32) {
    %c0_i32 = arith.constant 0 : i32
    %c0_i32_0 = arith.constant 0 : i32
    return %arg1, %c0_i32 : i32, i32
  }
  func.func @transform_2(%arg0: i32, %arg1: i32) -> (i32, i32) {
    %c0_i32 = arith.constant 0 : i32
    %c0_i32_0 = arith.constant 0 : i32
    %c0_i32_1 = arith.constant 0 : i32
    return %c0_i32, %c0_i32_0 : i32, i32
  }
  func.func @transform_3(%arg0: i32, %arg1: i32) -> (i32, i32) {
    %c0_i32 = arith.constant 0 : i32
    %c0_i32_0 = arith.constant 0 : i32
    return %arg0, %c0_i32 : i32, i32
  }
  func.func @transform_4(%arg0: i32, %arg1: i32) -> (i32, i32) {
    %c0_i32 = arith.constant 0 : i32
    %c0_i32_0 = arith.constant 0 : i32
    %c0_i32_1 = arith.constant 0 : i32
    return %c0_i32, %c0_i32_0 : i32, i32
  }
  func.func @transform_5(%arg0: i32, %arg1: i32) -> (i32, i32) {
    %c0_i32 = arith.constant 0 : i32
    %c0_i32_0 = arith.constant 0 : i32
    %c0_i32_1 = arith.constant 0 : i32
    return %c0_i32, %c0_i32_0 : i32, i32
  }
  func.func @transform_6(%arg0: i32, %arg1: i32) -> (i32, i32) {
    %c0_i32 = arith.constant 0 : i32
    %c0_i32_0 = arith.constant 0 : i32
    return %arg0, %c0_i32 : i32, i32
  }
}

module attributes {stable_mosaic.version = 11 : i64} {
  func.func @_attn_kernel(%arg0: i32, %arg1: i32, %arg2: memref<1x8x128xbf16, #tpu.memory_space<vmem>>, %arg3: memref<1x8x128xbf16, #tpu.memory_space<vmem>>, %arg4: memref<1x8x128xbf16, #tpu.memory_space<vmem>>, %arg5: memref<1x8x1xf32, #tpu.memory_space<vmem>>, %arg6: memref<1x1x8xf32, #tpu.memory_space<vmem>>, %arg7: memref<1x8x128xbf16, #tpu.memory_space<vmem>>) attributes {dimension_semantics = [#tpu.dimension_semantics<parallel>, #tpu.dimension_semantics<parallel>], iteration_bounds = array<i64: 2, 1>, scalar_prefetch = 0 : i64, scratch_operands = 0 : i64, tpu.core_type = #tpu.core_type<tc>, window_params = [{transform_indices = @transform_0, window_bounds = array<i64: 1, 8, 128>}, {transform_indices = @transform_1, window_bounds = array<i64: 1, 8, 128>}, {transform_indices = @transform_2, window_bounds = array<i64: 1, 8, 128>}, {transform_indices = @transform_3, window_bounds = array<i64: 1, 8, 1>}, {transform_indices = @transform_4, window_bounds = array<i64: 1, 1, 8>}, {transform_indices = @transform_5, window_bounds = array<i64: 1, 8, 128>}]} {
    %c0 = arith.constant 0 : index
    %c0_0 = arith.constant 0 : index
    %c0_1 = arith.constant 0 : index
    %0 = vector.load %arg6[%c0, %c0_0, %c0_1] : memref<1x1x8xf32, #tpu.memory_space<vmem>>, vector<1x1x8xf32>
    %1 = vector.shape_cast %0 : vector<1x1x8xf32> to vector<1x8xf32>
    %cst = arith.constant 5.000000e-01 : f32
    %2 = vector.broadcast %cst : f32 to vector<1x8xf32>
    %3 = arith.cmpf ogt, %1, %2 : vector<1x8xf32>
    %c0_2 = arith.constant 0 : index
    %c0_3 = arith.constant 0 : index
    %c0_4 = arith.constant 0 : index
    %4 = vector.load %arg5[%c0_2, %c0_3, %c0_4] : memref<1x8x1xf32, #tpu.memory_space<vmem>>, vector<1x8x1xf32>
    %5 = vector.shape_cast %4 : vector<1x8x1xf32> to vector<8x1xf32>
    %cst_5 = arith.constant 5.000000e-01 : f32
    %6 = vector.broadcast %cst_5 : f32 to vector<8x1xf32>
    %7 = arith.cmpf ogt, %5, %6 : vector<8x1xf32>
    %8 = vector.broadcast %3 : vector<1x8xi1> to vector<8x8xi1>
    %9 = vector.broadcast %7 : vector<8x1xi1> to vector<8x8xi1>
    %10 = arith.ori %8, %9 : vector<8x8xi1>
    %c0_6 = arith.constant 0 : index
    %c0_7 = arith.constant 0 : index
    %c0_8 = arith.constant 0 : index
    %11 = vector.load %arg2[%c0_6, %c0_7, %c0_8] : memref<1x8x128xbf16, #tpu.memory_space<vmem>>, vector<1x8x32xbf16>
    %12 = vector.shape_cast %11 : vector<1x8x32xbf16> to vector<8x32xbf16>
    %c0_9 = arith.constant 0 : index
    %c0_10 = arith.constant 0 : index
    %c0_11 = arith.constant 0 : index
    %13 = vector.load %arg3[%c0_9, %c0_10, %c0_11] : memref<1x8x128xbf16, #tpu.memory_space<vmem>>, vector<1x8x32xbf16>
    %14 = vector.shape_cast %13 : vector<1x8x32xbf16> to vector<8x32xbf16>
    %c0_12 = arith.constant 0 : index
    %c0_13 = arith.constant 0 : index
    %c0_14 = arith.constant 0 : index
    %15 = vector.load %arg4[%c0_12, %c0_13, %c0_14] : memref<1x8x128xbf16, #tpu.memory_space<vmem>>, vector<1x8x32xbf16>
    %16 = vector.shape_cast %15 : vector<1x8x32xbf16> to vector<8x32xbf16>
    %cst_15 = arith.constant dense<0.000000e+00> : vector<8x8xf32>
    %17 = tpu.matmul %12, %14, %cst_15 {dimension_numbers = #tpu.dot_dimension_numbers<[1], [1], [0], [0], [0, 0, 1, 0], [], []>} : vector<8x32xbf16>, vector<8x32xbf16>, vector<8x8xf32> -> vector<8x8xf32>
    %cst_16 = arith.constant 0.176776692 : f32
    %18 = vector.broadcast %cst_16 : f32 to vector<8x8xf32>
    %19 = arith.mulf %17, %18 : vector<8x8xf32>
    %cst_17 = arith.constant -1.000000e+09 : f32
    %20 = vector.broadcast %cst_17 : f32 to vector<8x8xf32>
    %21 = arith.select %10, %20, %19 : vector<8x8xi1>, vector<8x8xf32>
    %cst_18 = arith.constant dense<0xFF800000> : vector<8xf32>
    %22 = vector.multi_reduction <maximumf>, %21, %cst_18 [1] : vector<8x8xf32> to vector<8xf32>
    %23 = vector.shape_cast %22 : vector<8xf32> to vector<8x1xf32>
    %24 = vector.broadcast %23 : vector<8x1xf32> to vector<8x8xf32>
    %25 = arith.subf %21, %24 : vector<8x8xf32>
    %26 = math.exp %25 : vector<8x8xf32>
    %cst_19 = arith.constant dense<0.000000e+00> : vector<8xf32>
    %27 = vector.multi_reduction <add>, %26, %cst_19 [1] : vector<8x8xf32> to vector<8xf32>
    %28 = vector.shape_cast %27 : vector<8xf32> to vector<8x1xf32>
    %29 = tpu.reciprocal %28 {approx = true} : vector<8x1xf32> -> vector<8x1xf32>
    %30 = vector.broadcast %29 : vector<8x1xf32> to vector<8x8xf32>
    %31 = arith.mulf %26, %30 : vector<8x8xf32>
    %32 = arith.truncf %31 : vector<8x8xf32> to vector<8x8xbf16>
    %cst_20 = arith.constant dense<0.000000e+00> : vector<8x32xf32>
    %33 = tpu.matmul %32, %16, %cst_20 {dimension_numbers = #tpu.dot_dimension_numbers<[1], [0], [0], [1], [0, 0, 1, 1], [], []>} : vector<8x8xbf16>, vector<8x32xbf16>, vector<8x32xf32> -> vector<8x32xf32>
    %c0_21 = arith.constant 0 : index
    %c0_22 = arith.constant 0 : index
    %c32 = arith.constant 32 : index
    %34 = vector.load %arg2[%c0_21, %c0_22, %c32] : memref<1x8x128xbf16, #tpu.memory_space<vmem>>, vector<1x8x32xbf16>
    %35 = vector.shape_cast %34 : vector<1x8x32xbf16> to vector<8x32xbf16>
    %c0_23 = arith.constant 0 : index
    %c0_24 = arith.constant 0 : index
    %c32_25 = arith.constant 32 : index
    %36 = vector.load %arg3[%c0_23, %c0_24, %c32_25] : memref<1x8x128xbf16, #tpu.memory_space<vmem>>, vector<1x8x32xbf16>
    %37 = vector.shape_cast %36 : vector<1x8x32xbf16> to vector<8x32xbf16>
    %c0_26 = arith.constant 0 : index
    %c0_27 = arith.constant 0 : index
    %c32_28 = arith.constant 32 : index
    %38 = vector.load %arg4[%c0_26, %c0_27, %c32_28] : memref<1x8x128xbf16, #tpu.memory_space<vmem>>, vector<1x8x32xbf16>
    %39 = vector.shape_cast %38 : vector<1x8x32xbf16> to vector<8x32xbf16>
    %cst_29 = arith.constant dense<0.000000e+00> : vector<8x8xf32>
    %40 = tpu.matmul %35, %37, %cst_29 {dimension_numbers = #tpu.dot_dimension_numbers<[1], [1], [0], [0], [0, 0, 1, 0], [], []>} : vector<8x32xbf16>, vector<8x32xbf16>, vector<8x8xf32> -> vector<8x8xf32>
    %cst_30 = arith.constant 0.176776692 : f32
    %41 = vector.broadcast %cst_30 : f32 to vector<8x8xf32>
    %42 = arith.mulf %40, %41 : vector<8x8xf32>
    %cst_31 = arith.constant -1.000000e+09 : f32
    %43 = vector.broadcast %cst_31 : f32 to vector<8x8xf32>
    %44 = arith.select %10, %43, %42 : vector<8x8xi1>, vector<8x8xf32>
    %cst_32 = arith.constant dense<0xFF800000> : vector<8xf32>
    %45 = vector.multi_reduction <maximumf>, %44, %cst_32 [1] : vector<8x8xf32> to vector<8xf32>
    %46 = vector.shape_cast %45 : vector<8xf32> to vector<8x1xf32>
    %47 = vector.broadcast %46 : vector<8x1xf32> to vector<8x8xf32>
    %48 = arith.subf %44, %47 : vector<8x8xf32>
    %49 = math.exp %48 : vector<8x8xf32>
    %cst_33 = arith.constant dense<0.000000e+00> : vector<8xf32>
    %50 = vector.multi_reduction <add>, %49, %cst_33 [1] : vector<8x8xf32> to vector<8xf32>
    %51 = vector.shape_cast %50 : vector<8xf32> to vector<8x1xf32>
    %52 = tpu.reciprocal %51 {approx = true} : vector<8x1xf32> -> vector<8x1xf32>
    %53 = vector.broadcast %52 : vector<8x1xf32> to vector<8x8xf32>
    %54 = arith.mulf %49, %53 : vector<8x8xf32>
    %55 = arith.truncf %54 : vector<8x8xf32> to vector<8x8xbf16>
    %cst_34 = arith.constant dense<0.000000e+00> : vector<8x32xf32>
    %56 = tpu.matmul %55, %39, %cst_34 {dimension_numbers = #tpu.dot_dimension_numbers<[1], [0], [0], [1], [0, 0, 1, 1], [], []>} : vector<8x8xbf16>, vector<8x32xbf16>, vector<8x32xf32> -> vector<8x32xf32>
    %c0_35 = arith.constant 0 : index
    %c0_36 = arith.constant 0 : index
    %c64 = arith.constant 64 : index
    %57 = vector.load %arg2[%c0_35, %c0_36, %c64] : memref<1x8x128xbf16, #tpu.memory_space<vmem>>, vector<1x8x32xbf16>
    %58 = vector.shape_cast %57 : vector<1x8x32xbf16> to vector<8x32xbf16>
    %c0_37 = arith.constant 0 : index
    %c0_38 = arith.constant 0 : index
    %c64_39 = arith.constant 64 : index
    %59 = vector.load %arg3[%c0_37, %c0_38, %c64_39] : memref<1x8x128xbf16, #tpu.memory_space<vmem>>, vector<1x8x32xbf16>
    %60 = vector.shape_cast %59 : vector<1x8x32xbf16> to vector<8x32xbf16>
    %c0_40 = arith.constant 0 : index
    %c0_41 = arith.constant 0 : index
    %c64_42 = arith.constant 64 : index
    %61 = vector.load %arg4[%c0_40, %c0_41, %c64_42] : memref<1x8x128xbf16, #tpu.memory_space<vmem>>, vector<1x8x32xbf16>
    %62 = vector.shape_cast %61 : vector<1x8x32xbf16> to vector<8x32xbf16>
    %cst_43 = arith.constant dense<0.000000e+00> : vector<8x8xf32>
    %63 = tpu.matmul %58, %60, %cst_43 {dimension_numbers = #tpu.dot_dimension_numbers<[1], [1], [0], [0], [0, 0, 1, 0], [], []>} : vector<8x32xbf16>, vector<8x32xbf16>, vector<8x8xf32> -> vector<8x8xf32>
    %cst_44 = arith.constant 0.176776692 : f32
    %64 = vector.broadcast %cst_44 : f32 to vector<8x8xf32>
    %65 = arith.mulf %63, %64 : vector<8x8xf32>
    %cst_45 = arith.constant -1.000000e+09 : f32
    %66 = vector.broadcast %cst_45 : f32 to vector<8x8xf32>
    %67 = arith.select %10, %66, %65 : vector<8x8xi1>, vector<8x8xf32>
    %cst_46 = arith.constant dense<0xFF800000> : vector<8xf32>
    %68 = vector.multi_reduction <maximumf>, %67, %cst_46 [1] : vector<8x8xf32> to vector<8xf32>
    %69 = vector.shape_cast %68 : vector<8xf32> to vector<8x1xf32>
    %70 = vector.broadcast %69 : vector<8x1xf32> to vector<8x8xf32>
    %71 = arith.subf %67, %70 : vector<8x8xf32>
    %72 = math.exp %71 : vector<8x8xf32>
    %cst_47 = arith.constant dense<0.000000e+00> : vector<8xf32>
    %73 = vector.multi_reduction <add>, %72, %cst_47 [1] : vector<8x8xf32> to vector<8xf32>
    %74 = vector.shape_cast %73 : vector<8xf32> to vector<8x1xf32>
    %75 = tpu.reciprocal %74 {approx = true} : vector<8x1xf32> -> vector<8x1xf32>
    %76 = vector.broadcast %75 : vector<8x1xf32> to vector<8x8xf32>
    %77 = arith.mulf %72, %76 : vector<8x8xf32>
    %78 = arith.truncf %77 : vector<8x8xf32> to vector<8x8xbf16>
    %cst_48 = arith.constant dense<0.000000e+00> : vector<8x32xf32>
    %79 = tpu.matmul %78, %62, %cst_48 {dimension_numbers = #tpu.dot_dimension_numbers<[1], [0], [0], [1], [0, 0, 1, 1], [], []>} : vector<8x8xbf16>, vector<8x32xbf16>, vector<8x32xf32> -> vector<8x32xf32>
    %c0_49 = arith.constant 0 : index
    %c0_50 = arith.constant 0 : index
    %c96 = arith.constant 96 : index
    %80 = vector.load %arg2[%c0_49, %c0_50, %c96] : memref<1x8x128xbf16, #tpu.memory_space<vmem>>, vector<1x8x32xbf16>
    %81 = vector.shape_cast %80 : vector<1x8x32xbf16> to vector<8x32xbf16>
    %c0_51 = arith.constant 0 : index
    %c0_52 = arith.constant 0 : index
    %c96_53 = arith.constant 96 : index
    %82 = vector.load %arg3[%c0_51, %c0_52, %c96_53] : memref<1x8x128xbf16, #tpu.memory_space<vmem>>, vector<1x8x32xbf16>
    %83 = vector.shape_cast %82 : vector<1x8x32xbf16> to vector<8x32xbf16>
    %c0_54 = arith.constant 0 : index
    %c0_55 = arith.constant 0 : index
    %c96_56 = arith.constant 96 : index
    %84 = vector.load %arg4[%c0_54, %c0_55, %c96_56] : memref<1x8x128xbf16, #tpu.memory_space<vmem>>, vector<1x8x32xbf16>
    %85 = vector.shape_cast %84 : vector<1x8x32xbf16> to vector<8x32xbf16>
    %cst_57 = arith.constant dense<0.000000e+00> : vector<8x8xf32>
    %86 = tpu.matmul %81, %83, %cst_57 {dimension_numbers = #tpu.dot_dimension_numbers<[1], [1], [0], [0], [0, 0, 1, 0], [], []>} : vector<8x32xbf16>, vector<8x32xbf16>, vector<8x8xf32> -> vector<8x8xf32>
    %cst_58 = arith.constant 0.176776692 : f32
    %87 = vector.broadcast %cst_58 : f32 to vector<8x8xf32>
    %88 = arith.mulf %86, %87 : vector<8x8xf32>
    %cst_59 = arith.constant -1.000000e+09 : f32
    %89 = vector.broadcast %cst_59 : f32 to vector<8x8xf32>
    %90 = arith.select %10, %89, %88 : vector<8x8xi1>, vector<8x8xf32>
    %cst_60 = arith.constant dense<0xFF800000> : vector<8xf32>
    %91 = vector.multi_reduction <maximumf>, %90, %cst_60 [1] : vector<8x8xf32> to vector<8xf32>
    %92 = vector.shape_cast %91 : vector<8xf32> to vector<8x1xf32>
    %93 = vector.broadcast %92 : vector<8x1xf32> to vector<8x8xf32>
    %94 = arith.subf %90, %93 : vector<8x8xf32>
    %95 = math.exp %94 : vector<8x8xf32>
    %cst_61 = arith.constant dense<0.000000e+00> : vector<8xf32>
    %96 = vector.multi_reduction <add>, %95, %cst_61 [1] : vector<8x8xf32> to vector<8xf32>
    %97 = vector.shape_cast %96 : vector<8xf32> to vector<8x1xf32>
    %98 = tpu.reciprocal %97 {approx = true} : vector<8x1xf32> -> vector<8x1xf32>
    %99 = vector.broadcast %98 : vector<8x1xf32> to vector<8x8xf32>
    %100 = arith.mulf %95, %99 : vector<8x8xf32>
    %101 = arith.truncf %100 : vector<8x8xf32> to vector<8x8xbf16>
    %cst_62 = arith.constant dense<0.000000e+00> : vector<8x32xf32>
    %102 = tpu.matmul %101, %85, %cst_62 {dimension_numbers = #tpu.dot_dimension_numbers<[1], [0], [0], [1], [0, 0, 1, 1], [], []>} : vector<8x8xbf16>, vector<8x32xbf16>, vector<8x32xf32> -> vector<8x32xf32>
    %103 = tpu.concatenate %33, %56, %79, %102 in 1 : vector<8x32xf32>, vector<8x32xf32>, vector<8x32xf32>, vector<8x32xf32> -> vector<8x128xf32>
    %104 = arith.truncf %103 : vector<8x128xf32> to vector<8x128xbf16>
    %c0_63 = arith.constant 0 : index
    %c0_64 = arith.constant 0 : index
    %c0_65 = arith.constant 0 : index
    %105 = vector.load %arg7[%c0_63, %c0_64, %c0_65] : memref<1x8x128xbf16, #tpu.memory_space<vmem>>, vector<1x8x128xbf16>
    %106 = vector.shape_cast %105 : vector<1x8x128xbf16> to vector<8x128xbf16>
    %107 = vector.shape_cast %104 : vector<8x128xbf16> to vector<1x8x128xbf16>
    tpu.vector_store %arg7[%c0_63, %c0_64, %c0_65], %107 {strides = array<i32>} : memref<1x8x128xbf16, #tpu.memory_space<vmem>>, vector<1x8x128xbf16>,
    return
  }
  func.func @transform_0(%arg0: i32, %arg1: i32) -> (i32, i32, i32) {
    %c0_i32 = arith.constant 0 : i32
    %c0_i32_0 = arith.constant 0 : i32
    return %arg0, %arg1, %c0_i32 : i32, i32, i32
  }
  func.func @transform_1(%arg0: i32, %arg1: i32) -> (i32, i32, i32) {
    %c0_i32 = arith.constant 0 : i32
    %c0_i32_0 = arith.constant 0 : i32
    %c0_i32_1 = arith.constant 0 : i32
    return %arg0, %c0_i32, %c0_i32_0 : i32, i32, i32
  }
  func.func @transform_2(%arg0: i32, %arg1: i32) -> (i32, i32, i32) {
    %c0_i32 = arith.constant 0 : i32
    %c0_i32_0 = arith.constant 0 : i32
    %c0_i32_1 = arith.constant 0 : i32
    return %arg0, %c0_i32, %c0_i32_0 : i32, i32, i32
  }
  func.func @transform_3(%arg0: i32, %arg1: i32) -> (i32, i32, i32) {
    %c0_i32 = arith.constant 0 : i32
    %c0_i32_0 = arith.constant 0 : i32
    return %arg0, %arg1, %c0_i32 : i32, i32, i32
  }
  func.func @transform_4(%arg0: i32, %arg1: i32) -> (i32, i32, i32) {
    %c0_i32 = arith.constant 0 : i32
    %c0_i32_0 = arith.constant 0 : i32
    %c0_i32_1 = arith.constant 0 : i32
    return %arg0, %c0_i32, %c0_i32_0 : i32, i32, i32
  }
  func.func @transform_5(%arg0: i32, %arg1: i32) -> (i32, i32, i32) {
    %c0_i32 = arith.constant 0 : i32
    %c0_i32_0 = arith.constant 0 : i32
    return %arg0, %arg1, %c0_i32 : i32, i32, i32
  }
}

module attributes {stable_mosaic.version = 11 : i64} {
  func.func @_linear_kernel(%arg0: i32, %arg1: i32, %arg2: i32, %arg3: memref<16x128xbf16, #tpu.memory_space<vmem>>, %arg4: memref<128x256xbf16, #tpu.memory_space<vmem>>, %arg5: memref<1x256xf32, #tpu.memory_space<vmem>>, %arg6: memref<16x256xbf16, #tpu.memory_space<vmem>>, %arg7: memref<16x256xf32, #tpu.memory_space<vmem>>) attributes {dimension_semantics = [#tpu.dimension_semantics<parallel>, #tpu.dimension_semantics<parallel>, #tpu.dimension_semantics<arbitrary>], iteration_bounds = array<i64: 1, 1, 1>, scalar_prefetch = 0 : i64, scratch_operands = 1 : i64, tpu.core_type = #tpu.core_type<tc>, window_params = [{transform_indices = @transform_0, window_bounds = array<i64: 16, 128>}, {transform_indices = @transform_1, window_bounds = array<i64: 128, 256>}, {transform_indices = @transform_2, window_bounds = array<i64: 1, 256>}, {transform_indices = @transform_3, window_bounds = array<i64: 16, 256>}]} {
    %c0_i32 = arith.constant 0 : i32
    %0 = arith.cmpi eq, %arg2, %c0_i32 : i32
    %1 = arith.extui %0 : i1 to i32
    %c0_i32_0 = arith.constant 0 : i32
    %2 = arith.cmpi ne, %1, %c0_i32_0 : i32
    scf.if %2 {
      %cst_10 = arith.constant 0.000000e+00 : f32
      %12 = vector.broadcast %cst_10 : f32 to vector<16x256xf32>
      %c0_11 = arith.constant 0 : index
      %c0_12 = arith.constant 0 : index
      %13 = vector.load %arg7[%c0_11, %c0_12] : memref<16x256xf32, #tpu.memory_space<vmem>>, vector<16x256xf32>
      tpu.vector_store %arg7[%c0_11, %c0_12], %12 {strides = array<i32>} : memref<16x256xf32, #tpu.memory_space<vmem>>, vector<16x256xf32>,
    } else {
    }
    %c0 = arith.constant 0 : index
    %c0_1 = arith.constant 0 : index
    %3 = vector.load %arg7[%c0, %c0_1] : memref<16x256xf32, #tpu.memory_space<vmem>>, vector<16x256xf32>
    %c0_2 = arith.constant 0 : index
    %c0_3 = arith.constant 0 : index
    %4 = vector.load %arg3[%c0_2, %c0_3] : memref<16x128xbf16, #tpu.memory_space<vmem>>, vector<16x128xbf16>
    %c0_4 = arith.constant 0 : index
    %c0_5 = arith.constant 0 : index
    %5 = vector.load %arg4[%c0_4, %c0_5] : memref<128x256xbf16, #tpu.memory_space<vmem>>, vector<128x256xbf16>
    %cst = arith.constant dense<0.000000e+00> : vector<16x256xf32>
    %6 = tpu.matmul %4, %5, %cst {dimension_numbers = #tpu.dot_dimension_numbers<[1], [0], [0], [1], [0, 0, 1, 1], [], []>} : vector<16x128xbf16>, vector<128x256xbf16>, vector<16x256xf32> -> vector<16x256xf32>
    %7 = arith.addf %3, %6 : vector<16x256xf32>
    %c0_6 = arith.constant 0 : index
    %c0_7 = arith.constant 0 : index
    %8 = vector.load %arg7[%c0_6, %c0_7] : memref<16x256xf32, #tpu.memory_space<vmem>>, vector<16x256xf32>
    tpu.vector_store %arg7[%c0_6, %c0_7], %7 {strides = array<i32>} : memref<16x256xf32, #tpu.memory_space<vmem>>, vector<16x256xf32>,
    %c0_i32_8 = arith.constant 0 : i32
    %9 = arith.cmpi eq, %arg2, %c0_i32_8 : i32
    %10 = arith.extui %9 : i1 to i32
    %c0_i32_9 = arith.constant 0 : i32
    %11 = arith.cmpi ne, %10, %c0_i32_9 : i32
    scf.if %11 {
      %c0_10 = arith.constant 0 : index
      %c0_11 = arith.constant 0 : index
      %12 = vector.load %arg7[%c0_10, %c0_11] : memref<16x256xf32, #tpu.memory_space<vmem>>, vector<16x256xf32>
      %c0_12 = arith.constant 0 : index
      %c0_13 = arith.constant 0 : index
      %13 = vector.load %arg5[%c0_12, %c0_13] : memref<1x256xf32, #tpu.memory_space<vmem>>, vector<1x256xf32>
      %14 = vector.broadcast %13 : vector<1x256xf32> to vector<16x256xf32>
      %15 = arith.addf %12, %14 : vector<16x256xf32>
      %cst_14 = arith.constant 0.000000e+00 : f32
      %16 = vector.broadcast %cst_14 : f32 to vector<16x256xf32>
      %17 = arith.maximumf %15, %16 : vector<16x256xf32>
      %18 = arith.truncf %17 : vector<16x256xf32> to vector<16x256xbf16>
      %c0_15 = arith.constant 0 : index
      %c0_16 = arith.constant 0 : index
      %19 = vector.load %arg6[%c0_15, %c0_16] : memref<16x256xbf16, #tpu.memory_space<vmem>>, vector<16x256xbf16>
      tpu.vector_store %arg6[%c0_15, %c0_16], %18 {strides = array<i32>} : memref<16x256xbf16, #tpu.memory_space<vmem>>, vector<16x256xbf16>,
    } else {
    }
    return
  }
  func.func @transform_0(%arg0: i32, %arg1: i32, %arg2: i32) -> (i32, i32) {
    %c0_i32 = arith.constant 0 : i32
    return %arg0, %arg2 : i32, i32
  }
  func.func @transform_1(%arg0: i32, %arg1: i32, %arg2: i32) -> (i32, i32) {
    %c0_i32 = arith.constant 0 : i32
    return %arg2, %arg1 : i32, i32
  }
  func.func @transform_2(%arg0: i32, %arg1: i32, %arg2: i32) -> (i32, i32) {
    %c0_i32 = arith.constant 0 : i32
    %c0_i32_0 = arith.constant 0 : i32
    return %c0_i32, %arg1 : i32, i32
  }
  func.func @transform_3(%arg0: i32, %arg1: i32, %arg2: i32) -> (i32, i32) {
    %c0_i32 = arith.constant 0 : i32
    return %arg0, %arg1 : i32, i32
  }
}

module attributes {stable_mosaic.version = 11 : i64} {
  func.func @_linear_kernel(%arg0: i32, %arg1: i32, %arg2: i32, %arg3: memref<16x128xbf16, #tpu.memory_space<vmem>>, %arg4: memref<128x256xbf16, #tpu.memory_space<vmem>>, %arg5: memref<1x256xf32, #tpu.memory_space<vmem>>, %arg6: memref<16x256xf32, #tpu.memory_space<vmem>>, %arg7: memref<16x256xf32, #tpu.memory_space<vmem>>) attributes {dimension_semantics = [#tpu.dimension_semantics<parallel>, #tpu.dimension_semantics<parallel>, #tpu.dimension_semantics<arbitrary>], iteration_bounds = array<i64: 1, 1, 1>, scalar_prefetch = 0 : i64, scratch_operands = 1 : i64, tpu.core_type = #tpu.core_type<tc>, window_params = [{transform_indices = @transform_0, window_bounds = array<i64: 16, 128>}, {transform_indices = @transform_1, window_bounds = array<i64: 128, 256>}, {transform_indices = @transform_2, window_bounds = array<i64: 1, 256>}, {transform_indices = @transform_3, window_bounds = array<i64: 16, 256>}]} {
    %c0_i32 = arith.constant 0 : i32
    %0 = arith.cmpi eq, %arg2, %c0_i32 : i32
    %1 = arith.extui %0 : i1 to i32
    %c0_i32_0 = arith.constant 0 : i32
    %2 = arith.cmpi ne, %1, %c0_i32_0 : i32
    scf.if %2 {
      %cst_10 = arith.constant 0.000000e+00 : f32
      %12 = vector.broadcast %cst_10 : f32 to vector<16x256xf32>
      %c0_11 = arith.constant 0 : index
      %c0_12 = arith.constant 0 : index
      %13 = vector.load %arg7[%c0_11, %c0_12] : memref<16x256xf32, #tpu.memory_space<vmem>>, vector<16x256xf32>
      tpu.vector_store %arg7[%c0_11, %c0_12], %12 {strides = array<i32>} : memref<16x256xf32, #tpu.memory_space<vmem>>, vector<16x256xf32>,
    } else {
    }
    %c0 = arith.constant 0 : index
    %c0_1 = arith.constant 0 : index
    %3 = vector.load %arg7[%c0, %c0_1] : memref<16x256xf32, #tpu.memory_space<vmem>>, vector<16x256xf32>
    %c0_2 = arith.constant 0 : index
    %c0_3 = arith.constant 0 : index
    %4 = vector.load %arg3[%c0_2, %c0_3] : memref<16x128xbf16, #tpu.memory_space<vmem>>, vector<16x128xbf16>
    %c0_4 = arith.constant 0 : index
    %c0_5 = arith.constant 0 : index
    %5 = vector.load %arg4[%c0_4, %c0_5] : memref<128x256xbf16, #tpu.memory_space<vmem>>, vector<128x256xbf16>
    %cst = arith.constant dense<0.000000e+00> : vector<16x256xf32>
    %6 = tpu.matmul %4, %5, %cst {dimension_numbers = #tpu.dot_dimension_numbers<[1], [0], [0], [1], [0, 0, 1, 1], [], []>} : vector<16x128xbf16>, vector<128x256xbf16>, vector<16x256xf32> -> vector<16x256xf32>
    %7 = arith.addf %3, %6 : vector<16x256xf32>
    %c0_6 = arith.constant 0 : index
    %c0_7 = arith.constant 0 : index
    %8 = vector.load %arg7[%c0_6, %c0_7] : memref<16x256xf32, #tpu.memory_space<vmem>>, vector<16x256xf32>
    tpu.vector_store %arg7[%c0_6, %c0_7], %7 {strides = array<i32>} : memref<16x256xf32, #tpu.memory_space<vmem>>, vector<16x256xf32>,
    %c0_i32_8 = arith.constant 0 : i32
    %9 = arith.cmpi eq, %arg2, %c0_i32_8 : i32
    %10 = arith.extui %9 : i1 to i32
    %c0_i32_9 = arith.constant 0 : i32
    %11 = arith.cmpi ne, %10, %c0_i32_9 : i32
    scf.if %11 {
      %c0_10 = arith.constant 0 : index
      %c0_11 = arith.constant 0 : index
      %12 = vector.load %arg7[%c0_10, %c0_11] : memref<16x256xf32, #tpu.memory_space<vmem>>, vector<16x256xf32>
      %c0_12 = arith.constant 0 : index
      %c0_13 = arith.constant 0 : index
      %13 = vector.load %arg5[%c0_12, %c0_13] : memref<1x256xf32, #tpu.memory_space<vmem>>, vector<1x256xf32>
      %14 = vector.broadcast %13 : vector<1x256xf32> to vector<16x256xf32>
      %15 = arith.addf %12, %14 : vector<16x256xf32>
      %c0_14 = arith.constant 0 : index
      %c0_15 = arith.constant 0 : index
      %16 = vector.load %arg6[%c0_14, %c0_15] : memref<16x256xf32, #tpu.memory_space<vmem>>, vector<16x256xf32>
      tpu.vector_store %arg6[%c0_14, %c0_15], %15 {strides = array<i32>} : memref<16x256xf32, #tpu.memory_space<vmem>>, vector<16x256xf32>,
    } else {
    }
    return
  }
  func.func @transform_0(%arg0: i32, %arg1: i32, %arg2: i32) -> (i32, i32) {
    %c0_i32 = arith.constant 0 : i32
    return %arg0, %arg2 : i32, i32
  }
  func.func @transform_1(%arg0: i32, %arg1: i32, %arg2: i32) -> (i32, i32) {
    %c0_i32 = arith.constant 0 : i32
    return %arg2, %arg1 : i32, i32
  }
  func.func @transform_2(%arg0: i32, %arg1: i32, %arg2: i32) -> (i32, i32) {
    %c0_i32 = arith.constant 0 : i32
    %c0_i32_0 = arith.constant 0 : i32
    return %c0_i32, %arg1 : i32, i32
  }
  func.func @transform_3(%arg0: i32, %arg1: i32, %arg2: i32) -> (i32, i32) {
    %c0_i32 = arith.constant 0 : i32
    return %arg0, %arg1 : i32, i32
  }
}

</mosaic_0001>

<llo_original>
// kernel: transformer_decoder_forward.21
$region0: #{transformer_decoder_forward.21}
  #allocation0 [shape = 'u32[]', space=smem, size = 0x4, offset = 0x4, fixed_abs, tag = 'smem constant byte address 0x4 - core index']
  #allocation1 [shape = 'u32[144,128]{1,0:T(1,128)}', space=vmem, size = 0x12000, scoped, tag = 'internal scratch']
  #allocation2 [shape = 'f32[16,128]{1,0:T(8,128)}', space=vmem, size = 0x2000, scoped, tag = 'scratch operand']
  %s0 = inlined_call_operand.vmem [shape: bf16[16,128], index: 0, kind: input, shape index: {}]
  %s1 = inlined_call_operand.vmem [shape: bf16[128,128], index: 1, kind: input, shape index: {}]
  %s2 = inlined_call_operand.vmem [shape: f32[1,128], index: 2, kind: input, shape index: {}]
  %s3 = inlined_call_operand.vmem [shape: bf16[16,128], index: 3, kind: input, shape index: {}]
  %s4 = inlined_call_operand.vmem [shape: f32[1,128], index: 4, kind: input, shape index: {}]
  %s5 = inlined_call_operand.vmem [shape: f32[1,128], index: 5, kind: input, shape index: {}]
  %s6 = inlined_call_operand.vmem [shape: bf16[16,128], index: 6, kind: output, shape index: {}]
  %s7 = sld [smem:[#allocation0]]
  $region42: #{transformer_decoder_forward.21} parent=0
    _
  %s9 = ssub.s32 1, %s7
  %s10 = scalar_select 0, %s9, %s7
  // Predicated region
  $region2: #{transformer_decoder_forward.21} parent=0 // pred_check
    _
  $region3: #{transformer_decoder_forward.21} parent=0 // pred_check_branch
    %12 = sbr.rel (0) target = $region5
  $region4: #{transformer_decoder_forward.21} parent=0 // pred_region
    _
  $region5: #{transformer_decoder_forward.21} parent=0 // pred_fallthru
    _
  // Predicated region
  $region6: #{transformer_decoder_forward.21} parent=0 // pred_check
    _
  $region7: #{transformer_decoder_forward.21} parent=0 // pred_check_branch
    %14 = sbr.rel (0) target = $region9
  $region8: #{transformer_decoder_forward.21} parent=0 // pred_region
    _
  $region9: #{transformer_decoder_forward.21} parent=0 // pred_fallthru
    _
  // Predicated region
  $region10: #{transformer_decoder_forward.21} parent=0 // pred_check
    _
  $region11: #{transformer_decoder_forward.21} parent=0 // pred_check_branch
    %16 = sbr.rel (0) target = $region13
  $region12: #{transformer_decoder_forward.21} parent=0 // pred_region
    _
  $region13: #{transformer_decoder_forward.21} parent=0 // pred_fallthru
    _
  // Predicated region
  $region14: #{transformer_decoder_forward.21} parent=0 // pred_check
    _
  $region15: #{transformer_decoder_forward.21} parent=0 // pred_check_branch
    %18 = sbr.rel (0) target = $region17
  $region16: #{transformer_decoder_forward.21} parent=0 // pred_region
    _
  $region17: #{transformer_decoder_forward.21} parent=0 // pred_fallthru
    _
  // Predicated region
  $region18: #{transformer_decoder_forward.21} parent=0 // pred_check
    _
  $region19: #{transformer_decoder_forward.21} parent=0 // pred_check_branch
    %20 = sbr.rel (0) target = $region21
  $region20: #{transformer_decoder_forward.21} parent=0 // pred_region
    _
  $region21: #{transformer_decoder_forward.21} parent=0 // pred_fallthru
    _
  // Predicated region
  $region22: #{transformer_decoder_forward.21} parent=0 // pred_check
    _
  $region23: #{transformer_decoder_forward.21} parent=0 // pred_check_branch
    %22 = sbr.rel (0) target = $region25
  $region24: #{transformer_decoder_forward.21} parent=0 // pred_region
    _
  $region25: #{transformer_decoder_forward.21} parent=0 // pred_fallthru
    _
  %p24 = scmp.eq.s32.totalorder 0, 0
  // Predicated region
  $region26: #{transformer_decoder_forward.21} parent=0 // pred_check
    %p25 = pneg %p24
  $region27: #{transformer_decoder_forward.21} parent=0 // pred_check_branch
    %27 = sbr.rel (%p25) target = $region29
  $region28: #{transformer_decoder_forward.21} parent=0 // pred_region
    %28 = vst [vmem:[#allocation2] sm:$0xff] 0.0
    %29 = vst [vmem:[#allocation2 + $0x8] sm:$0xff] 0.0
  $region29: #{transformer_decoder_forward.21} parent=0 // pred_fallthru
    _
  %v30 = vld [vmem:[#allocation2] sm:$0xff]
  %v31 = vld [vmem:[#allocation2 + $0x8] sm:$0xff]
  %v32 = vld [vmem:[%s0] sm:$0xf]
  %v33 = vld [vmem:[%s0 + $0x4] sm:$0xf]
  %v34 = vld [vmem:[%s1] sm:$0xf]
  %v35 = vld [vmem:[%s1 + $0x4] sm:$0xf]
  %v36 = vld [vmem:[%s1 + $0x8] sm:$0xf]
  %v37 = vld [vmem:[%s1 + $0xc] sm:$0xf]
  %v38 = vld [vmem:[%s1 + $0x10] sm:$0xf]
  %v39 = vld [vmem:[%s1 + $0x14] sm:$0xf]
  %v40 = vld [vmem:[%s1 + $0x18] sm:$0xf]
  %v41 = vld [vmem:[%s1 + $0x1c] sm:$0xf]
  %v42 = vld [vmem:[%s1 + $0x20] sm:$0xf]
  %v43 = vld [vmem:[%s1 + $0x24] sm:$0xf]
  %v44 = vld [vmem:[%s1 + $0x28] sm:$0xf]
  %v45 = vld [vmem:[%s1 + $0x2c] sm:$0xf]
  %v46 = vld [vmem:[%s1 + $0x30] sm:$0xf]
  %v47 = vld [vmem:[%s1 + $0x34] sm:$0xf]
  %v48 = vld [vmem:[%s1 + $0x38] sm:$0xf]
  %v49 = vld [vmem:[%s1 + $0x3c] sm:$0xf]
  %v52 = vunpack.c.l.b16 %v32
  %v53 = vunpack.c.l.b16 %v33
  %v54 = vpack.c.b16 %v53, %v52
  %v72 = vunpack.c.l.b16 %v34
  %v73 = vunpack.c.l.b16 %v35
  %v74 = vunpack.c.l.b16 %v36
  %v75 = vunpack.c.l.b16 %v37
  %v76 = vunpack.c.l.b16 %v38
  %v77 = vunpack.c.l.b16 %v39
  %v78 = vunpack.c.l.b16 %v40
  %v79 = vunpack.c.l.b16 %v41
  %v80 = vunpack.c.l.b16 %v42
  %v81 = vunpack.c.l.b16 %v43
  %v82 = vunpack.c.l.b16 %v44
  %v83 = vunpack.c.l.b16 %v45
  %v84 = vunpack.c.l.b16 %v46
  %v85 = vunpack.c.l.b16 %v47
  %v86 = vunpack.c.l.b16 %v48
  %v87 = vunpack.c.l.b16 %v49
  %v88 = vpack.c.b16 %v73, %v72
  %v89 = vpack.c.b16 %v75, %v74
  %v90 = vpack.c.b16 %v77, %v76
  %v91 = vpack.c.b16 %v79, %v78
  %v92 = vpack.c.b16 %v81, %v80
  %v93 = vpack.c.b16 %v83, %v82
  %v94 = vpack.c.b16 %v85, %v84
  %v95 = vpack.c.b16 %v87, %v86
  %104 = vmatprep.subr.bf16.mxu0 0
  %105 = vmatpush1.bf16.msra.mxu0 %v95
  %106 = vmatprep.subr.bf16.mxu0 0
  %107 = vmatpush1.bf16.msra.mxu0 %v94
  %108 = vmatprep.subr.bf16.mxu0 0
  %109 = vmatpush1.bf16.msra.mxu0 %v93
  %110 = vmatprep.subr.bf16.mxu0 0
  %111 = vmatpush1.bf16.msra.mxu0 %v92
  %112 = vmatprep.subr.bf16.mxu0 0
  %113 = vmatpush1.bf16.msra.mxu0 %v91
  %114 = vmatprep.subr.bf16.mxu0 0
  %115 = vmatpush1.bf16.msra.mxu0 %v90
  %116 = vmatprep.subr.bf16.mxu0 0
  %117 = vmatpush1.bf16.msra.mxu0 %v89
  %118 = vmatprep.subr.bf16.mxu0 0
  %119 = vmatpush1.bf16.msra.mxu0 %v88
  %120 = vmatprep.subr.bf16.mxu0 0
  %121 = vmatpush2.bf16.msra.mxu0 0
  %122 = vmatprep.subr.bf16.mxu0 0
  %123 = vmatpush2.bf16.msra.mxu0 0
  %124 = vmatprep.subr.bf16.mxu0 0
  %125 = vmatpush2.bf16.msra.mxu0 0
  %126 = vmatprep.subr.bf16.mxu0 0
  %127 = vmatpush2.bf16.msra.mxu0 0
  %128 = vmatprep.subr.bf16.mxu0 0
  %129 = vmatpush2.bf16.msra.mxu0 0
  %130 = vmatprep.subr.bf16.mxu0 0
  %131 = vmatpush2.bf16.msra.mxu0 0
  %132 = vmatprep.subr.bf16.mxu0 0
  %133 = vmatpush2.bf16.msra.mxu0 0
  %134 = vmatprep.subr.bf16.mxu0 0
  %135 = vmatpush2.bf16.msra.mxu0 0
  %136 = vmatprep.mubr.bf16.mxu0 0
  %137 = vmatmul.mubr.bf16.gmra.mxu0 %v54
  %v138 = vpop.f32.mrf.mxu0
  %v139 = vadd.f32 0.0, %v138
  %v140 = vpop.f32.mrf.mxu0
  %v141 = vpop.f32.mrf.mxu0
  %v142 = vadd.f32 0.0, %v141
  %v143 = vpop.f32.mrf.mxu0
  %144 = vdwg.mxu0
  %v145 = vadd.f32 %v30, %v139
  %v146 = vadd.f32 %v31, %v142
  %147 = vst [vmem:[#allocation2] sm:$0xff] %v145
  %148 = vst [vmem:[#allocation2 + $0x8] sm:$0xff] %v146
  // Predicated region
  $region30: #{transformer_decoder_forward.21} parent=0 // pred_check
    %p149 = pneg %p24
  $region31: #{transformer_decoder_forward.21} parent=0 // pred_check_branch
    %151 = sbr.rel (%p149) target = $region33
  $region32: #{transformer_decoder_forward.21} parent=0 // pred_region
    %v152 = vld [vmem:[#allocation2] sm:$0xff]
    %v153 = vld [vmem:[#allocation2 + $0x8] sm:$0xff]
    %v154 = vld [vmem:[%s2] sm:$0x1]
    %v156 = vlaneseq
    %v157 = vshrl.u32 %v156, 7
    %v158 = vsub.s32 0, %v157
    %v159 = vrot.slane %v154, %v158
    %v161 = vadd.f32 %v152, %v159
    %v162 = vadd.f32 %v153, %v159
    %v163 = vld [vmem:[%s3] sm:$0xf]
    %v164 = vld [vmem:[%s3 + $0x4] sm:$0xf]
    %v165 = vunpack.c.l.bf16 %v163
    %v166 = vunpack.c.l.bf16 %v164
    %v167 = vadd.f32 %v161, %v165
    %v168 = vadd.f32 %v162, %v166
    %169 = vadd.xlane.f32.xlu0 %v167
    %v170 = vpop.xlane.xlu0 %169
    %171 = vadd.xlane.f32.xlu0 %v168
    %v172 = vpop.xlane.xlu0 %171
    %v173 = vrcp.pop 128.0
    %v174 = vmul.f32 %v170, %v173
    %v175 = vmul.f32 %v172, %v173
    %v176 = vsub.f32 %v167, %v174
    %v177 = vsub.f32 %v168, %v175
    %v178 = vmul.f32 %v176, %v176
    %v179 = vmul.f32 %v177, %v177
    %180 = vadd.xlane.f32.xlu0 %v178
    %v181 = vpop.xlane.xlu0 %180
    %182 = vadd.xlane.f32.xlu0 %v179
    %v183 = vpop.xlane.xlu0 %182
    %v184 = vmul.f32 %v181, %v173
    %v185 = vmul.f32 %v183, %v173
    %v186 = vadd.f32 %v184, 1e-06
    %v187 = vadd.f32 %v185, 1e-06
    %v188 = vrsqrt.pop %v186
    %v189 = vrsqrt.pop %v187
    %v190 = vmul.f32 %v176, %v188
    %v191 = vmul.f32 %v177, %v189
    %v192 = vld [vmem:[%s4] sm:$0x1]
    %v194 = vlaneseq
    %v195 = vshrl.u32 %v194, 7
    %v196 = vsub.s32 0, %v195
    %v197 = vrot.slane %v192, %v196
    %v199 = vmul.f32 %v190, %v197
    %v200 = vmul.f32 %v191, %v197
    %v201 = vld [vmem:[%s5] sm:$0x1]
    %v203 = vlaneseq
    %v204 = vshrl.u32 %v203, 7
    %v205 = vsub.s32 0, %v204
    %v206 = vrot.slane %v201, %v205
    %v208 = vadd.f32 %v199, %v206
    %v209 = vadd.f32 %v200, %v206
    %v210 = vpack.c.bf16 %v209, %v208
    %v212 = vunpack.c.l.b16 %v210
    %v213 = vunpack.c.h.b16 %v210
    %v214 = vpack.c.b16 %v212, %v212
    %v215 = vpack.c.b16 %v213, %v213
    %218 = vst [vmem:[%s6] sm:$0xf] %v214
    %219 = vst [vmem:[%s6 + $0x4] sm:$0xf] %v215
  $region33: #{transformer_decoder_forward.21} parent=0 // pred_fallthru
    _
  // Predicated region
  $region34: #{transformer_decoder_forward.21} parent=0 // pred_check
    _
  $region35: #{transformer_decoder_forward.21} parent=0 // pred_check_branch
    %221 = sbr.rel (0) target = $region37
  $region36: #{transformer_decoder_forward.21} parent=0 // pred_region
    _
  $region37: #{transformer_decoder_forward.21} parent=0 // pred_fallthru
    _
  // Predicated region
  $region38: #{transformer_decoder_forward.21} parent=0 // pred_check
    _
  $region39: #{transformer_decoder_forward.21} parent=0 // pred_check_branch
    %223 = sbr.rel (0) target = $region41
  $region40: #{transformer_decoder_forward.21} parent=0 // pred_region
    _
  $region41: #{transformer_decoder_forward.21} parent=0 // pred_fallthru
    _

// kernel: transformer_decoder_forward.22
$region0: #{transformer_decoder_forward.22}
  #allocation0 [shape = 'u32[]', space=smem, size = 0x4, offset = 0x4, fixed_abs, tag = 'smem constant byte address 0x4 - core index']
  #allocation1 [shape = 'u32[144,128]{1,0:T(1,128)}', space=vmem, size = 0x12000, scoped, tag = 'internal scratch']
  #allocation2 [shape = 'f32[16,128]{1,0:T(8,128)}', space=vmem, size = 0x2000, scoped, tag = 'scratch operand']
  %s0 = inlined_call_operand.vmem [shape: bf16[16,128], index: 0, kind: input, shape index: {}]
  %s1 = inlined_call_operand.vmem [shape: bf16[128,128], index: 1, kind: input, shape index: {}]
  %s2 = inlined_call_operand.vmem [shape: f32[1,128], index: 2, kind: input, shape index: {}]
  %s3 = inlined_call_operand.vmem [shape: bf16[16,128], index: 3, kind: output, shape index: {}]
  %s4 = sld [smem:[#allocation0]]
  $region30: #{transformer_decoder_forward.22} parent=0
    _
  %s6 = ssub.s32 1, %s4
  %s7 = scalar_select 0, %s6, %s4
  // Predicated region
  $region2: #{transformer_decoder_forward.22} parent=0 // pred_check
    _
  $region3: #{transformer_decoder_forward.22} parent=0 // pred_check_branch
    %9 = sbr.rel (0) target = $region5
  $region4: #{transformer_decoder_forward.22} parent=0 // pred_region
    _
  $region5: #{transformer_decoder_forward.22} parent=0 // pred_fallthru
    _
  // Predicated region
  $region6: #{transformer_decoder_forward.22} parent=0 // pred_check
    _
  $region7: #{transformer_decoder_forward.22} parent=0 // pred_check_branch
    %11 = sbr.rel (0) target = $region9
  $region8: #{transformer_decoder_forward.22} parent=0 // pred_region
    _
  $region9: #{transformer_decoder_forward.22} parent=0 // pred_fallthru
    _
  // Predicated region
  $region10: #{transformer_decoder_forward.22} parent=0 // pred_check
    _
  $region11: #{transformer_decoder_forward.22} parent=0 // pred_check_branch
    %13 = sbr.rel (0) target = $region13
  $region12: #{transformer_decoder_forward.22} parent=0 // pred_region
    _
  $region13: #{transformer_decoder_forward.22} parent=0 // pred_fallthru
    _
  %p15 = scmp.eq.s32.totalorder 0, 0
  // Predicated region
  $region14: #{transformer_decoder_forward.22} parent=0 // pred_check
    %p16 = pneg %p15
  $region15: #{transformer_decoder_forward.22} parent=0 // pred_check_branch
    %18 = sbr.rel (%p16) target = $region17
  $region16: #{transformer_decoder_forward.22} parent=0 // pred_region
    %19 = vst [vmem:[#allocation2] sm:$0xff] 0.0
    %20 = vst [vmem:[#allocation2 + $0x8] sm:$0xff] 0.0
  $region17: #{transformer_decoder_forward.22} parent=0 // pred_fallthru
    _
  %v21 = vld [vmem:[#allocation2] sm:$0xff]
  %v22 = vld [vmem:[#allocation2 + $0x8] sm:$0xff]
  %v23 = vld [vmem:[%s0] sm:$0xf]
  %v24 = vld [vmem:[%s0 + $0x4] sm:$0xf]
  %v25 = vld [vmem:[%s1] sm:$0xf]
  %v26 = vld [vmem:[%s1 + $0x4] sm:$0xf]
  %v27 = vld [vmem:[%s1 + $0x8] sm:$0xf]
  %v28 = vld [vmem:[%s1 + $0xc] sm:$0xf]
  %v29 = vld [vmem:[%s1 + $0x10] sm:$0xf]
  %v30 = vld [vmem:[%s1 + $0x14] sm:$0xf]
  %v31 = vld [vmem:[%s1 + $0x18] sm:$0xf]
  %v32 = vld [vmem:[%s1 + $0x1c] sm:$0xf]
  %v33 = vld [vmem:[%s1 + $0x20] sm:$0xf]
  %v34 = vld [vmem:[%s1 + $0x24] sm:$0xf]
  %v35 = vld [vmem:[%s1 + $0x28] sm:$0xf]
  %v36 = vld [vmem:[%s1 + $0x2c] sm:$0xf]
  %v37 = vld [vmem:[%s1 + $0x30] sm:$0xf]
  %v38 = vld [vmem:[%s1 + $0x34] sm:$0xf]
  %v39 = vld [vmem:[%s1 + $0x38] sm:$0xf]
  %v40 = vld [vmem:[%s1 + $0x3c] sm:$0xf]
  %v43 = vunpack.c.l.b16 %v23
  %v44 = vunpack.c.l.b16 %v24
  %v45 = vpack.c.b16 %v44, %v43
  %v63 = vunpack.c.l.b16 %v25
  %v64 = vunpack.c.l.b16 %v26
  %v65 = vunpack.c.l.b16 %v27
  %v66 = vunpack.c.l.b16 %v28
  %v67 = vunpack.c.l.b16 %v29
  %v68 = vunpack.c.l.b16 %v30
  %v69 = vunpack.c.l.b16 %v31
  %v70 = vunpack.c.l.b16 %v32
  %v71 = vunpack.c.l.b16 %v33
  %v72 = vunpack.c.l.b16 %v34
  %v73 = vunpack.c.l.b16 %v35
  %v74 = vunpack.c.l.b16 %v36
  %v75 = vunpack.c.l.b16 %v37
  %v76 = vunpack.c.l.b16 %v38
  %v77 = vunpack.c.l.b16 %v39
  %v78 = vunpack.c.l.b16 %v40
  %v79 = vpack.c.b16 %v64, %v63
  %v80 = vpack.c.b16 %v66, %v65
  %v81 = vpack.c.b16 %v68, %v67
  %v82 = vpack.c.b16 %v70, %v69
  %v83 = vpack.c.b16 %v72, %v71
  %v84 = vpack.c.b16 %v74, %v73
  %v85 = vpack.c.b16 %v76, %v75
  %v86 = vpack.c.b16 %v78, %v77
  %95 = vmatprep.subr.bf16.mxu0 0
  %96 = vmatpush1.bf16.msra.mxu0 %v86
  %97 = vmatprep.subr.bf16.mxu0 0
  %98 = vmatpush1.bf16.msra.mxu0 %v85
  %99 = vmatprep.subr.bf16.mxu0 0
  %100 = vmatpush1.bf16.msra.mxu0 %v84
  %101 = vmatprep.subr.bf16.mxu0 0
  %102 = vmatpush1.bf16.msra.mxu0 %v83
  %103 = vmatprep.subr.bf16.mxu0 0
  %104 = vmatpush1.bf16.msra.mxu0 %v82
  %105 = vmatprep.subr.bf16.mxu0 0
  %106 = vmatpush1.bf16.msra.mxu0 %v81
  %107 = vmatprep.subr.bf16.mxu0 0
  %108 = vmatpush1.bf16.msra.mxu0 %v80
  %109 = vmatprep.subr.bf16.mxu0 0
  %110 = vmatpush1.bf16.msra.mxu0 %v79
  %111 = vmatprep.subr.bf16.mxu0 0
  %112 = vmatpush2.bf16.msra.mxu0 0
  %113 = vmatprep.subr.bf16.mxu0 0
  %114 = vmatpush2.bf16.msra.mxu0 0
  %115 = vmatprep.subr.bf16.mxu0 0
  %116 = vmatpush2.bf16.msra.mxu0 0
  %117 = vmatprep.subr.bf16.mxu0 0
  %118 = vmatpush2.bf16.msra.mxu0 0
  %119 = vmatprep.subr.bf16.mxu0 0
  %120 = vmatpush2.bf16.msra.mxu0 0
  %121 = vmatprep.subr.bf16.mxu0 0
  %122 = vmatpush2.bf16.msra.mxu0 0
  %123 = vmatprep.subr.bf16.mxu0 0
  %124 = vmatpush2.bf16.msra.mxu0 0
  %125 = vmatprep.subr.bf16.mxu0 0
  %126 = vmatpush2.bf16.msra.mxu0 0
  %127 = vmatprep.mubr.bf16.mxu0 0
  %128 = vmatmul.mubr.bf16.gmra.mxu0 %v45
  %v129 = vpop.f32.mrf.mxu0
  %v130 = vadd.f32 0.0, %v129
  %v131 = vpop.f32.mrf.mxu0
  %v132 = vpop.f32.mrf.mxu0
  %v133 = vadd.f32 0.0, %v132
  %v134 = vpop.f32.mrf.mxu0
  %135 = vdwg.mxu0
  %v136 = vadd.f32 %v21, %v130
  %v137 = vadd.f32 %v22, %v133
  %138 = vst [vmem:[#allocation2] sm:$0xff] %v136
  %139 = vst [vmem:[#allocation2 + $0x8] sm:$0xff] %v137
  // Predicated region
  $region18: #{transformer_decoder_forward.22} parent=0 // pred_check
    %p140 = pneg %p15
  $region19: #{transformer_decoder_forward.22} parent=0 // pred_check_branch
    %142 = sbr.rel (%p140) target = $region21
  $region20: #{transformer_decoder_forward.22} parent=0 // pred_region
    %v143 = vld [vmem:[#allocation2] sm:$0xff]
    %v144 = vld [vmem:[#allocation2 + $0x8] sm:$0xff]
    %v145 = vld [vmem:[%s2] sm:$0x1]
    %v147 = vlaneseq
    %v148 = vshrl.u32 %v147, 7
    %v149 = vsub.s32 0, %v148
    %v150 = vrot.slane %v145, %v149
    %v152 = vadd.f32 %v143, %v150
    %v153 = vadd.f32 %v144, %v150
    %v154 = vpack.c.bf16 %v153, %v152
    %v156 = vunpack.c.l.b16 %v154
    %v157 = vunpack.c.h.b16 %v154
    %v158 = vpack.c.b16 %v156, %v156
    %v159 = vpack.c.b16 %v157, %v157
    %162 = vst [vmem:[%s3] sm:$0xf] %v158
    %163 = vst [vmem:[%s3 + $0x4] sm:$0xf] %v159
  $region21: #{transformer_decoder_forward.22} parent=0 // pred_fallthru
    _
  // Predicated region
  $region22: #{transformer_decoder_forward.22} parent=0 // pred_check
    _
  $region23: #{transformer_decoder_forward.22} parent=0 // pred_check_branch
    %165 = sbr.rel (0) target = $region25
  $region24: #{transformer_decoder_forward.22} parent=0 // pred_region
    _
  $region25: #{transformer_decoder_forward.22} parent=0 // pred_fallthru
    _
  // Predicated region
  $region26: #{transformer_decoder_forward.22} parent=0 // pred_check
    _
  $region27: #{transformer_decoder_forward.22} parent=0 // pred_check_branch
    %167 = sbr.rel (0) target = $region29
  $region28: #{transformer_decoder_forward.22} parent=0 // pred_region
    _
  $region29: #{transformer_decoder_forward.22} parent=0 // pred_fallthru
    _

// kernel: transformer_decoder_forward.20
$region0: #{transformer_decoder_forward.20}
  #allocation0 [shape = 'u32[]', space=smem, size = 0x4, offset = 0x4, fixed_abs, tag = 'smem constant byte address 0x4 - core index']
  #allocation1 [shape = 'u32[144,128]{1,0:T(1,128)}', space=vmem, size = 0x12000, scoped, tag = 'internal scratch']
  %s0 = inlined_call_operand.vmem [shape: bf16[2,8,128], index: 0, kind: input, shape index: {}]
  %s1 = inlined_call_operand.vmem [shape: bf16[2,8,128], index: 1, kind: input, shape index: {}]
  %s2 = inlined_call_operand.vmem [shape: bf16[2,8,128], index: 2, kind: input, shape index: {}]
  %s3 = inlined_call_operand.vmem [shape: f32[2,8,1], index: 3, kind: input, shape index: {}]
  %s4 = inlined_call_operand.vmem [shape: f32[2,1,8], index: 4, kind: input, shape index: {}]
  %s5 = inlined_call_operand.vmem [shape: bf16[2,8,128], index: 5, kind: output, shape index: {}]
  %s6 = sld [smem:[#allocation0]]
  $region53: #{transformer_decoder_forward.20} parent=0
    _
  %s8 = ssub.s32 1, %s6
  %s9 = scalar_select 0, %s8, %s6
  loop: start=0, step=1, limit=4
  $region2: #{transformer_decoder_forward.20} parent=0 // loop_pre_header
    _
  $region3: #{transformer_decoder_forward.20} parent=0 // loop_header
    %s11 = sphi 0, %s15
    %p12 = scmp.ge.s32.totalorder %s11, 4
    %s18 = sphi 0, %s30
    %s19 = sphi 0, %s26
    %s20 = sphi 0, %s18
    %s21 = sphi 0, %s19
    %s22 = sphi 0, %s20
    %s23 = sphi 0, %s21
    %s35 = sphi 0, %s37
    %s38 = sphi 0, %s35
    %s39 = sphi 0, %s38
    %s55 = sphi 0, %s39
    %s61 = sphi 0, %s63
    %s64 = sphi 0, %s61
    %s65 = sphi 0, %s64
    %s81 = sphi 0, %s65
    %s87 = sphi 0, %s89
    %s90 = sphi 0, %s87
    %s91 = sphi 0, %s90
    %s107 = sphi 0, %s91
    %s115 = sphi 0, %s117
    %s118 = sphi 0, %s115
    %s119 = sphi 0, %s118
    %s135 = sphi 0, %s119
    %s141 = sphi 0, %s143
    %s144 = sphi 0, %s141
    %s145 = sphi 0, %s144
    %s161 = sphi 0, %s145
    %s169 = sphi 0, %s171
    %s172 = sphi 0, %s169
    %s173 = sphi 0, %s172
    %s189 = sphi 0, %s173
  $region4: #{transformer_decoder_forward.20} parent=0 // loop_header_branch
    %14 = sbr.rel (%p12) target = $region8
  $region5: #{transformer_decoder_forward.20} parent=0 // loop_body
    %s16 = ssub.s32 %s11, 1
    %s17 = ssub.s32 %s11, 2
    %s24 = sadd.s32 1, %s19
    %p25 = scmp.ge.s32.totalorder %s24, 1
    %s26 = scalar_select %p25, 0, %s24
    %s27 = sadd.s32 1, %s18
    %s28 = scalar_select %p25, %s27, %s18
    %p29 = scmp.ge.s32.totalorder %s28, 2
    %s30 = scalar_select %p29, 0, %s28
    %s31 = ssub.s32 %s18, %s30
    %s32 = ssub.s32 %s19, %s26
    %s33 = sor.u32 %s31, %s32
    %p34 = scmp.eq.s32.totalorder %s33, 0
    %s36 = sadd.s32 %s35, 1
    %s37 = scalar_select %p34, %s35, %s36
    %p40 = pneg %p34
    %p41 = scmp.eq.s32.totalorder %s11, 1
    %p42 = por %p40, %p41
    %p43 = scmp.ne.s32.totalorder %s35, %s38
    %p44 = scmp.eq.s32.totalorder %s11, 0
    %p45 = por %p43, %p44
    %p46 = scmp.ne.s32.totalorder %s35, %s38
    %p47 = scmp.eq.s32.totalorder %s16, 1
    %p48 = por %p46, %p47
    %p49 = scmp.ne.s32.totalorder %s38, %s39
    %p50 = scmp.eq.s32.totalorder %s16, 0
    %p51 = por %p49, %p50
    %p52 = scmp.ne.s32.totalorder %s38, %s39
    %p53 = scmp.eq.s32.totalorder %s17, 1
    %p54 = por %p52, %p53
    %p56 = scmp.ne.s32.totalorder %s39, %s55
    %p57 = scmp.eq.s32.totalorder %s17, 0
    %p58 = por %p56, %p57
    %s59 = ssub.s32 %s18, %s30
    %p60 = scmp.eq.s32.totalorder %s59, 0
    %s62 = sadd.s32 %s61, 1
    %s63 = scalar_select %p60, %s61, %s62
    %p66 = pneg %p60
    %p67 = scmp.eq.s32.totalorder %s11, 1
    %p68 = por %p66, %p67
    %p69 = scmp.ne.s32.totalorder %s61, %s64
    %p70 = scmp.eq.s32.totalorder %s11, 0
    %p71 = por %p69, %p70
    %p72 = scmp.ne.s32.totalorder %s61, %s64
    %p73 = scmp.eq.s32.totalorder %s16, 1
    %p74 = por %p72, %p73
    %p75 = scmp.ne.s32.totalorder %s64, %s65
    %p76 = scmp.eq.s32.totalorder %s16, 0
    %p77 = por %p75, %p76
    %p78 = scmp.ne.s32.totalorder %s64, %s65
    %p79 = scmp.eq.s32.totalorder %s17, 1
    %p80 = por %p78, %p79
    %p82 = scmp.ne.s32.totalorder %s65, %s81
    %p83 = scmp.eq.s32.totalorder %s17, 0
    %p84 = por %p82, %p83
    %s85 = ssub.s32 %s18, %s30
    %p86 = scmp.eq.s32.totalorder %s85, 0
    %s88 = sadd.s32 %s87, 1
    %s89 = scalar_select %p86, %s87, %s88
    %p92 = pneg %p86
    %p93 = scmp.eq.s32.totalorder %s11, 1
    %p94 = por %p92, %p93
    %p95 = scmp.ne.s32.totalorder %s87, %s90
    %p96 = scmp.eq.s32.totalorder %s11, 0
    %p97 = por %p95, %p96
    %p98 = scmp.ne.s32.totalorder %s87, %s90
    %p99 = scmp.eq.s32.totalorder %s16, 1
    %p100 = por %p98, %p99
    %p101 = scmp.ne.s32.totalorder %s90, %s91
    %p102 = scmp.eq.s32.totalorder %s16, 0
    %p103 = por %p101, %p102
    %p104 = scmp.ne.s32.totalorder %s90, %s91
    %p105 = scmp.eq.s32.totalorder %s17, 1
    %p106 = por %p104, %p105
    %p108 = scmp.ne.s32.totalorder %s91, %s107
    %p109 = scmp.eq.s32.totalorder %s17, 0
    %p110 = por %p108, %p109
    %s111 = ssub.s32 %s18, %s30
    %s112 = ssub.s32 %s19, %s26
    %s113 = sor.u32 %s111, %s112
    %p114 = scmp.eq.s32.totalorder %s113, 0
    %s116 = sadd.s32 %s115, 1
    %s117 = scalar_select %p114, %s115, %s116
    %p120 = pneg %p114
    %p121 = scmp.eq.s32.totalorder %s11, 1
    %p122 = por %p120, %p121
    %p123 = scmp.ne.s32.totalorder %s115, %s118
    %p124 = scmp.eq.s32.totalorder %s11, 0
    %p125 = por %p123, %p124
    %p126 = scmp.ne.s32.totalorder %s115, %s118
    %p127 = scmp.eq.s32.totalorder %s16, 1
    %p128 = por %p126, %p127
    %p129 = scmp.ne.s32.totalorder %s118, %s119
    %p130 = scmp.eq.s32.totalorder %s16, 0
    %p131 = por %p129, %p130
    %p132 = scmp.ne.s32.totalorder %s118, %s119
    %p133 = scmp.eq.s32.totalorder %s17, 1
    %p134 = por %p132, %p133
    %p136 = scmp.ne.s32.totalorder %s119, %s135
    %p137 = scmp.eq.s32.totalorder %s17, 0
    %p138 = por %p136, %p137
    %s139 = ssub.s32 %s18, %s30
    %p140 = scmp.eq.s32.totalorder %s139, 0
    %s142 = sadd.s32 %s141, 1
    %s143 = scalar_select %p140, %s141, %s142
    %p146 = pneg %p140
    %p147 = scmp.eq.s32.totalorder %s11, 1
    %p148 = por %p146, %p147
    %p149 = scmp.ne.s32.totalorder %s141, %s144
    %p150 = scmp.eq.s32.totalorder %s11, 0
    %p151 = por %p149, %p150
    %p152 = scmp.ne.s32.totalorder %s141, %s144
    %p153 = scmp.eq.s32.totalorder %s16, 1
    %p154 = por %p152, %p153
    %p155 = scmp.ne.s32.totalorder %s144, %s145
    %p156 = scmp.eq.s32.totalorder %s16, 0
    %p157 = por %p155, %p156
    %p158 = scmp.ne.s32.totalorder %s144, %s145
    %p159 = scmp.eq.s32.totalorder %s17, 1
    %p160 = por %p158, %p159
    %p162 = scmp.ne.s32.totalorder %s145, %s161
    %p163 = scmp.eq.s32.totalorder %s17, 0
    %p164 = por %p162, %p163
    %s165 = ssub.s32 %s18, %s30
    %s166 = ssub.s32 %s19, %s26
    %s167 = sor.u32 %s165, %s166
    %p168 = scmp.eq.s32.totalorder %s167, 0
    %s170 = sadd.s32 %s169, 1
    %s171 = scalar_select %p168, %s169, %s170
    %p174 = pneg %p168
    %p175 = scmp.eq.s32.totalorder %s11, 1
    %p176 = por %p174, %p175
    %p177 = scmp.ne.s32.totalorder %s169, %s172
    %p178 = scmp.eq.s32.totalorder %s11, 0
    %p179 = por %p177, %p178
    %p180 = scmp.ne.s32.totalorder %s169, %s172
    %p181 = scmp.eq.s32.totalorder %s16, 1
    %p182 = por %p180, %p181
    %p183 = scmp.ne.s32.totalorder %s172, %s173
    %p184 = scmp.eq.s32.totalorder %s16, 0
    %p185 = por %p183, %p184
    %p186 = scmp.ne.s32.totalorder %s172, %s173
    %p187 = scmp.eq.s32.totalorder %s17, 1
    %p188 = por %p186, %p187
    %p190 = scmp.ne.s32.totalorder %s173, %s189
    %p191 = scmp.eq.s32.totalorder %s17, 0
    %p192 = por %p190, %p191
    %p193 = scmp.le.s32.totalorder 1, %s11
    %p194 = scmp.lt.s32.totalorder %s11, 3
    %p195 = pnand %p193, %p194
    %p196 = pneg %p195
    // Predicated region
    $region9: #{transformer_decoder_forward.20} parent=5 // pred_check
      _
    $region10: #{transformer_decoder_forward.20} parent=5 // pred_check_branch
      %198 = sbr.rel (%p195) target = $region12
    $region11: #{transformer_decoder_forward.20} parent=5 // pred_region
      %s199 = ssub.s32 %s11, 1
    $region12: #{transformer_decoder_forward.20} parent=5 // pred_fallthru
      _
    %p200 = scmp.lt.s32.totalorder %s11, 2
    // Predicated region
    $region13: #{transformer_decoder_forward.20} parent=5 // pred_check
      %p201 = pneg %p200
    $region14: #{transformer_decoder_forward.20} parent=5 // pred_check_branch
      %203 = sbr.rel (%p201) target = $region16
    $region15: #{transformer_decoder_forward.20} parent=5 // pred_region
      // Predicated region
      $region17: #{transformer_decoder_forward.20} parent=15 // pred_check
        %p204 = pneg %p45
      $region18: #{transformer_decoder_forward.20} parent=15 // pred_check_branch
        %206 = sbr.rel (%p204) target = $region20
      $region19: #{transformer_decoder_forward.20} parent=15 // pred_region
        %p207 = scmp.lt.s32.totalorder %s18, 1
        %s208 = scalar_select %p207, %s18, 1
        %p209 = scmp.lt.s32.totalorder %s19, 0
        %s210 = scalar_select %p209, %s19, 0
        %s211 = sadd.s32 %s210, %s208
        %s212 = smul.addr %s211, 4
        %s213 = scalar_lea.vmem %s0, %s212
      $region20: #{transformer_decoder_forward.20} parent=15 // pred_fallthru
        _
      // Predicated region
      $region21: #{transformer_decoder_forward.20} parent=15 // pred_check
        %p214 = pneg %p71
      $region22: #{transformer_decoder_forward.20} parent=15 // pred_check_branch
        %216 = sbr.rel (%p214) target = $region24
      $region23: #{transformer_decoder_forward.20} parent=15 // pred_region
        %p217 = scmp.lt.s32.totalorder %s18, 1
        %s218 = scalar_select %p217, %s18, 1
        %s219 = smul.addr %s218, 4
        %s220 = scalar_lea.vmem %s1, %s219
      $region24: #{transformer_decoder_forward.20} parent=15 // pred_fallthru
        _
      // Predicated region
      $region25: #{transformer_decoder_forward.20} parent=15 // pred_check
        %p221 = pneg %p97
      $region26: #{transformer_decoder_forward.20} parent=15 // pred_check_branch
        %223 = sbr.rel (%p221) target = $region28
      $region27: #{transformer_decoder_forward.20} parent=15 // pred_region
        %p224 = scmp.lt.s32.totalorder %s18, 1
        %s225 = scalar_select %p224, %s18, 1
        %s226 = smul.addr %s225, 4
        %s227 = scalar_lea.vmem %s2, %s226
      $region28: #{transformer_decoder_forward.20} parent=15 // pred_fallthru
        _
      // Predicated region
      $region29: #{transformer_decoder_forward.20} parent=15 // pred_check
        %p228 = pneg %p125
      $region30: #{transformer_decoder_forward.20} parent=15 // pred_check_branch
        %230 = sbr.rel (%p228) target = $region32
      $region31: #{transformer_decoder_forward.20} parent=15 // pred_region
        %p231 = scmp.lt.s32.totalorder %s18, 1
        %s232 = scalar_select %p231, %s18, 1
        %p233 = scmp.lt.s32.totalorder %s19, 0
        %s234 = scalar_select %p233, %s19, 0
        %s235 = sadd.s32 %s234, %s232
        %s236 = smul.addr %s235, 8
        %s237 = scalar_lea.vmem %s3, %s236
      $region32: #{transformer_decoder_forward.20} parent=15 // pred_fallthru
        _
      // Predicated region
      $region33: #{transformer_decoder_forward.20} parent=15 // pred_check
        %p238 = pneg %p151
      $region34: #{transformer_decoder_forward.20} parent=15 // pred_check_branch
        %240 = sbr.rel (%p238) target = $region36
      $region35: #{transformer_decoder_forward.20} parent=15 // pred_region
        %p241 = scmp.lt.s32.totalorder %s18, 1
        %s242 = scalar_select %p241, %s18, 1
        %s243 = scalar_lea.vmem %s4, %s242
      $region36: #{transformer_decoder_forward.20} parent=15 // pred_fallthru
        _
    $region16: #{transformer_decoder_forward.20} parent=5 // pred_fallthru
      _
    %p244 = scmp.le.s32.totalorder 1, %s11
    %p245 = scmp.lt.s32.totalorder %s11, 3
    %p246 = pnand %p244, %p245
    %p247 = pneg %p246
    // Predicated region
    $region37: #{transformer_decoder_forward.20} parent=5 // pred_check
      _
    $region38: #{transformer_decoder_forward.20} parent=5 // pred_check_branch
      %249 = sbr.rel (%p246) target = $region40
    $region39: #{transformer_decoder_forward.20} parent=5 // pred_region
      %s250 = ssub.s32 %s11, 1
      %p251 = scmp.lt.s32.totalorder %s20, 1
      %s252 = scalar_select %p251, %s20, 1
      %p253 = scmp.lt.s32.totalorder %s21, 0
      %s254 = scalar_select %p253, %s21, 0
      %s255 = sadd.s32 %s254, %s252
      %s256 = smul.addr %s255, 4
      %s257 = scalar_lea.vmem %s0, %s256
      %p258 = pneg %p51
      %p259 = pneg %p48
      %p260 = scmp.lt.s32.totalorder %s20, 1
      %s261 = scalar_select %p260, %s20, 1
      %s262 = smul.addr %s261, 4
      %s263 = scalar_lea.vmem %s1, %s262
      %p264 = pneg %p77
      %p265 = pneg %p74
      %p266 = scmp.lt.s32.totalorder %s20, 1
      %s267 = scalar_select %p266, %s20, 1
      %s268 = smul.addr %s267, 4
      %s269 = scalar_lea.vmem %s2, %s268
      %p270 = pneg %p103
      %p271 = pneg %p100
      %p272 = scmp.lt.s32.totalorder %s20, 1
      %s273 = scalar_select %p272, %s20, 1
      %p274 = scmp.lt.s32.totalorder %s21, 0
      %s275 = scalar_select %p274, %s21, 0
      %s276 = sadd.s32 %s275, %s273
      %s277 = smul.addr %s276, 8
      %s278 = scalar_lea.vmem %s3, %s277
      %p279 = pneg %p131
      %p280 = pneg %p128
      %p281 = scmp.lt.s32.totalorder %s20, 1
      %s282 = scalar_select %p281, %s20, 1
      %s283 = scalar_lea.vmem %s4, %s282
      %p284 = pneg %p157
      %p285 = pneg %p154
      %p286 = pneg %p185
      %p287 = pneg %p182
      %p288 = scmp.lt.s32.totalorder %s20, 1
      %s289 = scalar_select %p288, %s20, 1
      %p290 = scmp.lt.s32.totalorder %s21, 0
      %s291 = scalar_select %p290, %s21, 0
      %s292 = sadd.s32 %s291, %s289
      %s293 = smul.addr %s292, 4
      %s294 = scalar_lea.vmem %s5, %s293
      %p295 = scmp.lt.s32.totalorder %s20, 1
      %s296 = scalar_select %p295, %s20, 1
      %p297 = scmp.lt.s32.totalorder %s21, 0
      %s298 = scalar_select %p297, %s21, 0
      %s299 = sadd.s32 %s298, %s296
      %s300 = smul.addr %s299, 4
      %s301 = scalar_lea.vmem %s0, %s300
      %p302 = scmp.lt.s32.totalorder %s20, 1
      %s303 = scalar_select %p302, %s20, 1
      %s304 = smul.addr %s303, 4
      %s305 = scalar_lea.vmem %s1, %s304
      %p306 = scmp.lt.s32.totalorder %s20, 1
      %s307 = scalar_select %p306, %s20, 1
      %s308 = smul.addr %s307, 4
      %s309 = scalar_lea.vmem %s2, %s308
      %p310 = scmp.lt.s32.totalorder %s20, 1
      %s311 = scalar_select %p310, %s20, 1
      %p312 = scmp.lt.s32.totalorder %s21, 0
      %s313 = scalar_select %p312, %s21, 0
      %s314 = sadd.s32 %s313, %s311
      %s315 = smul.addr %s314, 8
      %s316 = scalar_lea.vmem %s3, %s315
      %p317 = scmp.lt.s32.totalorder %s20, 1
      %s318 = scalar_select %p317, %s20, 1
      %s319 = scalar_lea.vmem %s4, %s318
      %p320 = scmp.lt.s32.totalorder %s20, 1
      %s321 = scalar_select %p320, %s20, 1
      %p322 = scmp.lt.s32.totalorder %s21, 0
      %s323 = scalar_select %p322, %s21, 0
      %s324 = sadd.s32 %s323, %s321
      %s325 = smul.addr %s324, 4
      %s326 = scalar_lea.vmem %s5, %s325
      %v328 = vld [vmem:[%s319] sm:$0x1]
      %vm329 = vcmp.gt.f32.partialorder %v328, 0.5
      %v330 = vld [vmem:[%s316] sm:$0xff]
      %vm331 = vcmp.gt.f32.partialorder %v330, 0.5
      %v332 = vsel %vm329, 1, 0
      %v333 = vlaneseq
      %v334 = vshrl.u32 %v333, 7
      %v335 = vsub.s32 0, %v334
      %v336 = vrot.slane %v332, %v335
      %vm337 = vcmp.eq.s32.totalorder %v336, 1
      %v338 = vsel %vm331, 1, 0
      %339 = vset.pattern.permute.xlu0 0
      %340 = vperm.xlu0 %339, %v338
      %v341 = vpop.permute.xlu0 %340
      %vm342 = vcmp.eq.s32.totalorder %v341, 1
      %vm343 = vmor %vm337, %vm342
      %v344 = vlaneseq
      %v345 = vshrl.u32 %v344, 7
      %s346 = smul.u32 %s21, 8
      %v347 = vstv %s346
      %v348 = vadd.s32 %v345, %v347
      %v349 = vlaneseq
      %v350 = vand.u32 %v349, 127
      %vm351 = vcmp.gt.s32.totalorder %v350, %v348
      %vm352 = vmor %vm343, %vm351
      %v353 = vld [vmem:[%s301] sm:$0xf]
      %v354 = vld [vmem:[%s305] sm:$0xf]
      %v355 = vld [vmem:[%s309] sm:$0xf]
      %vm356 = vcmask 261120
      %v358 = vsel %vm356, %v353, 0
      %v361 = vsel %vm356, %v354, 0
      %363 = vmatprep.subr.bf16.mxu0 0
      %364 = vmatpush1.bf16.xpose.msra.mxu0 0
      %365 = vmatprep.subr.bf16.mxu0 0
      %366 = vmatpush1.bf16.xpose.msra.mxu0 0
      %367 = vmatprep.subr.bf16.mxu0 0
      %368 = vmatpush1.bf16.xpose.msra.mxu0 0
      %369 = vmatprep.subr.bf16.mxu0 0
      %370 = vmatpush1.bf16.xpose.msra.mxu0 0
      %371 = vmatprep.subr.bf16.mxu0 0
      %372 = vmatpush1.bf16.xpose.msra.mxu0 0
      %373 = vmatprep.subr.bf16.mxu0 0
      %374 = vmatpush1.bf16.xpose.msra.mxu0 0
      %375 = vmatprep.subr.bf16.mxu0 0
      %376 = vmatpush1.bf16.xpose.msra.mxu0 0
      %377 = vmatprep.subr.bf16.mxu0 0
      %378 = vmatpush1.bf16.xpose.msra.mxu0 %v361
      %379 = vmatprep.subr.bf16.mxu0 0
      %380 = vmatpush2.bf16.xpose.msra.mxu0 0
      %381 = vmatprep.subr.bf16.mxu0 0
      %382 = vmatpush2.bf16.xpose.msra.mxu0 0
      %383 = vmatprep.subr.bf16.mxu0 0
      %384 = vmatpush2.bf16.xpose.msra.mxu0 0
      %385 = vmatprep.subr.bf16.mxu0 0
      %386 = vmatpush2.bf16.xpose.msra.mxu0 0
      %387 = vmatprep.subr.bf16.mxu0 0
      %388 = vmatpush2.bf16.xpose.msra.mxu0 0
      %389 = vmatprep.subr.bf16.mxu0 0
      %390 = vmatpush2.bf16.xpose.msra.mxu0 0
      %391 = vmatprep.subr.bf16.mxu0 0
      %392 = vmatpush2.bf16.xpose.msra.mxu0 0
      %393 = vmatprep.subr.bf16.mxu0 0
      %394 = vmatpush2.bf16.xpose.msra.mxu0 0
      %395 = vmatprep.mubr.bf16.mxu0 0
      %396 = vmatmul.mubr.bf16.gmra.mxu0 %v358
      %v397 = vpop.f32.mrf.mxu0
      %v398 = vadd.f32 0.0, %v397
      %v399 = vpop.f32.mrf.mxu0
      %v400 = vpop.f32.mrf.mxu0
      %v401 = vpop.f32.mrf.mxu0
      %402 = vdwg.mxu0
      %v403 = vmul.f32 %v398, 0.17677669
      %v404 = vsel %vm352, -1e+09, %v403
      %vm405 = vcmask 64512
      %v406 = vsel %vm405, %v404, -inf
      %407 = vmax.xlane.f32.xlu0 %v406
      %v408 = vpop.xlane.xlu0 %407
      %v409 = vsub.f32 %v404, %v408
      %v410 = vmul.f32 %v409, 1.442695
      %v411 = vpow.pop %v410
      %v412 = vsel %vm405, %v411, 0.0
      %413 = vadd.xlane.f32.xlu0 %v412
      %v414 = vpop.xlane.xlu0 %413
      %v415 = vrcp.pop %v414
      %v416 = vmul.f32 %v411, %v415
      %v417 = vpack.c.bf16 %v416, %v416
      %v419 = vsel %vm405, %v417, 0
      %vm421 = vcmask 1043456
      %v423 = vsel %vm421, %v355, 0
      %425 = vmatprep.subr.bf16.mxu0 0
      %426 = vmatpush1.bf16.msra.mxu0 0
      %427 = vmatprep.subr.bf16.mxu0 0
      %428 = vmatpush1.bf16.msra.mxu0 0
      %429 = vmatprep.subr.bf16.mxu0 0
      %430 = vmatpush1.bf16.msra.mxu0 0
      %431 = vmatprep.subr.bf16.mxu0 0
      %432 = vmatpush1.bf16.msra.mxu0 0
      %433 = vmatprep.subr.bf16.mxu0 0
      %434 = vmatpush1.bf16.msra.mxu0 0
      %435 = vmatprep.subr.bf16.mxu0 0
      %436 = vmatpush1.bf16.msra.mxu0 0
      %437 = vmatprep.subr.bf16.mxu0 0
      %438 = vmatpush1.bf16.msra.mxu0 0
      %439 = vmatprep.subr.bf16.mxu0 0
      %440 = vmatpush1.bf16.msra.mxu0 %v423
      %441 = vmatprep.subr.bf16.mxu0 0
      %442 = vmatpush2.bf16.msra.mxu0 0
      %443 = vmatprep.subr.bf16.mxu0 0
      %444 = vmatpush2.bf16.msra.mxu0 0
      %445 = vmatprep.subr.bf16.mxu0 0
      %446 = vmatpush2.bf16.msra.mxu0 0
      %447 = vmatprep.subr.bf16.mxu0 0
      %448 = vmatpush2.bf16.msra.mxu0 0
      %449 = vmatprep.subr.bf16.mxu0 0
      %450 = vmatpush2.bf16.msra.mxu0 0
      %451 = vmatprep.subr.bf16.mxu0 0
      %452 = vmatpush2.bf16.msra.mxu0 0
      %453 = vmatprep.subr.bf16.mxu0 0
      %454 = vmatpush2.bf16.msra.mxu0 0
      %455 = vmatprep.subr.bf16.mxu0 0
      %456 = vmatpush2.bf16.msra.mxu0 0
      %457 = vmatprep.mubr.bf16.mxu0 0
      %458 = vmatmul.mubr.bf16.gmra.mxu0 %v419
      %v459 = vpop.f32.mrf.mxu0
      %v460 = vadd.f32 0.0, %v459
      %v461 = vpop.f32.mrf.mxu0
      %v462 = vpop.f32.mrf.mxu0
      %v463 = vpop.f32.mrf.mxu0
      %464 = vdwg.mxu0
      %v466 = vunpack.c.l.b16 %v353
      %v467 = vpack.c.b16 %v466, %v466
      %468 = vrot.lane.b32.xlu0 %v467, 96
      %v469 = vpop.permute.xlu0 %468
      %v471 = vunpack.c.l.b16 %v354
      %v472 = vpack.c.b16 %v471, %v471
      %473 = vrot.lane.b32.xlu0 %v472, 96
      %v474 = vpop.permute.xlu0 %473
      %v476 = vsel %vm356, %v469, 0
      %v479 = vsel %vm356, %v474, 0
      %481 = vmatprep.subr.bf16.mxu0 0
      %482 = vmatpush1.bf16.xpose.msra.mxu0 0
      %483 = vmatprep.subr.bf16.mxu0 0
      %484 = vmatpush1.bf16.xpose.msra.mxu0 0
      %485 = vmatprep.subr.bf16.mxu0 0
      %486 = vmatpush1.bf16.xpose.msra.mxu0 0
      %487 = vmatprep.subr.bf16.mxu0 0
      %488 = vmatpush1.bf16.xpose.msra.mxu0 0
      %489 = vmatprep.subr.bf16.mxu0 0
      %490 = vmatpush1.bf16.xpose.msra.mxu0 0
      %491 = vmatprep.subr.bf16.mxu0 0
      %492 = vmatpush1.bf16.xpose.msra.mxu0 0
      %493 = vmatprep.subr.bf16.mxu0 0
      %494 = vmatpush1.bf16.xpose.msra.mxu0 0
      %495 = vmatprep.subr.bf16.mxu0 0
      %496 = vmatpush1.bf16.xpose.msra.mxu0 %v479
      %497 = vmatprep.subr.bf16.mxu0 0
      %498 = vmatpush2.bf16.xpose.msra.mxu0 0
      %499 = vmatprep.subr.bf16.mxu0 0
      %500 = vmatpush2.bf16.xpose.msra.mxu0 0
      %501 = vmatprep.subr.bf16.mxu0 0
      %502 = vmatpush2.bf16.xpose.msra.mxu0 0
      %503 = vmatprep.subr.bf16.mxu0 0
      %504 = vmatpush2.bf16.xpose.msra.mxu0 0
      %505 = vmatprep.subr.bf16.mxu0 0
      %506 = vmatpush2.bf16.xpose.msra.mxu0 0
      %507 = vmatprep.subr.bf16.mxu0 0
      %508 = vmatpush2.bf16.xpose.msra.mxu0 0
      %509 = vmatprep.subr.bf16.mxu0 0
      %510 = vmatpush2.bf16.xpose.msra.mxu0 0
      %511 = vmatprep.subr.bf16.mxu0 0
      %512 = vmatpush2.bf16.xpose.msra.mxu0 0
      %513 = vmatprep.mubr.bf16.mxu0 0
      %514 = vmatmul.mubr.bf16.gmra.mxu0 %v476
      %v515 = vpop.f32.mrf.mxu0
      %v516 = vadd.f32 0.0, %v515
      %v517 = vpop.f32.mrf.mxu0
      %v518 = vpop.f32.mrf.mxu0
      %v519 = vpop.f32.mrf.mxu0
      %520 = vdwg.mxu0
      %v521 = vmul.f32 %v516, 0.17677669
      %v522 = vsel %vm352, -1e+09, %v521
      %v523 = vsel %vm405, %v522, -inf
      %524 = vmax.xlane.f32.xlu0 %v523
      %v525 = vpop.xlane.xlu0 %524
      %v526 = vsub.f32 %v522, %v525
      %v527 = vmul.f32 %v526, 1.442695
      %v528 = vpow.pop %v527
      %v529 = vsel %vm405, %v528, 0.0
      %530 = vadd.xlane.f32.xlu0 %v529
      %v531 = vpop.xlane.xlu0 %530
      %v532 = vrcp.pop %v531
      %v533 = vmul.f32 %v528, %v532
      %v534 = vpack.c.bf16 %v533, %v533
      %v536 = vunpack.c.l.b16 %v355
      %v537 = vpack.c.b16 %v536, %v536
      %538 = vrot.lane.b32.xlu0 %v537, 96
      %v539 = vpop.permute.xlu0 %538
      %v541 = vsel %vm405, %v534, 0
      %v544 = vsel %vm421, %v539, 0
      %546 = vmatprep.subr.bf16.mxu0 0
      %547 = vmatpush1.bf16.msra.mxu0 0
      %548 = vmatprep.subr.bf16.mxu0 0
      %549 = vmatpush1.bf16.msra.mxu0 0
      %550 = vmatprep.subr.bf16.mxu0 0
      %551 = vmatpush1.bf16.msra.mxu0 0
      %552 = vmatprep.subr.bf16.mxu0 0
      %553 = vmatpush1.bf16.msra.mxu0 0
      %554 = vmatprep.subr.bf16.mxu0 0
      %555 = vmatpush1.bf16.msra.mxu0 0
      %556 = vmatprep.subr.bf16.mxu0 0
      %557 = vmatpush1.bf16.msra.mxu0 0
      %558 = vmatprep.subr.bf16.mxu0 0
      %559 = vmatpush1.bf16.msra.mxu0 0
      %560 = vmatprep.subr.bf16.mxu0 0
      %561 = vmatpush1.bf16.msra.mxu0 %v544
      %562 = vmatprep.subr.bf16.mxu0 0
      %563 = vmatpush2.bf16.msra.mxu0 0
      %564 = vmatprep.subr.bf16.mxu0 0
      %565 = vmatpush2.bf16.msra.mxu0 0
      %566 = vmatprep.subr.bf16.mxu0 0
      %567 = vmatpush2.bf16.msra.mxu0 0
      %568 = vmatprep.subr.bf16.mxu0 0
      %569 = vmatpush2.bf16.msra.mxu0 0
      %570 = vmatprep.subr.bf16.mxu0 0
      %571 = vmatpush2.bf16.msra.mxu0 0
      %572 = vmatprep.subr.bf16.mxu0 0
      %573 = vmatpush2.bf16.msra.mxu0 0
      %574 = vmatprep.subr.bf16.mxu0 0
      %575 = vmatpush2.bf16.msra.mxu0 0
      %576 = vmatprep.subr.bf16.mxu0 0
      %577 = vmatpush2.bf16.msra.mxu0 0
      %578 = vmatprep.mubr.bf16.mxu0 0
      %579 = vmatmul.mubr.bf16.gmra.mxu0 %v541
      %v580 = vpop.f32.mrf.mxu0
      %v581 = vadd.f32 0.0, %v580
      %v582 = vpop.f32.mrf.mxu0
      %v583 = vpop.f32.mrf.mxu0
      %v584 = vpop.f32.mrf.mxu0
      %585 = vdwg.mxu0
      %586 = vrot.lane.b32.xlu0 %v467, 64
      %v587 = vpop.permute.xlu0 %586
      %588 = vrot.lane.b32.xlu0 %v472, 64
      %v589 = vpop.permute.xlu0 %588
      %v591 = vsel %vm356, %v587, 0
      %v594 = vsel %vm356, %v589, 0
      %596 = vmatprep.subr.bf16.mxu0 0
      %597 = vmatpush1.bf16.xpose.msra.mxu0 0
      %598 = vmatprep.subr.bf16.mxu0 0
      %599 = vmatpush1.bf16.xpose.msra.mxu0 0
      %600 = vmatprep.subr.bf16.mxu0 0
      %601 = vmatpush1.bf16.xpose.msra.mxu0 0
      %602 = vmatprep.subr.bf16.mxu0 0
      %603 = vmatpush1.bf16.xpose.msra.mxu0 0
      %604 = vmatprep.subr.bf16.mxu0 0
      %605 = vmatpush1.bf16.xpose.msra.mxu0 0
      %606 = vmatprep.subr.bf16.mxu0 0
      %607 = vmatpush1.bf16.xpose.msra.mxu0 0
      %608 = vmatprep.subr.bf16.mxu0 0
      %609 = vmatpush1.bf16.xpose.msra.mxu0 0
      %610 = vmatprep.subr.bf16.mxu0 0
      %611 = vmatpush1.bf16.xpose.msra.mxu0 %v594
      %612 = vmatprep.subr.bf16.mxu0 0
      %613 = vmatpush2.bf16.xpose.msra.mxu0 0
      %614 = vmatprep.subr.bf16.mxu0 0
      %615 = vmatpush2.bf16.xpose.msra.mxu0 0
      %616 = vmatprep.subr.bf16.mxu0 0
      %617 = vmatpush2.bf16.xpose.msra.mxu0 0
      %618 = vmatprep.subr.bf16.mxu0 0
      %619 = vmatpush2.bf16.xpose.msra.mxu0 0
      %620 = vmatprep.subr.bf16.mxu0 0
      %621 = vmatpush2.bf16.xpose.msra.mxu0 0
      %622 = vmatprep.subr.bf16.mxu0 0
      %623 = vmatpush2.bf16.xpose.msra.mxu0 0
      %624 = vmatprep.subr.bf16.mxu0 0
      %625 = vmatpush2.bf16.xpose.msra.mxu0 0
      %626 = vmatprep.subr.bf16.mxu0 0
      %627 = vmatpush2.bf16.xpose.msra.mxu0 0
      %628 = vmatprep.mubr.bf16.mxu0 0
      %629 = vmatmul.mubr.bf16.gmra.mxu0 %v591
      %v630 = vpop.f32.mrf.mxu0
      %v631 = vadd.f32 0.0, %v630
      %v632 = vpop.f32.mrf.mxu0
      %v633 = vpop.f32.mrf.mxu0
      %v634 = vpop.f32.mrf.mxu0
      %635 = vdwg.mxu0
      %v636 = vmul.f32 %v631, 0.17677669
      %v637 = vsel %vm352, -1e+09, %v636
      %v638 = vsel %vm405, %v637, -inf
      %639 = vmax.xlane.f32.xlu0 %v638
      %v640 = vpop.xlane.xlu0 %639
      %v641 = vsub.f32 %v637, %v640
      %v642 = vmul.f32 %v641, 1.442695
      %v643 = vpow.pop %v642
      %v644 = vsel %vm405, %v643, 0.0
      %645 = vadd.xlane.f32.xlu0 %v644
      %v646 = vpop.xlane.xlu0 %645
      %v647 = vrcp.pop %v646
      %v648 = vmul.f32 %v643, %v647
      %v649 = vpack.c.bf16 %v648, %v648
      %650 = vrot.lane.b32.xlu0 %v537, 64
      %v651 = vpop.permute.xlu0 %650
      %v653 = vsel %vm405, %v649, 0
      %v656 = vsel %vm421, %v651, 0
      %658 = vmatprep.subr.bf16.mxu0 0
      %659 = vmatpush1.bf16.msra.mxu0 0
      %660 = vmatprep.subr.bf16.mxu0 0
      %661 = vmatpush1.bf16.msra.mxu0 0
      %662 = vmatprep.subr.bf16.mxu0 0
      %663 = vmatpush1.bf16.msra.mxu0 0
      %664 = vmatprep.subr.bf16.mxu0 0
      %665 = vmatpush1.bf16.msra.mxu0 0
      %666 = vmatprep.subr.bf16.mxu0 0
      %667 = vmatpush1.bf16.msra.mxu0 0
      %668 = vmatprep.subr.bf16.mxu0 0
      %669 = vmatpush1.bf16.msra.mxu0 0
      %670 = vmatprep.subr.bf16.mxu0 0
      %671 = vmatpush1.bf16.msra.mxu0 0
      %672 = vmatprep.subr.bf16.mxu0 0
      %673 = vmatpush1.bf16.msra.mxu0 %v656
      %674 = vmatprep.subr.bf16.mxu0 0
      %675 = vmatpush2.bf16.msra.mxu0 0
      %676 = vmatprep.subr.bf16.mxu0 0
      %677 = vmatpush2.bf16.msra.mxu0 0
      %678 = vmatprep.subr.bf16.mxu0 0
      %679 = vmatpush2.bf16.msra.mxu0 0
      %680 = vmatprep.subr.bf16.mxu0 0
      %681 = vmatpush2.bf16.msra.mxu0 0
      %682 = vmatprep.subr.bf16.mxu0 0
      %683 = vmatpush2.bf16.msra.mxu0 0
      %684 = vmatprep.subr.bf16.mxu0 0
      %685 = vmatpush2.bf16.msra.mxu0 0
      %686 = vmatprep.subr.bf16.mxu0 0
      %687 = vmatpush2.bf16.msra.mxu0 0
      %688 = vmatprep.subr.bf16.mxu0 0
      %689 = vmatpush2.bf16.msra.mxu0 0
      %690 = vmatprep.mubr.bf16.mxu0 0
      %691 = vmatmul.mubr.bf16.gmra.mxu0 %v653
      %v692 = vpop.f32.mrf.mxu0
      %v693 = vadd.f32 0.0, %v692
      %v694 = vpop.f32.mrf.mxu0
      %v695 = vpop.f32.mrf.mxu0
      %v696 = vpop.f32.mrf.mxu0
      %697 = vdwg.mxu0
      %698 = vrot.lane.b32.xlu0 %v467, 32
      %v699 = vpop.permute.xlu0 %698
      %700 = vrot.lane.b32.xlu0 %v472, 32
      %v701 = vpop.permute.xlu0 %700
      %v703 = vsel %vm356, %v699, 0
      %v706 = vsel %vm356, %v701, 0
      %708 = vmatprep.subr.bf16.mxu0 0
      %709 = vmatpush1.bf16.xpose.msra.mxu0 0
      %710 = vmatprep.subr.bf16.mxu0 0
      %711 = vmatpush1.bf16.xpose.msra.mxu0 0
      %712 = vmatprep.subr.bf16.mxu0 0
      %713 = vmatpush1.bf16.xpose.msra.mxu0 0
      %714 = vmatprep.subr.bf16.mxu0 0
      %715 = vmatpush1.bf16.xpose.msra.mxu0 0
      %716 = vmatprep.subr.bf16.mxu0 0
      %717 = vmatpush1.bf16.xpose.msra.mxu0 0
      %718 = vmatprep.subr.bf16.mxu0 0
      %719 = vmatpush1.bf16.xpose.msra.mxu0 0
      %720 = vmatprep.subr.bf16.mxu0 0
      %721 = vmatpush1.bf16.xpose.msra.mxu0 0
      %722 = vmatprep.subr.bf16.mxu0 0
      %723 = vmatpush1.bf16.xpose.msra.mxu0 %v706
      %724 = vmatprep.subr.bf16.mxu0 0
      %725 = vmatpush2.bf16.xpose.msra.mxu0 0
      %726 = vmatprep.subr.bf16.mxu0 0
      %727 = vmatpush2.bf16.xpose.msra.mxu0 0
      %728 = vmatprep.subr.bf16.mxu0 0
      %729 = vmatpush2.bf16.xpose.msra.mxu0 0
      %730 = vmatprep.subr.bf16.mxu0 0
      %731 = vmatpush2.bf16.xpose.msra.mxu0 0
      %732 = vmatprep.subr.bf16.mxu0 0
      %733 = vmatpush2.bf16.xpose.msra.mxu0 0
      %734 = vmatprep.subr.bf16.mxu0 0
      %735 = vmatpush2.bf16.xpose.msra.mxu0 0
      %736 = vmatprep.subr.bf16.mxu0 0
      %737 = vmatpush2.bf16.xpose.msra.mxu0 0
      %738 = vmatprep.subr.bf16.mxu0 0
      %739 = vmatpush2.bf16.xpose.msra.mxu0 0
      %740 = vmatprep.mubr.bf16.mxu0 0
      %741 = vmatmul.mubr.bf16.gmra.mxu0 %v703
      %v742 = vpop.f32.mrf.mxu0
      %v743 = vadd.f32 0.0, %v742
      %v744 = vpop.f32.mrf.mxu0
      %v745 = vpop.f32.mrf.mxu0
      %v746 = vpop.f32.mrf.mxu0
      %747 = vdwg.mxu0
      %v748 = vmul.f32 %v743, 0.17677669
      %v749 = vsel %vm352, -1e+09, %v748
      %v750 = vsel %vm405, %v749, -inf
      %751 = vmax.xlane.f32.xlu0 %v750
      %v752 = vpop.xlane.xlu0 %751
      %v753 = vsub.f32 %v749, %v752
      %v754 = vmul.f32 %v753, 1.442695
      %v755 = vpow.pop %v754
      %v756 = vsel %vm405, %v755, 0.0
      %757 = vadd.xlane.f32.xlu0 %v756
      %v758 = vpop.xlane.xlu0 %757
      %v759 = vrcp.pop %v758
      %v760 = vmul.f32 %v755, %v759
      %v761 = vpack.c.bf16 %v760, %v760
      %762 = vrot.lane.b32.xlu0 %v537, 32
      %v763 = vpop.permute.xlu0 %762
      %v765 = vsel %vm405, %v761, 0
      %v768 = vsel %vm421, %v763, 0
      %770 = vmatprep.subr.bf16.mxu0 0
      %771 = vmatpush1.bf16.msra.mxu0 0
      %772 = vmatprep.subr.bf16.mxu0 0
      %773 = vmatpush1.bf16.msra.mxu0 0
      %774 = vmatprep.subr.bf16.mxu0 0
      %775 = vmatpush1.bf16.msra.mxu0 0
      %776 = vmatprep.subr.bf16.mxu0 0
      %777 = vmatpush1.bf16.msra.mxu0 0
      %778 = vmatprep.subr.bf16.mxu0 0
      %779 = vmatpush1.bf16.msra.mxu0 0
      %780 = vmatprep.subr.bf16.mxu0 0
      %781 = vmatpush1.bf16.msra.mxu0 0
      %782 = vmatprep.subr.bf16.mxu0 0
      %783 = vmatpush1.bf16.msra.mxu0 0
      %784 = vmatprep.subr.bf16.mxu0 0
      %785 = vmatpush1.bf16.msra.mxu0 %v768
      %786 = vmatprep.subr.bf16.mxu0 0
      %787 = vmatpush2.bf16.msra.mxu0 0
      %788 = vmatprep.subr.bf16.mxu0 0
      %789 = vmatpush2.bf16.msra.mxu0 0
      %790 = vmatprep.subr.bf16.mxu0 0
      %791 = vmatpush2.bf16.msra.mxu0 0
      %792 = vmatprep.subr.bf16.mxu0 0
      %793 = vmatpush2.bf16.msra.mxu0 0
      %794 = vmatprep.subr.bf16.mxu0 0
      %795 = vmatpush2.bf16.msra.mxu0 0
      %796 = vmatprep.subr.bf16.mxu0 0
      %797 = vmatpush2.bf16.msra.mxu0 0
      %798 = vmatprep.subr.bf16.mxu0 0
      %799 = vmatpush2.bf16.msra.mxu0 0
      %800 = vmatprep.subr.bf16.mxu0 0
      %801 = vmatpush2.bf16.msra.mxu0 0
      %802 = vmatprep.mubr.bf16.mxu0 0
      %803 = vmatmul.mubr.bf16.gmra.mxu0 %v765
      %v804 = vpop.f32.mrf.mxu0
      %v805 = vadd.f32 0.0, %v804
      %v806 = vpop.f32.mrf.mxu0
      %v807 = vpop.f32.mrf.mxu0
      %v808 = vpop.f32.mrf.mxu0
      %809 = vdwg.mxu0
      %811 = vrot.lane.b32.xlu0 %v581, 32
      %v812 = vpop.permute.xlu0 %811
      %815 = vrot.lane.b32.xlu0 %v693, 64
      %v816 = vpop.permute.xlu0 %815
      %819 = vrot.lane.b32.xlu0 %v805, 96
      %v820 = vpop.permute.xlu0 %819
      %v822 = vsel %vm356, %v460, %v812
      %vm823 = vcmask 523264
      %v824 = vsel %vm823, %v822, %v816
      %vm825 = vcmask 785408
      %v826 = vsel %vm825, %v824, %v820
      %v827 = vpack.c.bf16 %v826, %v826
      %828 = vst [vmem:[%s326] sm:$0xf] %v827
      %p829 = scmp.lt.s32.totalorder %s20, 1
      %s830 = scalar_select %p829, %s20, 1
      %p831 = scmp.lt.s32.totalorder %s21, 0
      %s832 = scalar_select %p831, %s21, 0
      %s833 = sadd.s32 %s832, %s830
      %s834 = smul.addr %s833, 4
      %s835 = scalar_lea.vmem %s5, %s834
      // Predicated region
      $region41: #{transformer_decoder_forward.20} parent=39 // pred_check
        %p836 = pneg %p182
      $region42: #{transformer_decoder_forward.20} parent=39 // pred_check_branch
        %838 = sbr.rel (%p836) target = $region44
      $region43: #{transformer_decoder_forward.20} parent=39 // pred_region
        _
      $region44: #{transformer_decoder_forward.20} parent=39 // pred_fallthru
        _
    $region40: #{transformer_decoder_forward.20} parent=5 // pred_fallthru
      _
    %p839 = scmp.le.s32.totalorder 2, %s11
    // Predicated region
    $region45: #{transformer_decoder_forward.20} parent=5 // pred_check
      %p840 = pneg %p839
    $region46: #{transformer_decoder_forward.20} parent=5 // pred_check_branch
      %842 = sbr.rel (%p840) target = $region48
    $region47: #{transformer_decoder_forward.20} parent=5 // pred_region
      %s843 = ssub.s32 %s11, 2
      // Predicated region
      $region49: #{transformer_decoder_forward.20} parent=47 // pred_check
        %p844 = pneg %p188
      $region50: #{transformer_decoder_forward.20} parent=47 // pred_check_branch
        %846 = sbr.rel (%p844) target = $region52
      $region51: #{transformer_decoder_forward.20} parent=47 // pred_region
        %p847 = scmp.lt.s32.totalorder %s22, 1
        %s848 = scalar_select %p847, %s22, 1
        %p849 = scmp.lt.s32.totalorder %s23, 0
        %s850 = scalar_select %p849, %s23, 0
        %s851 = sadd.s32 %s850, %s848
        %s852 = smul.addr %s851, 4
        %s853 = scalar_lea.vmem %s5, %s852
      $region52: #{transformer_decoder_forward.20} parent=47 // pred_fallthru
        _
    $region48: #{transformer_decoder_forward.20} parent=5 // pred_fallthru
      _
  $region6: #{transformer_decoder_forward.20} parent=0 // loop_footer
    %s15 = sadd.s32 1, %s11
  $region7: #{transformer_decoder_forward.20} parent=0 // loop_footer_branch
    %10 = sbr.rel target = $region3
  $region8: #{transformer_decoder_forward.20} parent=0 // loop_exit
    _

// kernel: transformer_decoder_forward.19
$region0: #{transformer_decoder_forward.19}
  #allocation0 [shape = 'u32[]', space=smem, size = 0x4, offset = 0x4, fixed_abs, tag = 'smem constant byte address 0x4 - core index']
  #allocation1 [shape = 'u32[144,128]{1,0:T(1,128)}', space=vmem, size = 0x12000, scoped, tag = 'internal scratch']
  #allocation2 [shape = 'f32[16,384]{1,0:T(8,128)}', space=vmem, size = 0x6000, scoped, tag = 'scratch operand']
  %s0 = inlined_call_operand.vmem [shape: bf16[16,128], index: 0, kind: input, shape index: {}]
  %s1 = inlined_call_operand.vmem [shape: bf16[128,384], index: 1, kind: input, shape index: {}]
  %s2 = inlined_call_operand.vmem [shape: f32[1,384], index: 2, kind: input, shape index: {}]
  %s3 = inlined_call_operand.vmem [shape: bf16[16,384], index: 3, kind: output, shape index: {}]
  %s4 = sld [smem:[#allocation0]]
  $region30: #{transformer_decoder_forward.19} parent=0
    _
  %s6 = ssub.s32 1, %s4
  %s7 = scalar_select 0, %s6, %s4
  // Predicated region
  $region2: #{transformer_decoder_forward.19} parent=0 // pred_check
    _
  $region3: #{transformer_decoder_forward.19} parent=0 // pred_check_branch
    %9 = sbr.rel (0) target = $region5
  $region4: #{transformer_decoder_forward.19} parent=0 // pred_region
    _
  $region5: #{transformer_decoder_forward.19} parent=0 // pred_fallthru
    _
  // Predicated region
  $region6: #{transformer_decoder_forward.19} parent=0 // pred_check
    _
  $region7: #{transformer_decoder_forward.19} parent=0 // pred_check_branch
    %11 = sbr.rel (0) target = $region9
  $region8: #{transformer_decoder_forward.19} parent=0 // pred_region
    _
  $region9: #{transformer_decoder_forward.19} parent=0 // pred_fallthru
    _
  // Predicated region
  $region10: #{transformer_decoder_forward.19} parent=0 // pred_check
    _
  $region11: #{transformer_decoder_forward.19} parent=0 // pred_check_branch
    %13 = sbr.rel (0) target = $region13
  $region12: #{transformer_decoder_forward.19} parent=0 // pred_region
    _
  $region13: #{transformer_decoder_forward.19} parent=0 // pred_fallthru
    _
  %p15 = scmp.eq.s32.totalorder 0, 0
  // Predicated region
  $region14: #{transformer_decoder_forward.19} parent=0 // pred_check
    %p16 = pneg %p15
  $region15: #{transformer_decoder_forward.19} parent=0 // pred_check_branch
    %18 = sbr.rel (%p16) target = $region17
  $region16: #{transformer_decoder_forward.19} parent=0 // pred_region
    %19 = vst [vmem:[#allocation2] sm:$0xff] 0.0
    %20 = vst [vmem:[#allocation2 + $0x8] sm:$0xff] 0.0
    %21 = vst [vmem:[#allocation2 + $0x10] sm:$0xff] 0.0
    %22 = vst [vmem:[#allocation2 + $0x18] sm:$0xff] 0.0
    %23 = vst [vmem:[#allocation2 + $0x20] sm:$0xff] 0.0
    %24 = vst [vmem:[#allocation2 + $0x28] sm:$0xff] 0.0
  $region17: #{transformer_decoder_forward.19} parent=0 // pred_fallthru
    _
  %v25 = vld [vmem:[#allocation2] sm:$0xff]
  %v26 = vld [vmem:[#allocation2 + $0x8] sm:$0xff]
  %v27 = vld [vmem:[#allocation2 + $0x10] sm:$0xff]
  %v28 = vld [vmem:[#allocation2 + $0x18] sm:$0xff]
  %v29 = vld [vmem:[#allocation2 + $0x20] sm:$0xff]
  %v30 = vld [vmem:[#allocation2 + $0x28] sm:$0xff]
  %v31 = vld [vmem:[%s0] sm:$0xf]
  %v32 = vld [vmem:[%s0 + $0x4] sm:$0xf]
  %v33 = vld [vmem:[%s1] sm:$0xff]
  %v34 = vld [vmem:[%s1 + $0x8] sm:$0xf]
  %v35 = vld [vmem:[%s1 + $0xc] sm:$0xff]
  %v36 = vld [vmem:[%s1 + $0x14] sm:$0xf]
  %v37 = vld [vmem:[%s1 + $0x18] sm:$0xff]
  %v38 = vld [vmem:[%s1 + $0x20] sm:$0xf]
  %v39 = vld [vmem:[%s1 + $0x24] sm:$0xff]
  %v40 = vld [vmem:[%s1 + $0x2c] sm:$0xf]
  %v41 = vld [vmem:[%s1 + $0x30] sm:$0xff]
  %v42 = vld [vmem:[%s1 + $0x38] sm:$0xf]
  %v43 = vld [vmem:[%s1 + $0x3c] sm:$0xff]
  %v44 = vld [vmem:[%s1 + $0x44] sm:$0xf]
  %v45 = vld [vmem:[%s1 + $0x48] sm:$0xff]
  %v46 = vld [vmem:[%s1 + $0x50] sm:$0xf]
  %v47 = vld [vmem:[%s1 + $0x54] sm:$0xff]
  %v48 = vld [vmem:[%s1 + $0x5c] sm:$0xf]
  %v49 = vld [vmem:[%s1 + $0x60] sm:$0xff]
  %v50 = vld [vmem:[%s1 + $0x68] sm:$0xf]
  %v51 = vld [vmem:[%s1 + $0x6c] sm:$0xff]
  %v52 = vld [vmem:[%s1 + $0x74] sm:$0xf]
  %v53 = vld [vmem:[%s1 + $0x78] sm:$0xff]
  %v54 = vld [vmem:[%s1 + $0x80] sm:$0xf]
  %v55 = vld [vmem:[%s1 + $0x84] sm:$0xff]
  %v56 = vld [vmem:[%s1 + $0x8c] sm:$0xf]
  %v57 = vld [vmem:[%s1 + $0x90] sm:$0xff]
  %v58 = vld [vmem:[%s1 + $0x98] sm:$0xf]
  %v59 = vld [vmem:[%s1 + $0x9c] sm:$0xff]
  %v60 = vld [vmem:[%s1 + $0xa4] sm:$0xf]
  %v61 = vld [vmem:[%s1 + $0xa8] sm:$0xff]
  %v62 = vld [vmem:[%s1 + $0xb0] sm:$0xf]
  %v63 = vld [vmem:[%s1 + $0xb4] sm:$0xff]
  %v64 = vld [vmem:[%s1 + $0xbc] sm:$0xf]
  %v67 = vunpack.c.l.b16 %v31
  %v68 = vunpack.c.l.b16 %v32
  %v69 = vpack.c.b16 %v68, %v67
  %v103 = vunpack.c.l.b16 %v33
  %v104 = vunpack.c.h.b16 %v33
  %v105 = vunpack.c.l.b16 %v34
  %v106 = vunpack.c.l.b16 %v35
  %v107 = vunpack.c.h.b16 %v35
  %v108 = vunpack.c.l.b16 %v36
  %v109 = vunpack.c.l.b16 %v37
  %v110 = vunpack.c.h.b16 %v37
  %v111 = vunpack.c.l.b16 %v38
  %v112 = vunpack.c.l.b16 %v39
  %v113 = vunpack.c.h.b16 %v39
  %v114 = vunpack.c.l.b16 %v40
  %v115 = vunpack.c.l.b16 %v41
  %v116 = vunpack.c.h.b16 %v41
  %v117 = vunpack.c.l.b16 %v42
  %v118 = vunpack.c.l.b16 %v43
  %v119 = vunpack.c.h.b16 %v43
  %v120 = vunpack.c.l.b16 %v44
  %v121 = vunpack.c.l.b16 %v45
  %v122 = vunpack.c.h.b16 %v45
  %v123 = vunpack.c.l.b16 %v46
  %v124 = vunpack.c.l.b16 %v47
  %v125 = vunpack.c.h.b16 %v47
  %v126 = vunpack.c.l.b16 %v48
  %v127 = vunpack.c.l.b16 %v49
  %v128 = vunpack.c.h.b16 %v49
  %v129 = vunpack.c.l.b16 %v50
  %v130 = vunpack.c.l.b16 %v51
  %v131 = vunpack.c.h.b16 %v51
  %v132 = vunpack.c.l.b16 %v52
  %v133 = vunpack.c.l.b16 %v53
  %v134 = vunpack.c.h.b16 %v53
  %v135 = vunpack.c.l.b16 %v54
  %v136 = vunpack.c.l.b16 %v55
  %v137 = vunpack.c.h.b16 %v55
  %v138 = vunpack.c.l.b16 %v56
  %v139 = vunpack.c.l.b16 %v57
  %v140 = vunpack.c.h.b16 %v57
  %v141 = vunpack.c.l.b16 %v58
  %v142 = vunpack.c.l.b16 %v59
  %v143 = vunpack.c.h.b16 %v59
  %v144 = vunpack.c.l.b16 %v60
  %v145 = vunpack.c.l.b16 %v61
  %v146 = vunpack.c.h.b16 %v61
  %v147 = vunpack.c.l.b16 %v62
  %v148 = vunpack.c.l.b16 %v63
  %v149 = vunpack.c.h.b16 %v63
  %v150 = vunpack.c.l.b16 %v64
  %v151 = vpack.c.b16 %v106, %v103
  %v152 = vpack.c.b16 %v107, %v104
  %v153 = vpack.c.b16 %v108, %v105
  %v154 = vpack.c.b16 %v112, %v109
  %v155 = vpack.c.b16 %v113, %v110
  %v156 = vpack.c.b16 %v114, %v111
  %v157 = vpack.c.b16 %v118, %v115
  %v158 = vpack.c.b16 %v119, %v116
  %v159 = vpack.c.b16 %v120, %v117
  %v160 = vpack.c.b16 %v124, %v121
  %v161 = vpack.c.b16 %v125, %v122
  %v162 = vpack.c.b16 %v126, %v123
  %v163 = vpack.c.b16 %v130, %v127
  %v164 = vpack.c.b16 %v131, %v128
  %v165 = vpack.c.b16 %v132, %v129
  %v166 = vpack.c.b16 %v136, %v133
  %v167 = vpack.c.b16 %v137, %v134
  %v168 = vpack.c.b16 %v138, %v135
  %v169 = vpack.c.b16 %v142, %v139
  %v170 = vpack.c.b16 %v143, %v140
  %v171 = vpack.c.b16 %v144, %v141
  %v172 = vpack.c.b16 %v148, %v145
  %v173 = vpack.c.b16 %v149, %v146
  %v174 = vpack.c.b16 %v150, %v147
  %199 = vmatprep.subr.bf16.mxu0 %v173
  %200 = vmatpush1.bf16.msra.mxu0 %v172
  %201 = vmatprep.subr.bf16.mxu0 %v170
  %202 = vmatpush1.bf16.msra.mxu0 %v169
  %203 = vmatprep.subr.bf16.mxu0 %v167
  %204 = vmatpush1.bf16.msra.mxu0 %v166
  %205 = vmatprep.subr.bf16.mxu0 %v164
  %206 = vmatpush1.bf16.msra.mxu0 %v163
  %207 = vmatprep.subr.bf16.mxu0 %v161
  %208 = vmatpush1.bf16.msra.mxu0 %v160
  %209 = vmatprep.subr.bf16.mxu0 %v158
  %210 = vmatpush1.bf16.msra.mxu0 %v157
  %211 = vmatprep.subr.bf16.mxu0 %v155
  %212 = vmatpush1.bf16.msra.mxu0 %v154
  %213 = vmatprep.subr.bf16.mxu0 %v152
  %214 = vmatpush1.bf16.msra.mxu0 %v151
  %215 = vmatprep.subr.bf16.mxu0 0
  %216 = vmatpush2.bf16.msra.mxu0 0
  %217 = vmatprep.subr.bf16.mxu0 0
  %218 = vmatpush2.bf16.msra.mxu0 0
  %219 = vmatprep.subr.bf16.mxu0 0
  %220 = vmatpush2.bf16.msra.mxu0 0
  %221 = vmatprep.subr.bf16.mxu0 0
  %222 = vmatpush2.bf16.msra.mxu0 0
  %223 = vmatprep.subr.bf16.mxu0 0
  %224 = vmatpush2.bf16.msra.mxu0 0
  %225 = vmatprep.subr.bf16.mxu0 0
  %226 = vmatpush2.bf16.msra.mxu0 0
  %227 = vmatprep.subr.bf16.mxu0 0
  %228 = vmatpush2.bf16.msra.mxu0 0
  %229 = vmatprep.subr.bf16.mxu0 0
  %230 = vmatpush2.bf16.msra.mxu0 0
  %231 = vmatprep.mubr.bf16.mxu0 0
  %232 = vmatmul.mubr.bf16.gmra.mxu0 %v69
  %v233 = vpop.f32.mrf.mxu0
  %v234 = vadd.f32 0.0, %v233
  %v235 = vpop.f32.mrf.mxu0
  %v236 = vadd.f32 0.0, %v235
  %v237 = vpop.f32.mrf.mxu0
  %v238 = vadd.f32 0.0, %v237
  %v239 = vpop.f32.mrf.mxu0
  %v240 = vadd.f32 0.0, %v239
  %241 = vdwg.mxu0
  %242 = vmatprep.subr.bf16.mxu0 0
  %243 = vmatpush1.bf16.msra.mxu0 %v174
  %244 = vmatprep.subr.bf16.mxu0 0
  %245 = vmatpush1.bf16.msra.mxu0 %v171
  %246 = vmatprep.subr.bf16.mxu0 0
  %247 = vmatpush1.bf16.msra.mxu0 %v168
  %248 = vmatprep.subr.bf16.mxu0 0
  %249 = vmatpush1.bf16.msra.mxu0 %v165
  %250 = vmatprep.subr.bf16.mxu0 0
  %251 = vmatpush1.bf16.msra.mxu0 %v162
  %252 = vmatprep.subr.bf16.mxu0 0
  %253 = vmatpush1.bf16.msra.mxu0 %v159
  %254 = vmatprep.subr.bf16.mxu0 0
  %255 = vmatpush1.bf16.msra.mxu0 %v156
  %256 = vmatprep.subr.bf16.mxu0 0
  %257 = vmatpush1.bf16.msra.mxu0 %v153
  %258 = vmatprep.subr.bf16.mxu0 0
  %259 = vmatpush2.bf16.msra.mxu0 0
  %260 = vmatprep.subr.bf16.mxu0 0
  %261 = vmatpush2.bf16.msra.mxu0 0
  %262 = vmatprep.subr.bf16.mxu0 0
  %263 = vmatpush2.bf16.msra.mxu0 0
  %264 = vmatprep.subr.bf16.mxu0 0
  %265 = vmatpush2.bf16.msra.mxu0 0
  %266 = vmatprep.subr.bf16.mxu0 0
  %267 = vmatpush2.bf16.msra.mxu0 0
  %268 = vmatprep.subr.bf16.mxu0 0
  %269 = vmatpush2.bf16.msra.mxu0 0
  %270 = vmatprep.subr.bf16.mxu0 0
  %271 = vmatpush2.bf16.msra.mxu0 0
  %272 = vmatprep.subr.bf16.mxu0 0
  %273 = vmatpush2.bf16.msra.mxu0 0
  %274 = vmatprep.mubr.bf16.mxu0 0
  %275 = vmatmul.mubr.bf16.gmra.mxu0 %v69
  %v276 = vpop.f32.mrf.mxu0
  %v277 = vadd.f32 0.0, %v276
  %v278 = vpop.f32.mrf.mxu0
  %v279 = vpop.f32.mrf.mxu0
  %v280 = vadd.f32 0.0, %v279
  %v281 = vpop.f32.mrf.mxu0
  %282 = vdwg.mxu0
  %v283 = vadd.f32 %v25, %v234
  %v284 = vadd.f32 %v26, %v236
  %v285 = vadd.f32 %v27, %v277
  %v286 = vadd.f32 %v28, %v238
  %v287 = vadd.f32 %v29, %v240
  %v288 = vadd.f32 %v30, %v280
  %289 = vst [vmem:[#allocation2] sm:$0xff] %v283
  %290 = vst [vmem:[#allocation2 + $0x8] sm:$0xff] %v284
  %291 = vst [vmem:[#allocation2 + $0x10] sm:$0xff] %v285
  %292 = vst [vmem:[#allocation2 + $0x18] sm:$0xff] %v286
  %293 = vst [vmem:[#allocation2 + $0x20] sm:$0xff] %v287
  %294 = vst [vmem:[#allocation2 + $0x28] sm:$0xff] %v288
  // Predicated region
  $region18: #{transformer_decoder_forward.19} parent=0 // pred_check
    %p295 = pneg %p15
  $region19: #{transformer_decoder_forward.19} parent=0 // pred_check_branch
    %297 = sbr.rel (%p295) target = $region21
  $region20: #{transformer_decoder_forward.19} parent=0 // pred_region
    %v298 = vld [vmem:[#allocation2] sm:$0xff]
    %v299 = vld [vmem:[#allocation2 + $0x8] sm:$0xff]
    %v300 = vld [vmem:[#allocation2 + $0x10] sm:$0xff]
    %v301 = vld [vmem:[#allocation2 + $0x18] sm:$0xff]
    %v302 = vld [vmem:[#allocation2 + $0x20] sm:$0xff]
    %v303 = vld [vmem:[#allocation2 + $0x28] sm:$0xff]
    %v304 = vld [vmem:[%s2] sm:$0x7]
    %v306 = vlaneseq
    %v307 = vshrl.u32 %v306, 7
    %v308 = vsub.s32 0, %v307
    %v309 = vrot.slane %v304, %v308
    %v310 = vlaneseq
    %v311 = vshrl.u32 %v310, 7
    %v312 = vsub.s32 1, %v311
    %v313 = vrot.slane %v304, %v312
    %v314 = vlaneseq
    %v315 = vshrl.u32 %v314, 7
    %v316 = vsub.s32 2, %v315
    %v317 = vrot.slane %v304, %v316
    %v321 = vadd.f32 %v298, %v309
    %v322 = vadd.f32 %v299, %v313
    %v323 = vadd.f32 %v300, %v317
    %v324 = vadd.f32 %v301, %v309
    %v325 = vadd.f32 %v302, %v313
    %v326 = vadd.f32 %v303, %v317
    %v327 = vpack.c.bf16 %v324, %v321
    %v328 = vpack.c.bf16 %v325, %v322
    %v329 = vpack.c.bf16 %v326, %v323
    %v333 = vunpack.c.l.b16 %v327
    %v334 = vunpack.c.l.b16 %v328
    %v335 = vunpack.c.l.b16 %v329
    %v336 = vunpack.c.h.b16 %v327
    %v337 = vunpack.c.h.b16 %v328
    %v338 = vunpack.c.h.b16 %v329
    %v339 = vpack.c.b16 %v334, %v333
    %v340 = vpack.c.b16 %v335, %v335
    %v341 = vpack.c.b16 %v337, %v336
    %v342 = vpack.c.b16 %v338, %v338
    %347 = vst [vmem:[%s3] sm:$0xff] %v339
    %348 = vst [vmem:[%s3 + $0x8] sm:$0xf] %v340
    %349 = vst [vmem:[%s3 + $0xc] sm:$0xff] %v341
    %350 = vst [vmem:[%s3 + $0x14] sm:$0xf] %v342
  $region21: #{transformer_decoder_forward.19} parent=0 // pred_fallthru
    _
  // Predicated region
  $region22: #{transformer_decoder_forward.19} parent=0 // pred_check
    _
  $region23: #{transformer_decoder_forward.19} parent=0 // pred_check_branch
    %352 = sbr.rel (0) target = $region25
  $region24: #{transformer_decoder_forward.19} parent=0 // pred_region
    _
  $region25: #{transformer_decoder_forward.19} parent=0 // pred_fallthru
    _
  // Predicated region
  $region26: #{transformer_decoder_forward.19} parent=0 // pred_check
    _
  $region27: #{transformer_decoder_forward.19} parent=0 // pred_check_branch
    %354 = sbr.rel (0) target = $region29
  $region28: #{transformer_decoder_forward.19} parent=0 // pred_region
    _
  $region29: #{transformer_decoder_forward.19} parent=0 // pred_fallthru
    _

// kernel: transformer_decoder_forward.23
$region0: #{transformer_decoder_forward.23}
  #allocation0 [shape = 'u32[]', space=smem, size = 0x4, offset = 0x4, fixed_abs, tag = 'smem constant byte address 0x4 - core index']
  #allocation1 [shape = 'u32[144,128]{1,0:T(1,128)}', space=vmem, size = 0x12000, scoped, tag = 'internal scratch']
  #allocation2 [shape = 'f32[16,256]{1,0:T(8,128)}', space=vmem, size = 0x4000, scoped, tag = 'scratch operand']
  %s0 = inlined_call_operand.vmem [shape: bf16[16,128], index: 0, kind: input, shape index: {}]
  %s1 = inlined_call_operand.vmem [shape: bf16[128,256], index: 1, kind: input, shape index: {}]
  %s2 = inlined_call_operand.vmem [shape: f32[1,256], index: 2, kind: input, shape index: {}]
  %s3 = inlined_call_operand.vmem [shape: bf16[16,256], index: 3, kind: output, shape index: {}]
  %s4 = sld [smem:[#allocation0]]
  $region30: #{transformer_decoder_forward.23} parent=0
    _
  %s6 = ssub.s32 1, %s4
  %s7 = scalar_select 0, %s6, %s4
  // Predicated region
  $region2: #{transformer_decoder_forward.23} parent=0 // pred_check
    _
  $region3: #{transformer_decoder_forward.23} parent=0 // pred_check_branch
    %9 = sbr.rel (0) target = $region5
  $region4: #{transformer_decoder_forward.23} parent=0 // pred_region
    _
  $region5: #{transformer_decoder_forward.23} parent=0 // pred_fallthru
    _
  // Predicated region
  $region6: #{transformer_decoder_forward.23} parent=0 // pred_check
    _
  $region7: #{transformer_decoder_forward.23} parent=0 // pred_check_branch
    %11 = sbr.rel (0) target = $region9
  $region8: #{transformer_decoder_forward.23} parent=0 // pred_region
    _
  $region9: #{transformer_decoder_forward.23} parent=0 // pred_fallthru
    _
  // Predicated region
  $region10: #{transformer_decoder_forward.23} parent=0 // pred_check
    _
  $region11: #{transformer_decoder_forward.23} parent=0 // pred_check_branch
    %13 = sbr.rel (0) target = $region13
  $region12: #{transformer_decoder_forward.23} parent=0 // pred_region
    _
  $region13: #{transformer_decoder_forward.23} parent=0 // pred_fallthru
    _
  %p15 = scmp.eq.s32.totalorder 0, 0
  // Predicated region
  $region14: #{transformer_decoder_forward.23} parent=0 // pred_check
    %p16 = pneg %p15
  $region15: #{transformer_decoder_forward.23} parent=0 // pred_check_branch
    %18 = sbr.rel (%p16) target = $region17
  $region16: #{transformer_decoder_forward.23} parent=0 // pred_region
    %19 = vst [vmem:[#allocation2] sm:$0xff] 0.0
    %20 = vst [vmem:[#allocation2 + $0x8] sm:$0xff] 0.0
    %21 = vst [vmem:[#allocation2 + $0x10] sm:$0xff] 0.0
    %22 = vst [vmem:[#allocation2 + $0x18] sm:$0xff] 0.0
  $region17: #{transformer_decoder_forward.23} parent=0 // pred_fallthru
    _
  %v23 = vld [vmem:[#allocation2] sm:$0xff]
  %v24 = vld [vmem:[#allocation2 + $0x8] sm:$0xff]
  %v25 = vld [vmem:[#allocation2 + $0x10] sm:$0xff]
  %v26 = vld [vmem:[#allocation2 + $0x18] sm:$0xff]
  %v27 = vld [vmem:[%s0] sm:$0xf]
  %v28 = vld [vmem:[%s0 + $0x4] sm:$0xf]
  %v29 = vld [vmem:[%s1] sm:$0xff]
  %v30 = vld [vmem:[%s1 + $0x8] sm:$0xff]
  %v31 = vld [vmem:[%s1 + $0x10] sm:$0xff]
  %v32 = vld [vmem:[%s1 + $0x18] sm:$0xff]
  %v33 = vld [vmem:[%s1 + $0x20] sm:$0xff]
  %v34 = vld [vmem:[%s1 + $0x28] sm:$0xff]
  %v35 = vld [vmem:[%s1 + $0x30] sm:$0xff]
  %v36 = vld [vmem:[%s1 + $0x38] sm:$0xff]
  %v37 = vld [vmem:[%s1 + $0x40] sm:$0xff]
  %v38 = vld [vmem:[%s1 + $0x48] sm:$0xff]
  %v39 = vld [vmem:[%s1 + $0x50] sm:$0xff]
  %v40 = vld [vmem:[%s1 + $0x58] sm:$0xff]
  %v41 = vld [vmem:[%s1 + $0x60] sm:$0xff]
  %v42 = vld [vmem:[%s1 + $0x68] sm:$0xff]
  %v43 = vld [vmem:[%s1 + $0x70] sm:$0xff]
  %v44 = vld [vmem:[%s1 + $0x78] sm:$0xff]
  %v47 = vunpack.c.l.b16 %v27
  %v48 = vunpack.c.l.b16 %v28
  %v49 = vpack.c.b16 %v48, %v47
  %v67 = vunpack.c.l.b16 %v29
  %v68 = vunpack.c.h.b16 %v29
  %v69 = vunpack.c.l.b16 %v30
  %v70 = vunpack.c.h.b16 %v30
  %v71 = vunpack.c.l.b16 %v31
  %v72 = vunpack.c.h.b16 %v31
  %v73 = vunpack.c.l.b16 %v32
  %v74 = vunpack.c.h.b16 %v32
  %v75 = vunpack.c.l.b16 %v33
  %v76 = vunpack.c.h.b16 %v33
  %v77 = vunpack.c.l.b16 %v34
  %v78 = vunpack.c.h.b16 %v34
  %v79 = vunpack.c.l.b16 %v35
  %v80 = vunpack.c.h.b16 %v35
  %v81 = vunpack.c.l.b16 %v36
  %v82 = vunpack.c.h.b16 %v36
  %v83 = vunpack.c.l.b16 %v37
  %v84 = vunpack.c.h.b16 %v37
  %v85 = vunpack.c.l.b16 %v38
  %v86 = vunpack.c.h.b16 %v38
  %v87 = vunpack.c.l.b16 %v39
  %v88 = vunpack.c.h.b16 %v39
  %v89 = vunpack.c.l.b16 %v40
  %v90 = vunpack.c.h.b16 %v40
  %v91 = vunpack.c.l.b16 %v41
  %v92 = vunpack.c.h.b16 %v41
  %v93 = vunpack.c.l.b16 %v42
  %v94 = vunpack.c.h.b16 %v42
  %v95 = vunpack.c.l.b16 %v43
  %v96 = vunpack.c.h.b16 %v43
  %v97 = vunpack.c.l.b16 %v44
  %v98 = vunpack.c.h.b16 %v44
  %v99 = vpack.c.b16 %v69, %v67
  %v100 = vpack.c.b16 %v70, %v68
  %v101 = vpack.c.b16 %v73, %v71
  %v102 = vpack.c.b16 %v74, %v72
  %v103 = vpack.c.b16 %v77, %v75
  %v104 = vpack.c.b16 %v78, %v76
  %v105 = vpack.c.b16 %v81, %v79
  %v106 = vpack.c.b16 %v82, %v80
  %v107 = vpack.c.b16 %v85, %v83
  %v108 = vpack.c.b16 %v86, %v84
  %v109 = vpack.c.b16 %v89, %v87
  %v110 = vpack.c.b16 %v90, %v88
  %v111 = vpack.c.b16 %v93, %v91
  %v112 = vpack.c.b16 %v94, %v92
  %v113 = vpack.c.b16 %v97, %v95
  %v114 = vpack.c.b16 %v98, %v96
  %131 = vmatprep.subr.bf16.mxu0 %v114
  %132 = vmatpush1.bf16.msra.mxu0 %v113
  %133 = vmatprep.subr.bf16.mxu0 %v112
  %134 = vmatpush1.bf16.msra.mxu0 %v111
  %135 = vmatprep.subr.bf16.mxu0 %v110
  %136 = vmatpush1.bf16.msra.mxu0 %v109
  %137 = vmatprep.subr.bf16.mxu0 %v108
  %138 = vmatpush1.bf16.msra.mxu0 %v107
  %139 = vmatprep.subr.bf16.mxu0 %v106
  %140 = vmatpush1.bf16.msra.mxu0 %v105
  %141 = vmatprep.subr.bf16.mxu0 %v104
  %142 = vmatpush1.bf16.msra.mxu0 %v103
  %143 = vmatprep.subr.bf16.mxu0 %v102
  %144 = vmatpush1.bf16.msra.mxu0 %v101
  %145 = vmatprep.subr.bf16.mxu0 %v100
  %146 = vmatpush1.bf16.msra.mxu0 %v99
  %147 = vmatprep.subr.bf16.mxu0 0
  %148 = vmatpush2.bf16.msra.mxu0 0
  %149 = vmatprep.subr.bf16.mxu0 0
  %150 = vmatpush2.bf16.msra.mxu0 0
  %151 = vmatprep.subr.bf16.mxu0 0
  %152 = vmatpush2.bf16.msra.mxu0 0
  %153 = vmatprep.subr.bf16.mxu0 0
  %154 = vmatpush2.bf16.msra.mxu0 0
  %155 = vmatprep.subr.bf16.mxu0 0
  %156 = vmatpush2.bf16.msra.mxu0 0
  %157 = vmatprep.subr.bf16.mxu0 0
  %158 = vmatpush2.bf16.msra.mxu0 0
  %159 = vmatprep.subr.bf16.mxu0 0
  %160 = vmatpush2.bf16.msra.mxu0 0
  %161 = vmatprep.subr.bf16.mxu0 0
  %162 = vmatpush2.bf16.msra.mxu0 0
  %163 = vmatprep.mubr.bf16.mxu0 0
  %164 = vmatmul.mubr.bf16.gmra.mxu0 %v49
  %v165 = vpop.f32.mrf.mxu0
  %v166 = vadd.f32 0.0, %v165
  %v167 = vpop.f32.mrf.mxu0
  %v168 = vadd.f32 0.0, %v167
  %v169 = vpop.f32.mrf.mxu0
  %v170 = vadd.f32 0.0, %v169
  %v171 = vpop.f32.mrf.mxu0
  %v172 = vadd.f32 0.0, %v171
  %173 = vdwg.mxu0
  %v174 = vadd.f32 %v23, %v166
  %v175 = vadd.f32 %v24, %v168
  %v176 = vadd.f32 %v25, %v170
  %v177 = vadd.f32 %v26, %v172
  %178 = vst [vmem:[#allocation2] sm:$0xff] %v174
  %179 = vst [vmem:[#allocation2 + $0x8] sm:$0xff] %v175
  %180 = vst [vmem:[#allocation2 + $0x10] sm:$0xff] %v176
  %181 = vst [vmem:[#allocation2 + $0x18] sm:$0xff] %v177
  // Predicated region
  $region18: #{transformer_decoder_forward.23} parent=0 // pred_check
    %p182 = pneg %p15
  $region19: #{transformer_decoder_forward.23} parent=0 // pred_check_branch
    %184 = sbr.rel (%p182) target = $region21
  $region20: #{transformer_decoder_forward.23} parent=0 // pred_region
    %v185 = vld [vmem:[#allocation2] sm:$0xff]
    %v186 = vld [vmem:[#allocation2 + $0x8] sm:$0xff]
    %v187 = vld [vmem:[#allocation2 + $0x10] sm:$0xff]
    %v188 = vld [vmem:[#allocation2 + $0x18] sm:$0xff]
    %v189 = vld [vmem:[%s2] sm:$0x3]
    %v191 = vlaneseq
    %v192 = vshrl.u32 %v191, 7
    %v193 = vsub.s32 0, %v192
    %v194 = vrot.slane %v189, %v193
    %v195 = vlaneseq
    %v196 = vshrl.u32 %v195, 7
    %v197 = vsub.s32 1, %v196
    %v198 = vrot.slane %v189, %v197
    %v201 = vadd.f32 %v185, %v194
    %v202 = vadd.f32 %v186, %v198
    %v203 = vadd.f32 %v187, %v194
    %v204 = vadd.f32 %v188, %v198
    %v205 = vpack.c.bf16 %v203, %v201
    %v206 = vpack.c.bf16 %v204, %v202
    %v209 = vunpack.c.l.b16 %v205
    %v210 = vunpack.c.l.b16 %v206
    %v211 = vunpack.c.h.b16 %v205
    %v212 = vunpack.c.h.b16 %v206
    %v213 = vpack.c.b16 %v210, %v209
    %v214 = vpack.c.b16 %v212, %v211
    %217 = vst [vmem:[%s3] sm:$0xff] %v213
    %218 = vst [vmem:[%s3 + $0x8] sm:$0xff] %v214
  $region21: #{transformer_decoder_forward.23} parent=0 // pred_fallthru
    _
  // Predicated region
  $region22: #{transformer_decoder_forward.23} parent=0 // pred_check
    _
  $region23: #{transformer_decoder_forward.23} parent=0 // pred_check_branch
    %220 = sbr.rel (0) target = $region25
  $region24: #{transformer_decoder_forward.23} parent=0 // pred_region
    _
  $region25: #{transformer_decoder_forward.23} parent=0 // pred_fallthru
    _
  // Predicated region
  $region26: #{transformer_decoder_forward.23} parent=0 // pred_check
    _
  $region27: #{transformer_decoder_forward.23} parent=0 // pred_check_branch
    %222 = sbr.rel (0) target = $region29
  $region28: #{transformer_decoder_forward.23} parent=0 // pred_region
    _
  $region29: #{transformer_decoder_forward.23} parent=0 // pred_fallthru
    _

// kernel: transformer_decoder_forward.26
$region0: #{transformer_decoder_forward.26}
  #allocation0 [shape = 'u32[]', space=smem, size = 0x4, offset = 0x4, fixed_abs, tag = 'smem constant byte address 0x4 - core index']
  #allocation1 [shape = 'u32[144,128]{1,0:T(1,128)}', space=vmem, size = 0x12000, scoped, tag = 'internal scratch']
  #allocation2 [shape = 'f32[16,256]{1,0:T(8,128)}', space=vmem, size = 0x4000, scoped, tag = 'scratch operand']
  %s0 = inlined_call_operand.vmem [shape: bf16[16,128], index: 0, kind: input, shape index: {}]
  %s1 = inlined_call_operand.vmem [shape: bf16[128,256], index: 1, kind: input, shape index: {}]
  %s2 = inlined_call_operand.vmem [shape: f32[1,256], index: 2, kind: input, shape index: {}]
  %s3 = inlined_call_operand.vmem [shape: bf16[16,256], index: 3, kind: output, shape index: {}]
  %s4 = sld [smem:[#allocation0]]
  $region30: #{transformer_decoder_forward.26} parent=0
    _
  %s6 = ssub.s32 1, %s4
  %s7 = scalar_select 0, %s6, %s4
  // Predicated region
  $region2: #{transformer_decoder_forward.26} parent=0 // pred_check
    _
  $region3: #{transformer_decoder_forward.26} parent=0 // pred_check_branch
    %9 = sbr.rel (0) target = $region5
  $region4: #{transformer_decoder_forward.26} parent=0 // pred_region
    _
  $region5: #{transformer_decoder_forward.26} parent=0 // pred_fallthru
    _
  // Predicated region
  $region6: #{transformer_decoder_forward.26} parent=0 // pred_check
    _
  $region7: #{transformer_decoder_forward.26} parent=0 // pred_check_branch
    %11 = sbr.rel (0) target = $region9
  $region8: #{transformer_decoder_forward.26} parent=0 // pred_region
    _
  $region9: #{transformer_decoder_forward.26} parent=0 // pred_fallthru
    _
  // Predicated region
  $region10: #{transformer_decoder_forward.26} parent=0 // pred_check
    _
  $region11: #{transformer_decoder_forward.26} parent=0 // pred_check_branch
    %13 = sbr.rel (0) target = $region13
  $region12: #{transformer_decoder_forward.26} parent=0 // pred_region
    _
  $region13: #{transformer_decoder_forward.26} parent=0 // pred_fallthru
    _
  %p15 = scmp.eq.s32.totalorder 0, 0
  // Predicated region
  $region14: #{transformer_decoder_forward.26} parent=0 // pred_check
    %p16 = pneg %p15
  $region15: #{transformer_decoder_forward.26} parent=0 // pred_check_branch
    %18 = sbr.rel (%p16) target = $region17
  $region16: #{transformer_decoder_forward.26} parent=0 // pred_region
    %19 = vst [vmem:[#allocation2] sm:$0xff] 0.0
    %20 = vst [vmem:[#allocation2 + $0x8] sm:$0xff] 0.0
    %21 = vst [vmem:[#allocation2 + $0x10] sm:$0xff] 0.0
    %22 = vst [vmem:[#allocation2 + $0x18] sm:$0xff] 0.0
  $region17: #{transformer_decoder_forward.26} parent=0 // pred_fallthru
    _
  %v23 = vld [vmem:[#allocation2] sm:$0xff]
  %v24 = vld [vmem:[#allocation2 + $0x8] sm:$0xff]
  %v25 = vld [vmem:[#allocation2 + $0x10] sm:$0xff]
  %v26 = vld [vmem:[#allocation2 + $0x18] sm:$0xff]
  %v27 = vld [vmem:[%s0] sm:$0xf]
  %v28 = vld [vmem:[%s0 + $0x4] sm:$0xf]
  %v29 = vld [vmem:[%s1] sm:$0xff]
  %v30 = vld [vmem:[%s1 + $0x8] sm:$0xff]
  %v31 = vld [vmem:[%s1 + $0x10] sm:$0xff]
  %v32 = vld [vmem:[%s1 + $0x18] sm:$0xff]
  %v33 = vld [vmem:[%s1 + $0x20] sm:$0xff]
  %v34 = vld [vmem:[%s1 + $0x28] sm:$0xff]
  %v35 = vld [vmem:[%s1 + $0x30] sm:$0xff]
  %v36 = vld [vmem:[%s1 + $0x38] sm:$0xff]
  %v37 = vld [vmem:[%s1 + $0x40] sm:$0xff]
  %v38 = vld [vmem:[%s1 + $0x48] sm:$0xff]
  %v39 = vld [vmem:[%s1 + $0x50] sm:$0xff]
  %v40 = vld [vmem:[%s1 + $0x58] sm:$0xff]
  %v41 = vld [vmem:[%s1 + $0x60] sm:$0xff]
  %v42 = vld [vmem:[%s1 + $0x68] sm:$0xff]
  %v43 = vld [vmem:[%s1 + $0x70] sm:$0xff]
  %v44 = vld [vmem:[%s1 + $0x78] sm:$0xff]
  %v47 = vunpack.c.l.b16 %v27
  %v48 = vunpack.c.l.b16 %v28
  %v49 = vpack.c.b16 %v48, %v47
  %v67 = vunpack.c.l.b16 %v29
  %v68 = vunpack.c.h.b16 %v29
  %v69 = vunpack.c.l.b16 %v30
  %v70 = vunpack.c.h.b16 %v30
  %v71 = vunpack.c.l.b16 %v31
  %v72 = vunpack.c.h.b16 %v31
  %v73 = vunpack.c.l.b16 %v32
  %v74 = vunpack.c.h.b16 %v32
  %v75 = vunpack.c.l.b16 %v33
  %v76 = vunpack.c.h.b16 %v33
  %v77 = vunpack.c.l.b16 %v34
  %v78 = vunpack.c.h.b16 %v34
  %v79 = vunpack.c.l.b16 %v35
  %v80 = vunpack.c.h.b16 %v35
  %v81 = vunpack.c.l.b16 %v36
  %v82 = vunpack.c.h.b16 %v36
  %v83 = vunpack.c.l.b16 %v37
  %v84 = vunpack.c.h.b16 %v37
  %v85 = vunpack.c.l.b16 %v38
  %v86 = vunpack.c.h.b16 %v38
  %v87 = vunpack.c.l.b16 %v39
  %v88 = vunpack.c.h.b16 %v39
  %v89 = vunpack.c.l.b16 %v40
  %v90 = vunpack.c.h.b16 %v40
  %v91 = vunpack.c.l.b16 %v41
  %v92 = vunpack.c.h.b16 %v41
  %v93 = vunpack.c.l.b16 %v42
  %v94 = vunpack.c.h.b16 %v42
  %v95 = vunpack.c.l.b16 %v43
  %v96 = vunpack.c.h.b16 %v43
  %v97 = vunpack.c.l.b16 %v44
  %v98 = vunpack.c.h.b16 %v44
  %v99 = vpack.c.b16 %v69, %v67
  %v100 = vpack.c.b16 %v70, %v68
  %v101 = vpack.c.b16 %v73, %v71
  %v102 = vpack.c.b16 %v74, %v72
  %v103 = vpack.c.b16 %v77, %v75
  %v104 = vpack.c.b16 %v78, %v76
  %v105 = vpack.c.b16 %v81, %v79
  %v106 = vpack.c.b16 %v82, %v80
  %v107 = vpack.c.b16 %v85, %v83
  %v108 = vpack.c.b16 %v86, %v84
  %v109 = vpack.c.b16 %v89, %v87
  %v110 = vpack.c.b16 %v90, %v88
  %v111 = vpack.c.b16 %v93, %v91
  %v112 = vpack.c.b16 %v94, %v92
  %v113 = vpack.c.b16 %v97, %v95
  %v114 = vpack.c.b16 %v98, %v96
  %131 = vmatprep.subr.bf16.mxu0 %v114
  %132 = vmatpush1.bf16.msra.mxu0 %v113
  %133 = vmatprep.subr.bf16.mxu0 %v112
  %134 = vmatpush1.bf16.msra.mxu0 %v111
  %135 = vmatprep.subr.bf16.mxu0 %v110
  %136 = vmatpush1.bf16.msra.mxu0 %v109
  %137 = vmatprep.subr.bf16.mxu0 %v108
  %138 = vmatpush1.bf16.msra.mxu0 %v107
  %139 = vmatprep.subr.bf16.mxu0 %v106
  %140 = vmatpush1.bf16.msra.mxu0 %v105
  %141 = vmatprep.subr.bf16.mxu0 %v104
  %142 = vmatpush1.bf16.msra.mxu0 %v103
  %143 = vmatprep.subr.bf16.mxu0 %v102
  %144 = vmatpush1.bf16.msra.mxu0 %v101
  %145 = vmatprep.subr.bf16.mxu0 %v100
  %146 = vmatpush1.bf16.msra.mxu0 %v99
  %147 = vmatprep.subr.bf16.mxu0 0
  %148 = vmatpush2.bf16.msra.mxu0 0
  %149 = vmatprep.subr.bf16.mxu0 0
  %150 = vmatpush2.bf16.msra.mxu0 0
  %151 = vmatprep.subr.bf16.mxu0 0
  %152 = vmatpush2.bf16.msra.mxu0 0
  %153 = vmatprep.subr.bf16.mxu0 0
  %154 = vmatpush2.bf16.msra.mxu0 0
  %155 = vmatprep.subr.bf16.mxu0 0
  %156 = vmatpush2.bf16.msra.mxu0 0
  %157 = vmatprep.subr.bf16.mxu0 0
  %158 = vmatpush2.bf16.msra.mxu0 0
  %159 = vmatprep.subr.bf16.mxu0 0
  %160 = vmatpush2.bf16.msra.mxu0 0
  %161 = vmatprep.subr.bf16.mxu0 0
  %162 = vmatpush2.bf16.msra.mxu0 0
  %163 = vmatprep.mubr.bf16.mxu0 0
  %164 = vmatmul.mubr.bf16.gmra.mxu0 %v49
  %v165 = vpop.f32.mrf.mxu0
  %v166 = vadd.f32 0.0, %v165
  %v167 = vpop.f32.mrf.mxu0
  %v168 = vadd.f32 0.0, %v167
  %v169 = vpop.f32.mrf.mxu0
  %v170 = vadd.f32 0.0, %v169
  %v171 = vpop.f32.mrf.mxu0
  %v172 = vadd.f32 0.0, %v171
  %173 = vdwg.mxu0
  %v174 = vadd.f32 %v23, %v166
  %v175 = vadd.f32 %v24, %v168
  %v176 = vadd.f32 %v25, %v170
  %v177 = vadd.f32 %v26, %v172
  %178 = vst [vmem:[#allocation2] sm:$0xff] %v174
  %179 = vst [vmem:[#allocation2 + $0x8] sm:$0xff] %v175
  %180 = vst [vmem:[#allocation2 + $0x10] sm:$0xff] %v176
  %181 = vst [vmem:[#allocation2 + $0x18] sm:$0xff] %v177
  // Predicated region
  $region18: #{transformer_decoder_forward.26} parent=0 // pred_check
    %p182 = pneg %p15
  $region19: #{transformer_decoder_forward.26} parent=0 // pred_check_branch
    %184 = sbr.rel (%p182) target = $region21
  $region20: #{transformer_decoder_forward.26} parent=0 // pred_region
    %v185 = vld [vmem:[#allocation2] sm:$0xff]
    %v186 = vld [vmem:[#allocation2 + $0x8] sm:$0xff]
    %v187 = vld [vmem:[#allocation2 + $0x10] sm:$0xff]
    %v188 = vld [vmem:[#allocation2 + $0x18] sm:$0xff]
    %v189 = vld [vmem:[%s2] sm:$0x3]
    %v191 = vlaneseq
    %v192 = vshrl.u32 %v191, 7
    %v193 = vsub.s32 0, %v192
    %v194 = vrot.slane %v189, %v193
    %v195 = vlaneseq
    %v196 = vshrl.u32 %v195, 7
    %v197 = vsub.s32 1, %v196
    %v198 = vrot.slane %v189, %v197
    %v201 = vadd.f32 %v185, %v194
    %v202 = vadd.f32 %v186, %v198
    %v203 = vadd.f32 %v187, %v194
    %v204 = vadd.f32 %v188, %v198
    %v205 = vmax.f32 %v201, 0.0
    %v206 = vmax.f32 %v202, 0.0
    %v207 = vmax.f32 %v203, 0.0
    %v208 = vmax.f32 %v204, 0.0
    %v209 = vpack.c.bf16 %v207, %v205
    %v210 = vpack.c.bf16 %v208, %v206
    %v213 = vunpack.c.l.b16 %v209
    %v214 = vunpack.c.l.b16 %v210
    %v215 = vunpack.c.h.b16 %v209
    %v216 = vunpack.c.h.b16 %v210
    %v217 = vpack.c.b16 %v214, %v213
    %v218 = vpack.c.b16 %v216, %v215
    %221 = vst [vmem:[%s3] sm:$0xff] %v217
    %222 = vst [vmem:[%s3 + $0x8] sm:$0xff] %v218
  $region21: #{transformer_decoder_forward.26} parent=0 // pred_fallthru
    _
  // Predicated region
  $region22: #{transformer_decoder_forward.26} parent=0 // pred_check
    _
  $region23: #{transformer_decoder_forward.26} parent=0 // pred_check_branch
    %224 = sbr.rel (0) target = $region25
  $region24: #{transformer_decoder_forward.26} parent=0 // pred_region
    _
  $region25: #{transformer_decoder_forward.26} parent=0 // pred_fallthru
    _
  // Predicated region
  $region26: #{transformer_decoder_forward.26} parent=0 // pred_check
    _
  $region27: #{transformer_decoder_forward.26} parent=0 // pred_check_branch
    %226 = sbr.rel (0) target = $region29
  $region28: #{transformer_decoder_forward.26} parent=0 // pred_region
    _
  $region29: #{transformer_decoder_forward.26} parent=0 // pred_fallthru
    _

// kernel: transformer_decoder_forward.27
$region0: #{transformer_decoder_forward.27}
  #allocation0 [shape = 'u32[]', space=smem, size = 0x4, offset = 0x4, fixed_abs, tag = 'smem constant byte address 0x4 - core index']
  #allocation1 [shape = 'u32[144,128]{1,0:T(1,128)}', space=vmem, size = 0x12000, scoped, tag = 'internal scratch']
  #allocation2 [shape = 'f32[16,128]{1,0:T(8,128)}', space=vmem, size = 0x2000, scoped, tag = 'scratch operand']
  %s0 = inlined_call_operand.vmem [shape: bf16[16,256], index: 0, kind: input, shape index: {}]
  %s1 = inlined_call_operand.vmem [shape: bf16[256,128], index: 1, kind: input, shape index: {}]
  %s2 = inlined_call_operand.vmem [shape: f32[1,128], index: 2, kind: input, shape index: {}]
  %s3 = inlined_call_operand.vmem [shape: bf16[16,128], index: 3, kind: input, shape index: {}]
  %s4 = inlined_call_operand.vmem [shape: f32[1,128], index: 4, kind: input, shape index: {}]
  %s5 = inlined_call_operand.vmem [shape: f32[1,128], index: 5, kind: input, shape index: {}]
  %s6 = inlined_call_operand.vmem [shape: bf16[16,128], index: 6, kind: output, shape index: {}]
  %s7 = sld [smem:[#allocation0]]
  $region42: #{transformer_decoder_forward.27} parent=0
    _
  %s9 = ssub.s32 1, %s7
  %s10 = scalar_select 0, %s9, %s7
  // Predicated region
  $region2: #{transformer_decoder_forward.27} parent=0 // pred_check
    _
  $region3: #{transformer_decoder_forward.27} parent=0 // pred_check_branch
    %12 = sbr.rel (0) target = $region5
  $region4: #{transformer_decoder_forward.27} parent=0 // pred_region
    _
  $region5: #{transformer_decoder_forward.27} parent=0 // pred_fallthru
    _
  // Predicated region
  $region6: #{transformer_decoder_forward.27} parent=0 // pred_check
    _
  $region7: #{transformer_decoder_forward.27} parent=0 // pred_check_branch
    %14 = sbr.rel (0) target = $region9
  $region8: #{transformer_decoder_forward.27} parent=0 // pred_region
    _
  $region9: #{transformer_decoder_forward.27} parent=0 // pred_fallthru
    _
  // Predicated region
  $region10: #{transformer_decoder_forward.27} parent=0 // pred_check
    _
  $region11: #{transformer_decoder_forward.27} parent=0 // pred_check_branch
    %16 = sbr.rel (0) target = $region13
  $region12: #{transformer_decoder_forward.27} parent=0 // pred_region
    _
  $region13: #{transformer_decoder_forward.27} parent=0 // pred_fallthru
    _
  // Predicated region
  $region14: #{transformer_decoder_forward.27} parent=0 // pred_check
    _
  $region15: #{transformer_decoder_forward.27} parent=0 // pred_check_branch
    %18 = sbr.rel (0) target = $region17
  $region16: #{transformer_decoder_forward.27} parent=0 // pred_region
    _
  $region17: #{transformer_decoder_forward.27} parent=0 // pred_fallthru
    _
  // Predicated region
  $region18: #{transformer_decoder_forward.27} parent=0 // pred_check
    _
  $region19: #{transformer_decoder_forward.27} parent=0 // pred_check_branch
    %20 = sbr.rel (0) target = $region21
  $region20: #{transformer_decoder_forward.27} parent=0 // pred_region
    _
  $region21: #{transformer_decoder_forward.27} parent=0 // pred_fallthru
    _
  // Predicated region
  $region22: #{transformer_decoder_forward.27} parent=0 // pred_check
    _
  $region23: #{transformer_decoder_forward.27} parent=0 // pred_check_branch
    %22 = sbr.rel (0) target = $region25
  $region24: #{transformer_decoder_forward.27} parent=0 // pred_region
    _
  $region25: #{transformer_decoder_forward.27} parent=0 // pred_fallthru
    _
  %p24 = scmp.eq.s32.totalorder 0, 0
  // Predicated region
  $region26: #{transformer_decoder_forward.27} parent=0 // pred_check
    %p25 = pneg %p24
  $region27: #{transformer_decoder_forward.27} parent=0 // pred_check_branch
    %27 = sbr.rel (%p25) target = $region29
  $region28: #{transformer_decoder_forward.27} parent=0 // pred_region
    %28 = vst [vmem:[#allocation2] sm:$0xff] 0.0
    %29 = vst [vmem:[#allocation2 + $0x8] sm:$0xff] 0.0
  $region29: #{transformer_decoder_forward.27} parent=0 // pred_fallthru
    _
  %v30 = vld [vmem:[#allocation2] sm:$0xff]
  %v31 = vld [vmem:[#allocation2 + $0x8] sm:$0xff]
  %v32 = vld [vmem:[%s0] sm:$0xff]
  %v33 = vld [vmem:[%s0 + $0x8] sm:$0xff]
  %v34 = vld [vmem:[%s1] sm:$0xf]
  %v35 = vld [vmem:[%s1 + $0x4] sm:$0xf]
  %v36 = vld [vmem:[%s1 + $0x8] sm:$0xf]
  %v37 = vld [vmem:[%s1 + $0xc] sm:$0xf]
  %v38 = vld [vmem:[%s1 + $0x10] sm:$0xf]
  %v39 = vld [vmem:[%s1 + $0x14] sm:$0xf]
  %v40 = vld [vmem:[%s1 + $0x18] sm:$0xf]
  %v41 = vld [vmem:[%s1 + $0x1c] sm:$0xf]
  %v42 = vld [vmem:[%s1 + $0x20] sm:$0xf]
  %v43 = vld [vmem:[%s1 + $0x24] sm:$0xf]
  %v44 = vld [vmem:[%s1 + $0x28] sm:$0xf]
  %v45 = vld [vmem:[%s1 + $0x2c] sm:$0xf]
  %v46 = vld [vmem:[%s1 + $0x30] sm:$0xf]
  %v47 = vld [vmem:[%s1 + $0x34] sm:$0xf]
  %v48 = vld [vmem:[%s1 + $0x38] sm:$0xf]
  %v49 = vld [vmem:[%s1 + $0x3c] sm:$0xf]
  %v50 = vld [vmem:[%s1 + $0x40] sm:$0xf]
  %v51 = vld [vmem:[%s1 + $0x44] sm:$0xf]
  %v52 = vld [vmem:[%s1 + $0x48] sm:$0xf]
  %v53 = vld [vmem:[%s1 + $0x4c] sm:$0xf]
  %v54 = vld [vmem:[%s1 + $0x50] sm:$0xf]
  %v55 = vld [vmem:[%s1 + $0x54] sm:$0xf]
  %v56 = vld [vmem:[%s1 + $0x58] sm:$0xf]
  %v57 = vld [vmem:[%s1 + $0x5c] sm:$0xf]
  %v58 = vld [vmem:[%s1 + $0x60] sm:$0xf]
  %v59 = vld [vmem:[%s1 + $0x64] sm:$0xf]
  %v60 = vld [vmem:[%s1 + $0x68] sm:$0xf]
  %v61 = vld [vmem:[%s1 + $0x6c] sm:$0xf]
  %v62 = vld [vmem:[%s1 + $0x70] sm:$0xf]
  %v63 = vld [vmem:[%s1 + $0x74] sm:$0xf]
  %v64 = vld [vmem:[%s1 + $0x78] sm:$0xf]
  %v65 = vld [vmem:[%s1 + $0x7c] sm:$0xf]
  %v68 = vunpack.c.l.b16 %v32
  %v69 = vunpack.c.h.b16 %v32
  %v70 = vunpack.c.l.b16 %v33
  %v71 = vunpack.c.h.b16 %v33
  %v72 = vpack.c.b16 %v70, %v68
  %v73 = vpack.c.b16 %v71, %v69
  %v108 = vunpack.c.l.b16 %v34
  %v109 = vunpack.c.l.b16 %v35
  %v110 = vunpack.c.l.b16 %v36
  %v111 = vunpack.c.l.b16 %v37
  %v112 = vunpack.c.l.b16 %v38
  %v113 = vunpack.c.l.b16 %v39
  %v114 = vunpack.c.l.b16 %v40
  %v115 = vunpack.c.l.b16 %v41
  %v116 = vunpack.c.l.b16 %v42
  %v117 = vunpack.c.l.b16 %v43
  %v118 = vunpack.c.l.b16 %v44
  %v119 = vunpack.c.l.b16 %v45
  %v120 = vunpack.c.l.b16 %v46
  %v121 = vunpack.c.l.b16 %v47
  %v122 = vunpack.c.l.b16 %v48
  %v123 = vunpack.c.l.b16 %v49
  %v124 = vunpack.c.l.b16 %v50
  %v125 = vunpack.c.l.b16 %v51
  %v126 = vunpack.c.l.b16 %v52
  %v127 = vunpack.c.l.b16 %v53
  %v128 = vunpack.c.l.b16 %v54
  %v129 = vunpack.c.l.b16 %v55
  %v130 = vunpack.c.l.b16 %v56
  %v131 = vunpack.c.l.b16 %v57
  %v132 = vunpack.c.l.b16 %v58
  %v133 = vunpack.c.l.b16 %v59
  %v134 = vunpack.c.l.b16 %v60
  %v135 = vunpack.c.l.b16 %v61
  %v136 = vunpack.c.l.b16 %v62
  %v137 = vunpack.c.l.b16 %v63
  %v138 = vunpack.c.l.b16 %v64
  %v139 = vunpack.c.l.b16 %v65
  %v140 = vpack.c.b16 %v109, %v108
  %v141 = vpack.c.b16 %v111, %v110
  %v142 = vpack.c.b16 %v113, %v112
  %v143 = vpack.c.b16 %v115, %v114
  %v144 = vpack.c.b16 %v117, %v116
  %v145 = vpack.c.b16 %v119, %v118
  %v146 = vpack.c.b16 %v121, %v120
  %v147 = vpack.c.b16 %v123, %v122
  %v148 = vpack.c.b16 %v125, %v124
  %v149 = vpack.c.b16 %v127, %v126
  %v150 = vpack.c.b16 %v129, %v128
  %v151 = vpack.c.b16 %v131, %v130
  %v152 = vpack.c.b16 %v133, %v132
  %v153 = vpack.c.b16 %v135, %v134
  %v154 = vpack.c.b16 %v137, %v136
  %v155 = vpack.c.b16 %v139, %v138
  %172 = vmatprep.subr.bf16.mxu0 0
  %173 = vmatpush1.bf16.msra.mxu0 %v147
  %174 = vmatprep.subr.bf16.mxu0 0
  %175 = vmatpush1.bf16.msra.mxu0 %v146
  %176 = vmatprep.subr.bf16.mxu0 0
  %177 = vmatpush1.bf16.msra.mxu0 %v145
  %178 = vmatprep.subr.bf16.mxu0 0
  %179 = vmatpush1.bf16.msra.mxu0 %v144
  %180 = vmatprep.subr.bf16.mxu0 0
  %181 = vmatpush1.bf16.msra.mxu0 %v143
  %182 = vmatprep.subr.bf16.mxu0 0
  %183 = vmatpush1.bf16.msra.mxu0 %v142
  %184 = vmatprep.subr.bf16.mxu0 0
  %185 = vmatpush1.bf16.msra.mxu0 %v141
  %186 = vmatprep.subr.bf16.mxu0 0
  %187 = vmatpush1.bf16.msra.mxu0 %v140
  %188 = vmatprep.subr.bf16.mxu0 0
  %189 = vmatpush2.bf16.msra.mxu0 %v155
  %190 = vmatprep.subr.bf16.mxu0 0
  %191 = vmatpush2.bf16.msra.mxu0 %v154
  %192 = vmatprep.subr.bf16.mxu0 0
  %193 = vmatpush2.bf16.msra.mxu0 %v153
  %194 = vmatprep.subr.bf16.mxu0 0
  %195 = vmatpush2.bf16.msra.mxu0 %v152
  %196 = vmatprep.subr.bf16.mxu0 0
  %197 = vmatpush2.bf16.msra.mxu0 %v151
  %198 = vmatprep.subr.bf16.mxu0 0
  %199 = vmatpush2.bf16.msra.mxu0 %v150
  %200 = vmatprep.subr.bf16.mxu0 0
  %201 = vmatpush2.bf16.msra.mxu0 %v149
  %202 = vmatprep.subr.bf16.mxu0 0
  %203 = vmatpush2.bf16.msra.mxu0 %v148
  %204 = vmatprep.mubr.bf16.mxu0 %v73
  %205 = vmatmul.mubr.bf16.gmra.mxu0 %v72
  %v206 = vpop.f32.mrf.mxu0
  %v207 = vadd.f32 0.0, %v206
  %v208 = vpop.f32.mrf.mxu0
  %v209 = vpop.f32.mrf.mxu0
  %v210 = vadd.f32 0.0, %v209
  %v211 = vpop.f32.mrf.mxu0
  %212 = vdwg.mxu0
  %v213 = vadd.f32 %v30, %v207
  %v214 = vadd.f32 %v31, %v210
  %215 = vst [vmem:[#allocation2] sm:$0xff] %v213
  %216 = vst [vmem:[#allocation2 + $0x8] sm:$0xff] %v214
  // Predicated region
  $region30: #{transformer_decoder_forward.27} parent=0 // pred_check
    %p217 = pneg %p24
  $region31: #{transformer_decoder_forward.27} parent=0 // pred_check_branch
    %219 = sbr.rel (%p217) target = $region33
  $region32: #{transformer_decoder_forward.27} parent=0 // pred_region
    %v220 = vld [vmem:[#allocation2] sm:$0xff]
    %v221 = vld [vmem:[#allocation2 + $0x8] sm:$0xff]
    %v222 = vld [vmem:[%s2] sm:$0x1]
    %v224 = vlaneseq
    %v225 = vshrl.u32 %v224, 7
    %v226 = vsub.s32 0, %v225
    %v227 = vrot.slane %v222, %v226
    %v229 = vadd.f32 %v220, %v227
    %v230 = vadd.f32 %v221, %v227
    %v231 = vld [vmem:[%s3] sm:$0xf]
    %v232 = vld [vmem:[%s3 + $0x4] sm:$0xf]
    %v233 = vunpack.c.l.bf16 %v231
    %v234 = vunpack.c.l.bf16 %v232
    %v235 = vadd.f32 %v229, %v233
    %v236 = vadd.f32 %v230, %v234
    %237 = vadd.xlane.f32.xlu0 %v235
    %v238 = vpop.xlane.xlu0 %237
    %239 = vadd.xlane.f32.xlu0 %v236
    %v240 = vpop.xlane.xlu0 %239
    %v241 = vrcp.pop 128.0
    %v242 = vmul.f32 %v238, %v241
    %v243 = vmul.f32 %v240, %v241
    %v244 = vsub.f32 %v235, %v242
    %v245 = vsub.f32 %v236, %v243
    %v246 = vmul.f32 %v244, %v244
    %v247 = vmul.f32 %v245, %v245
    %248 = vadd.xlane.f32.xlu0 %v246
    %v249 = vpop.xlane.xlu0 %248
    %250 = vadd.xlane.f32.xlu0 %v247
    %v251 = vpop.xlane.xlu0 %250
    %v252 = vmul.f32 %v249, %v241
    %v253 = vmul.f32 %v251, %v241
    %v254 = vadd.f32 %v252, 1e-06
    %v255 = vadd.f32 %v253, 1e-06
    %v256 = vrsqrt.pop %v254
    %v257 = vrsqrt.pop %v255
    %v258 = vmul.f32 %v244, %v256
    %v259 = vmul.f32 %v245, %v257
    %v260 = vld [vmem:[%s4] sm:$0x1]
    %v262 = vlaneseq
    %v263 = vshrl.u32 %v262, 7
    %v264 = vsub.s32 0, %v263
    %v265 = vrot.slane %v260, %v264
    %v267 = vmul.f32 %v258, %v265
    %v268 = vmul.f32 %v259, %v265
    %v269 = vld [vmem:[%s5] sm:$0x1]
    %v271 = vlaneseq
    %v272 = vshrl.u32 %v271, 7
    %v273 = vsub.s32 0, %v272
    %v274 = vrot.slane %v269, %v273
    %v276 = vadd.f32 %v267, %v274
    %v277 = vadd.f32 %v268, %v274
    %v278 = vpack.c.bf16 %v277, %v276
    %v280 = vunpack.c.l.b16 %v278
    %v281 = vunpack.c.h.b16 %v278
    %v282 = vpack.c.b16 %v280, %v280
    %v283 = vpack.c.b16 %v281, %v281
    %286 = vst [vmem:[%s6] sm:$0xf] %v282
    %287 = vst [vmem:[%s6 + $0x4] sm:$0xf] %v283
  $region33: #{transformer_decoder_forward.27} parent=0 // pred_fallthru
    _
  // Predicated region
  $region34: #{transformer_decoder_forward.27} parent=0 // pred_check
    _
  $region35: #{transformer_decoder_forward.27} parent=0 // pred_check_branch
    %289 = sbr.rel (0) target = $region37
  $region36: #{transformer_decoder_forward.27} parent=0 // pred_region
    _
  $region37: #{transformer_decoder_forward.27} parent=0 // pred_fallthru
    _
  // Predicated region
  $region38: #{transformer_decoder_forward.27} parent=0 // pred_check
    _
  $region39: #{transformer_decoder_forward.27} parent=0 // pred_check_branch
    %291 = sbr.rel (0) target = $region41
  $region40: #{transformer_decoder_forward.27} parent=0 // pred_region
    _
  $region41: #{transformer_decoder_forward.27} parent=0 // pred_fallthru
    _

// kernel: transformer_decoder_forward.24
$region0: #{transformer_decoder_forward.24}
  #allocation0 [shape = 'u32[]', space=smem, size = 0x4, offset = 0x4, fixed_abs, tag = 'smem constant byte address 0x4 - core index']
  #allocation1 [shape = 'u32[144,128]{1,0:T(1,128)}', space=vmem, size = 0x12000, scoped, tag = 'internal scratch']
  %s0 = inlined_call_operand.vmem [shape: bf16[2,8,128], index: 0, kind: input, shape index: {}]
  %s1 = inlined_call_operand.vmem [shape: bf16[2,8,128], index: 1, kind: input, shape index: {}]
  %s2 = inlined_call_operand.vmem [shape: bf16[2,8,128], index: 2, kind: input, shape index: {}]
  %s3 = inlined_call_operand.vmem [shape: f32[2,8,1], index: 3, kind: input, shape index: {}]
  %s4 = inlined_call_operand.vmem [shape: f32[2,1,8], index: 4, kind: input, shape index: {}]
  %s5 = inlined_call_operand.vmem [shape: bf16[2,8,128], index: 5, kind: output, shape index: {}]
  %s6 = sld [smem:[#allocation0]]
  $region53: #{transformer_decoder_forward.24} parent=0
    _
  %s8 = ssub.s32 1, %s6
  %s9 = scalar_select 0, %s8, %s6
  loop: start=0, step=1, limit=4
  $region2: #{transformer_decoder_forward.24} parent=0 // loop_pre_header
    _
  $region3: #{transformer_decoder_forward.24} parent=0 // loop_header
    %s11 = sphi 0, %s15
    %p12 = scmp.ge.s32.totalorder %s11, 4
    %s18 = sphi 0, %s30
    %s19 = sphi 0, %s26
    %s20 = sphi 0, %s18
    %s21 = sphi 0, %s19
    %s22 = sphi 0, %s20
    %s23 = sphi 0, %s21
    %s35 = sphi 0, %s37
    %s38 = sphi 0, %s35
    %s39 = sphi 0, %s38
    %s55 = sphi 0, %s39
    %s61 = sphi 0, %s63
    %s64 = sphi 0, %s61
    %s65 = sphi 0, %s64
    %s81 = sphi 0, %s65
    %s87 = sphi 0, %s89
    %s90 = sphi 0, %s87
    %s91 = sphi 0, %s90
    %s107 = sphi 0, %s91
    %s115 = sphi 0, %s117
    %s118 = sphi 0, %s115
    %s119 = sphi 0, %s118
    %s135 = sphi 0, %s119
    %s141 = sphi 0, %s143
    %s144 = sphi 0, %s141
    %s145 = sphi 0, %s144
    %s161 = sphi 0, %s145
    %s169 = sphi 0, %s171
    %s172 = sphi 0, %s169
    %s173 = sphi 0, %s172
    %s189 = sphi 0, %s173
  $region4: #{transformer_decoder_forward.24} parent=0 // loop_header_branch
    %14 = sbr.rel (%p12) target = $region8
  $region5: #{transformer_decoder_forward.24} parent=0 // loop_body
    %s16 = ssub.s32 %s11, 1
    %s17 = ssub.s32 %s11, 2
    %s24 = sadd.s32 1, %s19
    %p25 = scmp.ge.s32.totalorder %s24, 1
    %s26 = scalar_select %p25, 0, %s24
    %s27 = sadd.s32 1, %s18
    %s28 = scalar_select %p25, %s27, %s18
    %p29 = scmp.ge.s32.totalorder %s28, 2
    %s30 = scalar_select %p29, 0, %s28
    %s31 = ssub.s32 %s18, %s30
    %s32 = ssub.s32 %s19, %s26
    %s33 = sor.u32 %s31, %s32
    %p34 = scmp.eq.s32.totalorder %s33, 0
    %s36 = sadd.s32 %s35, 1
    %s37 = scalar_select %p34, %s35, %s36
    %p40 = pneg %p34
    %p41 = scmp.eq.s32.totalorder %s11, 1
    %p42 = por %p40, %p41
    %p43 = scmp.ne.s32.totalorder %s35, %s38
    %p44 = scmp.eq.s32.totalorder %s11, 0
    %p45 = por %p43, %p44
    %p46 = scmp.ne.s32.totalorder %s35, %s38
    %p47 = scmp.eq.s32.totalorder %s16, 1
    %p48 = por %p46, %p47
    %p49 = scmp.ne.s32.totalorder %s38, %s39
    %p50 = scmp.eq.s32.totalorder %s16, 0
    %p51 = por %p49, %p50
    %p52 = scmp.ne.s32.totalorder %s38, %s39
    %p53 = scmp.eq.s32.totalorder %s17, 1
    %p54 = por %p52, %p53
    %p56 = scmp.ne.s32.totalorder %s39, %s55
    %p57 = scmp.eq.s32.totalorder %s17, 0
    %p58 = por %p56, %p57
    %s59 = ssub.s32 %s18, %s30
    %p60 = scmp.eq.s32.totalorder %s59, 0
    %s62 = sadd.s32 %s61, 1
    %s63 = scalar_select %p60, %s61, %s62
    %p66 = pneg %p60
    %p67 = scmp.eq.s32.totalorder %s11, 1
    %p68 = por %p66, %p67
    %p69 = scmp.ne.s32.totalorder %s61, %s64
    %p70 = scmp.eq.s32.totalorder %s11, 0
    %p71 = por %p69, %p70
    %p72 = scmp.ne.s32.totalorder %s61, %s64
    %p73 = scmp.eq.s32.totalorder %s16, 1
    %p74 = por %p72, %p73
    %p75 = scmp.ne.s32.totalorder %s64, %s65
    %p76 = scmp.eq.s32.totalorder %s16, 0
    %p77 = por %p75, %p76
    %p78 = scmp.ne.s32.totalorder %s64, %s65
    %p79 = scmp.eq.s32.totalorder %s17, 1
    %p80 = por %p78, %p79
    %p82 = scmp.ne.s32.totalorder %s65, %s81
    %p83 = scmp.eq.s32.totalorder %s17, 0
    %p84 = por %p82, %p83
    %s85 = ssub.s32 %s18, %s30
    %p86 = scmp.eq.s32.totalorder %s85, 0
    %s88 = sadd.s32 %s87, 1
    %s89 = scalar_select %p86, %s87, %s88
    %p92 = pneg %p86
    %p93 = scmp.eq.s32.totalorder %s11, 1
    %p94 = por %p92, %p93
    %p95 = scmp.ne.s32.totalorder %s87, %s90
    %p96 = scmp.eq.s32.totalorder %s11, 0
    %p97 = por %p95, %p96
    %p98 = scmp.ne.s32.totalorder %s87, %s90
    %p99 = scmp.eq.s32.totalorder %s16, 1
    %p100 = por %p98, %p99
    %p101 = scmp.ne.s32.totalorder %s90, %s91
    %p102 = scmp.eq.s32.totalorder %s16, 0
    %p103 = por %p101, %p102
    %p104 = scmp.ne.s32.totalorder %s90, %s91
    %p105 = scmp.eq.s32.totalorder %s17, 1
    %p106 = por %p104, %p105
    %p108 = scmp.ne.s32.totalorder %s91, %s107
    %p109 = scmp.eq.s32.totalorder %s17, 0
    %p110 = por %p108, %p109
    %s111 = ssub.s32 %s18, %s30
    %s112 = ssub.s32 %s19, %s26
    %s113 = sor.u32 %s111, %s112
    %p114 = scmp.eq.s32.totalorder %s113, 0
    %s116 = sadd.s32 %s115, 1
    %s117 = scalar_select %p114, %s115, %s116
    %p120 = pneg %p114
    %p121 = scmp.eq.s32.totalorder %s11, 1
    %p122 = por %p120, %p121
    %p123 = scmp.ne.s32.totalorder %s115, %s118
    %p124 = scmp.eq.s32.totalorder %s11, 0
    %p125 = por %p123, %p124
    %p126 = scmp.ne.s32.totalorder %s115, %s118
    %p127 = scmp.eq.s32.totalorder %s16, 1
    %p128 = por %p126, %p127
    %p129 = scmp.ne.s32.totalorder %s118, %s119
    %p130 = scmp.eq.s32.totalorder %s16, 0
    %p131 = por %p129, %p130
    %p132 = scmp.ne.s32.totalorder %s118, %s119
    %p133 = scmp.eq.s32.totalorder %s17, 1
    %p134 = por %p132, %p133
    %p136 = scmp.ne.s32.totalorder %s119, %s135
    %p137 = scmp.eq.s32.totalorder %s17, 0
    %p138 = por %p136, %p137
    %s139 = ssub.s32 %s18, %s30
    %p140 = scmp.eq.s32.totalorder %s139, 0
    %s142 = sadd.s32 %s141, 1
    %s143 = scalar_select %p140, %s141, %s142
    %p146 = pneg %p140
    %p147 = scmp.eq.s32.totalorder %s11, 1
    %p148 = por %p146, %p147
    %p149 = scmp.ne.s32.totalorder %s141, %s144
    %p150 = scmp.eq.s32.totalorder %s11, 0
    %p151 = por %p149, %p150
    %p152 = scmp.ne.s32.totalorder %s141, %s144
    %p153 = scmp.eq.s32.totalorder %s16, 1
    %p154 = por %p152, %p153
    %p155 = scmp.ne.s32.totalorder %s144, %s145
    %p156 = scmp.eq.s32.totalorder %s16, 0
    %p157 = por %p155, %p156
    %p158 = scmp.ne.s32.totalorder %s144, %s145
    %p159 = scmp.eq.s32.totalorder %s17, 1
    %p160 = por %p158, %p159
    %p162 = scmp.ne.s32.totalorder %s145, %s161
    %p163 = scmp.eq.s32.totalorder %s17, 0
    %p164 = por %p162, %p163
    %s165 = ssub.s32 %s18, %s30
    %s166 = ssub.s32 %s19, %s26
    %s167 = sor.u32 %s165, %s166
    %p168 = scmp.eq.s32.totalorder %s167, 0
    %s170 = sadd.s32 %s169, 1
    %s171 = scalar_select %p168, %s169, %s170
    %p174 = pneg %p168
    %p175 = scmp.eq.s32.totalorder %s11, 1
    %p176 = por %p174, %p175
    %p177 = scmp.ne.s32.totalorder %s169, %s172
    %p178 = scmp.eq.s32.totalorder %s11, 0
    %p179 = por %p177, %p178
    %p180 = scmp.ne.s32.totalorder %s169, %s172
    %p181 = scmp.eq.s32.totalorder %s16, 1
    %p182 = por %p180, %p181
    %p183 = scmp.ne.s32.totalorder %s172, %s173
    %p184 = scmp.eq.s32.totalorder %s16, 0
    %p185 = por %p183, %p184
    %p186 = scmp.ne.s32.totalorder %s172, %s173
    %p187 = scmp.eq.s32.totalorder %s17, 1
    %p188 = por %p186, %p187
    %p190 = scmp.ne.s32.totalorder %s173, %s189
    %p191 = scmp.eq.s32.totalorder %s17, 0
    %p192 = por %p190, %p191
    %p193 = scmp.le.s32.totalorder 1, %s11
    %p194 = scmp.lt.s32.totalorder %s11, 3
    %p195 = pnand %p193, %p194
    %p196 = pneg %p195
    // Predicated region
    $region9: #{transformer_decoder_forward.24} parent=5 // pred_check
      _
    $region10: #{transformer_decoder_forward.24} parent=5 // pred_check_branch
      %198 = sbr.rel (%p195) target = $region12
    $region11: #{transformer_decoder_forward.24} parent=5 // pred_region
      %s199 = ssub.s32 %s11, 1
    $region12: #{transformer_decoder_forward.24} parent=5 // pred_fallthru
      _
    %p200 = scmp.lt.s32.totalorder %s11, 2
    // Predicated region
    $region13: #{transformer_decoder_forward.24} parent=5 // pred_check
      %p201 = pneg %p200
    $region14: #{transformer_decoder_forward.24} parent=5 // pred_check_branch
      %203 = sbr.rel (%p201) target = $region16
    $region15: #{transformer_decoder_forward.24} parent=5 // pred_region
      // Predicated region
      $region17: #{transformer_decoder_forward.24} parent=15 // pred_check
        %p204 = pneg %p45
      $region18: #{transformer_decoder_forward.24} parent=15 // pred_check_branch
        %206 = sbr.rel (%p204) target = $region20
      $region19: #{transformer_decoder_forward.24} parent=15 // pred_region
        %p207 = scmp.lt.s32.totalorder %s18, 1
        %s208 = scalar_select %p207, %s18, 1
        %p209 = scmp.lt.s32.totalorder %s19, 0
        %s210 = scalar_select %p209, %s19, 0
        %s211 = sadd.s32 %s210, %s208
        %s212 = smul.addr %s211, 4
        %s213 = scalar_lea.vmem %s0, %s212
      $region20: #{transformer_decoder_forward.24} parent=15 // pred_fallthru
        _
      // Predicated region
      $region21: #{transformer_decoder_forward.24} parent=15 // pred_check
        %p214 = pneg %p71
      $region22: #{transformer_decoder_forward.24} parent=15 // pred_check_branch
        %216 = sbr.rel (%p214) target = $region24
      $region23: #{transformer_decoder_forward.24} parent=15 // pred_region
        %p217 = scmp.lt.s32.totalorder %s18, 1
        %s218 = scalar_select %p217, %s18, 1
        %s219 = smul.addr %s218, 4
        %s220 = scalar_lea.vmem %s1, %s219
      $region24: #{transformer_decoder_forward.24} parent=15 // pred_fallthru
        _
      // Predicated region
      $region25: #{transformer_decoder_forward.24} parent=15 // pred_check
        %p221 = pneg %p97
      $region26: #{transformer_decoder_forward.24} parent=15 // pred_check_branch
        %223 = sbr.rel (%p221) target = $region28
      $region27: #{transformer_decoder_forward.24} parent=15 // pred_region
        %p224 = scmp.lt.s32.totalorder %s18, 1
        %s225 = scalar_select %p224, %s18, 1
        %s226 = smul.addr %s225, 4
        %s227 = scalar_lea.vmem %s2, %s226
      $region28: #{transformer_decoder_forward.24} parent=15 // pred_fallthru
        _
      // Predicated region
      $region29: #{transformer_decoder_forward.24} parent=15 // pred_check
        %p228 = pneg %p125
      $region30: #{transformer_decoder_forward.24} parent=15 // pred_check_branch
        %230 = sbr.rel (%p228) target = $region32
      $region31: #{transformer_decoder_forward.24} parent=15 // pred_region
        %p231 = scmp.lt.s32.totalorder %s18, 1
        %s232 = scalar_select %p231, %s18, 1
        %p233 = scmp.lt.s32.totalorder %s19, 0
        %s234 = scalar_select %p233, %s19, 0
        %s235 = sadd.s32 %s234, %s232
        %s236 = smul.addr %s235, 8
        %s237 = scalar_lea.vmem %s3, %s236
      $region32: #{transformer_decoder_forward.24} parent=15 // pred_fallthru
        _
      // Predicated region
      $region33: #{transformer_decoder_forward.24} parent=15 // pred_check
        %p238 = pneg %p151
      $region34: #{transformer_decoder_forward.24} parent=15 // pred_check_branch
        %240 = sbr.rel (%p238) target = $region36
      $region35: #{transformer_decoder_forward.24} parent=15 // pred_region
        %p241 = scmp.lt.s32.totalorder %s18, 1
        %s242 = scalar_select %p241, %s18, 1
        %s243 = scalar_lea.vmem %s4, %s242
      $region36: #{transformer_decoder_forward.24} parent=15 // pred_fallthru
        _
    $region16: #{transformer_decoder_forward.24} parent=5 // pred_fallthru
      _
    %p244 = scmp.le.s32.totalorder 1, %s11
    %p245 = scmp.lt.s32.totalorder %s11, 3
    %p246 = pnand %p244, %p245
    %p247 = pneg %p246
    // Predicated region
    $region37: #{transformer_decoder_forward.24} parent=5 // pred_check
      _
    $region38: #{transformer_decoder_forward.24} parent=5 // pred_check_branch
      %249 = sbr.rel (%p246) target = $region40
    $region39: #{transformer_decoder_forward.24} parent=5 // pred_region
      %s250 = ssub.s32 %s11, 1
      %p251 = scmp.lt.s32.totalorder %s20, 1
      %s252 = scalar_select %p251, %s20, 1
      %p253 = scmp.lt.s32.totalorder %s21, 0
      %s254 = scalar_select %p253, %s21, 0
      %s255 = sadd.s32 %s254, %s252
      %s256 = smul.addr %s255, 4
      %s257 = scalar_lea.vmem %s0, %s256
      %p258 = pneg %p51
      %p259 = pneg %p48
      %p260 = scmp.lt.s32.totalorder %s20, 1
      %s261 = scalar_select %p260, %s20, 1
      %s262 = smul.addr %s261, 4
      %s263 = scalar_lea.vmem %s1, %s262
      %p264 = pneg %p77
      %p265 = pneg %p74
      %p266 = scmp.lt.s32.totalorder %s20, 1
      %s267 = scalar_select %p266, %s20, 1
      %s268 = smul.addr %s267, 4
      %s269 = scalar_lea.vmem %s2, %s268
      %p270 = pneg %p103
      %p271 = pneg %p100
      %p272 = scmp.lt.s32.totalorder %s20, 1
      %s273 = scalar_select %p272, %s20, 1
      %p274 = scmp.lt.s32.totalorder %s21, 0
      %s275 = scalar_select %p274, %s21, 0
      %s276 = sadd.s32 %s275, %s273
      %s277 = smul.addr %s276, 8
      %s278 = scalar_lea.vmem %s3, %s277
      %p279 = pneg %p131
      %p280 = pneg %p128
      %p281 = scmp.lt.s32.totalorder %s20, 1
      %s282 = scalar_select %p281, %s20, 1
      %s283 = scalar_lea.vmem %s4, %s282
      %p284 = pneg %p157
      %p285 = pneg %p154
      %p286 = pneg %p185
      %p287 = pneg %p182
      %p288 = scmp.lt.s32.totalorder %s20, 1
      %s289 = scalar_select %p288, %s20, 1
      %p290 = scmp.lt.s32.totalorder %s21, 0
      %s291 = scalar_select %p290, %s21, 0
      %s292 = sadd.s32 %s291, %s289
      %s293 = smul.addr %s292, 4
      %s294 = scalar_lea.vmem %s5, %s293
      %p295 = scmp.lt.s32.totalorder %s20, 1
      %s296 = scalar_select %p295, %s20, 1
      %p297 = scmp.lt.s32.totalorder %s21, 0
      %s298 = scalar_select %p297, %s21, 0
      %s299 = sadd.s32 %s298, %s296
      %s300 = smul.addr %s299, 4
      %s301 = scalar_lea.vmem %s0, %s300
      %p302 = scmp.lt.s32.totalorder %s20, 1
      %s303 = scalar_select %p302, %s20, 1
      %s304 = smul.addr %s303, 4
      %s305 = scalar_lea.vmem %s1, %s304
      %p306 = scmp.lt.s32.totalorder %s20, 1
      %s307 = scalar_select %p306, %s20, 1
      %s308 = smul.addr %s307, 4
      %s309 = scalar_lea.vmem %s2, %s308
      %p310 = scmp.lt.s32.totalorder %s20, 1
      %s311 = scalar_select %p310, %s20, 1
      %p312 = scmp.lt.s32.totalorder %s21, 0
      %s313 = scalar_select %p312, %s21, 0
      %s314 = sadd.s32 %s313, %s311
      %s315 = smul.addr %s314, 8
      %s316 = scalar_lea.vmem %s3, %s315
      %p317 = scmp.lt.s32.totalorder %s20, 1
      %s318 = scalar_select %p317, %s20, 1
      %s319 = scalar_lea.vmem %s4, %s318
      %p320 = scmp.lt.s32.totalorder %s20, 1
      %s321 = scalar_select %p320, %s20, 1
      %p322 = scmp.lt.s32.totalorder %s21, 0
      %s323 = scalar_select %p322, %s21, 0
      %s324 = sadd.s32 %s323, %s321
      %s325 = smul.addr %s324, 4
      %s326 = scalar_lea.vmem %s5, %s325
      %v328 = vld [vmem:[%s319] sm:$0x1]
      %vm329 = vcmp.gt.f32.partialorder %v328, 0.5
      %v330 = vld [vmem:[%s316] sm:$0xff]
      %vm331 = vcmp.gt.f32.partialorder %v330, 0.5
      %v332 = vsel %vm329, 1, 0
      %v333 = vlaneseq
      %v334 = vshrl.u32 %v333, 7
      %v335 = vsub.s32 0, %v334
      %v336 = vrot.slane %v332, %v335
      %vm337 = vcmp.eq.s32.totalorder %v336, 1
      %v338 = vsel %vm331, 1, 0
      %339 = vset.pattern.permute.xlu0 0
      %340 = vperm.xlu0 %339, %v338
      %v341 = vpop.permute.xlu0 %340
      %vm342 = vcmp.eq.s32.totalorder %v341, 1
      %vm343 = vmor %vm337, %vm342
      %v344 = vld [vmem:[%s301] sm:$0xf]
      %v345 = vld [vmem:[%s305] sm:$0xf]
      %v346 = vld [vmem:[%s309] sm:$0xf]
      %vm347 = vcmask 261120
      %v349 = vsel %vm347, %v344, 0
      %v352 = vsel %vm347, %v345, 0
      %354 = vmatprep.subr.bf16.mxu0 0
      %355 = vmatpush1.bf16.xpose.msra.mxu0 0
      %356 = vmatprep.subr.bf16.mxu0 0
      %357 = vmatpush1.bf16.xpose.msra.mxu0 0
      %358 = vmatprep.subr.bf16.mxu0 0
      %359 = vmatpush1.bf16.xpose.msra.mxu0 0
      %360 = vmatprep.subr.bf16.mxu0 0
      %361 = vmatpush1.bf16.xpose.msra.mxu0 0
      %362 = vmatprep.subr.bf16.mxu0 0
      %363 = vmatpush1.bf16.xpose.msra.mxu0 0
      %364 = vmatprep.subr.bf16.mxu0 0
      %365 = vmatpush1.bf16.xpose.msra.mxu0 0
      %366 = vmatprep.subr.bf16.mxu0 0
      %367 = vmatpush1.bf16.xpose.msra.mxu0 0
      %368 = vmatprep.subr.bf16.mxu0 0
      %369 = vmatpush1.bf16.xpose.msra.mxu0 %v352
      %370 = vmatprep.subr.bf16.mxu0 0
      %371 = vmatpush2.bf16.xpose.msra.mxu0 0
      %372 = vmatprep.subr.bf16.mxu0 0
      %373 = vmatpush2.bf16.xpose.msra.mxu0 0
      %374 = vmatprep.subr.bf16.mxu0 0
      %375 = vmatpush2.bf16.xpose.msra.mxu0 0
      %376 = vmatprep.subr.bf16.mxu0 0
      %377 = vmatpush2.bf16.xpose.msra.mxu0 0
      %378 = vmatprep.subr.bf16.mxu0 0
      %379 = vmatpush2.bf16.xpose.msra.mxu0 0
      %380 = vmatprep.subr.bf16.mxu0 0
      %381 = vmatpush2.bf16.xpose.msra.mxu0 0
      %382 = vmatprep.subr.bf16.mxu0 0
      %383 = vmatpush2.bf16.xpose.msra.mxu0 0
      %384 = vmatprep.subr.bf16.mxu0 0
      %385 = vmatpush2.bf16.xpose.msra.mxu0 0
      %386 = vmatprep.mubr.bf16.mxu0 0
      %387 = vmatmul.mubr.bf16.gmra.mxu0 %v349
      %v388 = vpop.f32.mrf.mxu0
      %v389 = vadd.f32 0.0, %v388
      %v390 = vpop.f32.mrf.mxu0
      %v391 = vpop.f32.mrf.mxu0
      %v392 = vpop.f32.mrf.mxu0
      %393 = vdwg.mxu0
      %v394 = vmul.f32 %v389, 0.17677669
      %v395 = vsel %vm343, -1e+09, %v394
      %vm396 = vcmask 64512
      %v397 = vsel %vm396, %v395, -inf
      %398 = vmax.xlane.f32.xlu0 %v397
      %v399 = vpop.xlane.xlu0 %398
      %v400 = vsub.f32 %v395, %v399
      %v401 = vmul.f32 %v400, 1.442695
      %v402 = vpow.pop %v401
      %v403 = vsel %vm396, %v402, 0.0
      %404 = vadd.xlane.f32.xlu0 %v403
      %v405 = vpop.xlane.xlu0 %404
      %v406 = vrcp.pop %v405
      %v407 = vmul.f32 %v402, %v406
      %v408 = vpack.c.bf16 %v407, %v407
      %v410 = vsel %vm396, %v408, 0
      %vm412 = vcmask 1043456
      %v414 = vsel %vm412, %v346, 0
      %416 = vmatprep.subr.bf16.mxu0 0
      %417 = vmatpush1.bf16.msra.mxu0 0
      %418 = vmatprep.subr.bf16.mxu0 0
      %419 = vmatpush1.bf16.msra.mxu0 0
      %420 = vmatprep.subr.bf16.mxu0 0
      %421 = vmatpush1.bf16.msra.mxu0 0
      %422 = vmatprep.subr.bf16.mxu0 0
      %423 = vmatpush1.bf16.msra.mxu0 0
      %424 = vmatprep.subr.bf16.mxu0 0
      %425 = vmatpush1.bf16.msra.mxu0 0
      %426 = vmatprep.subr.bf16.mxu0 0
      %427 = vmatpush1.bf16.msra.mxu0 0
      %428 = vmatprep.subr.bf16.mxu0 0
      %429 = vmatpush1.bf16.msra.mxu0 0
      %430 = vmatprep.subr.bf16.mxu0 0
      %431 = vmatpush1.bf16.msra.mxu0 %v414
      %432 = vmatprep.subr.bf16.mxu0 0
      %433 = vmatpush2.bf16.msra.mxu0 0
      %434 = vmatprep.subr.bf16.mxu0 0
      %435 = vmatpush2.bf16.msra.mxu0 0
      %436 = vmatprep.subr.bf16.mxu0 0
      %437 = vmatpush2.bf16.msra.mxu0 0
      %438 = vmatprep.subr.bf16.mxu0 0
      %439 = vmatpush2.bf16.msra.mxu0 0
      %440 = vmatprep.subr.bf16.mxu0 0
      %441 = vmatpush2.bf16.msra.mxu0 0
      %442 = vmatprep.subr.bf16.mxu0 0
      %443 = vmatpush2.bf16.msra.mxu0 0
      %444 = vmatprep.subr.bf16.mxu0 0
      %445 = vmatpush2.bf16.msra.mxu0 0
      %446 = vmatprep.subr.bf16.mxu0 0
      %447 = vmatpush2.bf16.msra.mxu0 0
      %448 = vmatprep.mubr.bf16.mxu0 0
      %449 = vmatmul.mubr.bf16.gmra.mxu0 %v410
      %v450 = vpop.f32.mrf.mxu0
      %v451 = vadd.f32 0.0, %v450
      %v452 = vpop.f32.mrf.mxu0
      %v453 = vpop.f32.mrf.mxu0
      %v454 = vpop.f32.mrf.mxu0
      %455 = vdwg.mxu0
      %v457 = vunpack.c.l.b16 %v344
      %v458 = vpack.c.b16 %v457, %v457
      %459 = vrot.lane.b32.xlu0 %v458, 96
      %v460 = vpop.permute.xlu0 %459
      %v462 = vunpack.c.l.b16 %v345
      %v463 = vpack.c.b16 %v462, %v462
      %464 = vrot.lane.b32.xlu0 %v463, 96
      %v465 = vpop.permute.xlu0 %464
      %v467 = vsel %vm347, %v460, 0
      %v470 = vsel %vm347, %v465, 0
      %472 = vmatprep.subr.bf16.mxu0 0
      %473 = vmatpush1.bf16.xpose.msra.mxu0 0
      %474 = vmatprep.subr.bf16.mxu0 0
      %475 = vmatpush1.bf16.xpose.msra.mxu0 0
      %476 = vmatprep.subr.bf16.mxu0 0
      %477 = vmatpush1.bf16.xpose.msra.mxu0 0
      %478 = vmatprep.subr.bf16.mxu0 0
      %479 = vmatpush1.bf16.xpose.msra.mxu0 0
      %480 = vmatprep.subr.bf16.mxu0 0
      %481 = vmatpush1.bf16.xpose.msra.mxu0 0
      %482 = vmatprep.subr.bf16.mxu0 0
      %483 = vmatpush1.bf16.xpose.msra.mxu0 0
      %484 = vmatprep.subr.bf16.mxu0 0
      %485 = vmatpush1.bf16.xpose.msra.mxu0 0
      %486 = vmatprep.subr.bf16.mxu0 0
      %487 = vmatpush1.bf16.xpose.msra.mxu0 %v470
      %488 = vmatprep.subr.bf16.mxu0 0
      %489 = vmatpush2.bf16.xpose.msra.mxu0 0
      %490 = vmatprep.subr.bf16.mxu0 0
      %491 = vmatpush2.bf16.xpose.msra.mxu0 0
      %492 = vmatprep.subr.bf16.mxu0 0
      %493 = vmatpush2.bf16.xpose.msra.mxu0 0
      %494 = vmatprep.subr.bf16.mxu0 0
      %495 = vmatpush2.bf16.xpose.msra.mxu0 0
      %496 = vmatprep.subr.bf16.mxu0 0
      %497 = vmatpush2.bf16.xpose.msra.mxu0 0
      %498 = vmatprep.subr.bf16.mxu0 0
      %499 = vmatpush2.bf16.xpose.msra.mxu0 0
      %500 = vmatprep.subr.bf16.mxu0 0
      %501 = vmatpush2.bf16.xpose.msra.mxu0 0
      %502 = vmatprep.subr.bf16.mxu0 0
      %503 = vmatpush2.bf16.xpose.msra.mxu0 0
      %504 = vmatprep.mubr.bf16.mxu0 0
      %505 = vmatmul.mubr.bf16.gmra.mxu0 %v467
      %v506 = vpop.f32.mrf.mxu0
      %v507 = vadd.f32 0.0, %v506
      %v508 = vpop.f32.mrf.mxu0
      %v509 = vpop.f32.mrf.mxu0
      %v510 = vpop.f32.mrf.mxu0
      %511 = vdwg.mxu0
      %v512 = vmul.f32 %v507, 0.17677669
      %v513 = vsel %vm343, -1e+09, %v512
      %v514 = vsel %vm396, %v513, -inf
      %515 = vmax.xlane.f32.xlu0 %v514
      %v516 = vpop.xlane.xlu0 %515
      %v517 = vsub.f32 %v513, %v516
      %v518 = vmul.f32 %v517, 1.442695
      %v519 = vpow.pop %v518
      %v520 = vsel %vm396, %v519, 0.0
      %521 = vadd.xlane.f32.xlu0 %v520
      %v522 = vpop.xlane.xlu0 %521
      %v523 = vrcp.pop %v522
      %v524 = vmul.f32 %v519, %v523
      %v525 = vpack.c.bf16 %v524, %v524
      %v527 = vunpack.c.l.b16 %v346
      %v528 = vpack.c.b16 %v527, %v527
      %529 = vrot.lane.b32.xlu0 %v528, 96
      %v530 = vpop.permute.xlu0 %529
      %v532 = vsel %vm396, %v525, 0
      %v535 = vsel %vm412, %v530, 0
      %537 = vmatprep.subr.bf16.mxu0 0
      %538 = vmatpush1.bf16.msra.mxu0 0
      %539 = vmatprep.subr.bf16.mxu0 0
      %540 = vmatpush1.bf16.msra.mxu0 0
      %541 = vmatprep.subr.bf16.mxu0 0
      %542 = vmatpush1.bf16.msra.mxu0 0
      %543 = vmatprep.subr.bf16.mxu0 0
      %544 = vmatpush1.bf16.msra.mxu0 0
      %545 = vmatprep.subr.bf16.mxu0 0
      %546 = vmatpush1.bf16.msra.mxu0 0
      %547 = vmatprep.subr.bf16.mxu0 0
      %548 = vmatpush1.bf16.msra.mxu0 0
      %549 = vmatprep.subr.bf16.mxu0 0
      %550 = vmatpush1.bf16.msra.mxu0 0
      %551 = vmatprep.subr.bf16.mxu0 0
      %552 = vmatpush1.bf16.msra.mxu0 %v535
      %553 = vmatprep.subr.bf16.mxu0 0
      %554 = vmatpush2.bf16.msra.mxu0 0
      %555 = vmatprep.subr.bf16.mxu0 0
      %556 = vmatpush2.bf16.msra.mxu0 0
      %557 = vmatprep.subr.bf16.mxu0 0
      %558 = vmatpush2.bf16.msra.mxu0 0
      %559 = vmatprep.subr.bf16.mxu0 0
      %560 = vmatpush2.bf16.msra.mxu0 0
      %561 = vmatprep.subr.bf16.mxu0 0
      %562 = vmatpush2.bf16.msra.mxu0 0
      %563 = vmatprep.subr.bf16.mxu0 0
      %564 = vmatpush2.bf16.msra.mxu0 0
      %565 = vmatprep.subr.bf16.mxu0 0
      %566 = vmatpush2.bf16.msra.mxu0 0
      %567 = vmatprep.subr.bf16.mxu0 0
      %568 = vmatpush2.bf16.msra.mxu0 0
      %569 = vmatprep.mubr.bf16.mxu0 0
      %570 = vmatmul.mubr.bf16.gmra.mxu0 %v532
      %v571 = vpop.f32.mrf.mxu0
      %v572 = vadd.f32 0.0, %v571
      %v573 = vpop.f32.mrf.mxu0
      %v574 = vpop.f32.mrf.mxu0
      %v575 = vpop.f32.mrf.mxu0
      %576 = vdwg.mxu0
      %577 = vrot.lane.b32.xlu0 %v458, 64
      %v578 = vpop.permute.xlu0 %577
      %579 = vrot.lane.b32.xlu0 %v463, 64
      %v580 = vpop.permute.xlu0 %579
      %v582 = vsel %vm347, %v578, 0
      %v585 = vsel %vm347, %v580, 0
      %587 = vmatprep.subr.bf16.mxu0 0
      %588 = vmatpush1.bf16.xpose.msra.mxu0 0
      %589 = vmatprep.subr.bf16.mxu0 0
      %590 = vmatpush1.bf16.xpose.msra.mxu0 0
      %591 = vmatprep.subr.bf16.mxu0 0
      %592 = vmatpush1.bf16.xpose.msra.mxu0 0
      %593 = vmatprep.subr.bf16.mxu0 0
      %594 = vmatpush1.bf16.xpose.msra.mxu0 0
      %595 = vmatprep.subr.bf16.mxu0 0
      %596 = vmatpush1.bf16.xpose.msra.mxu0 0
      %597 = vmatprep.subr.bf16.mxu0 0
      %598 = vmatpush1.bf16.xpose.msra.mxu0 0
      %599 = vmatprep.subr.bf16.mxu0 0
      %600 = vmatpush1.bf16.xpose.msra.mxu0 0
      %601 = vmatprep.subr.bf16.mxu0 0
      %602 = vmatpush1.bf16.xpose.msra.mxu0 %v585
      %603 = vmatprep.subr.bf16.mxu0 0
      %604 = vmatpush2.bf16.xpose.msra.mxu0 0
      %605 = vmatprep.subr.bf16.mxu0 0
      %606 = vmatpush2.bf16.xpose.msra.mxu0 0
      %607 = vmatprep.subr.bf16.mxu0 0
      %608 = vmatpush2.bf16.xpose.msra.mxu0 0
      %609 = vmatprep.subr.bf16.mxu0 0
      %610 = vmatpush2.bf16.xpose.msra.mxu0 0
      %611 = vmatprep.subr.bf16.mxu0 0
      %612 = vmatpush2.bf16.xpose.msra.mxu0 0
      %613 = vmatprep.subr.bf16.mxu0 0
      %614 = vmatpush2.bf16.xpose.msra.mxu0 0
      %615 = vmatprep.subr.bf16.mxu0 0
      %616 = vmatpush2.bf16.xpose.msra.mxu0 0
      %617 = vmatprep.subr.bf16.mxu0 0
      %618 = vmatpush2.bf16.xpose.msra.mxu0 0
      %619 = vmatprep.mubr.bf16.mxu0 0
      %620 = vmatmul.mubr.bf16.gmra.mxu0 %v582
      %v621 = vpop.f32.mrf.mxu0
      %v622 = vadd.f32 0.0, %v621
      %v623 = vpop.f32.mrf.mxu0
      %v624 = vpop.f32.mrf.mxu0
      %v625 = vpop.f32.mrf.mxu0
      %626 = vdwg.mxu0
      %v627 = vmul.f32 %v622, 0.17677669
      %v628 = vsel %vm343, -1e+09, %v627
      %v629 = vsel %vm396, %v628, -inf
      %630 = vmax.xlane.f32.xlu0 %v629
      %v631 = vpop.xlane.xlu0 %630
      %v632 = vsub.f32 %v628, %v631
      %v633 = vmul.f32 %v632, 1.442695
      %v634 = vpow.pop %v633
      %v635 = vsel %vm396, %v634, 0.0
      %636 = vadd.xlane.f32.xlu0 %v635
      %v637 = vpop.xlane.xlu0 %636
      %v638 = vrcp.pop %v637
      %v639 = vmul.f32 %v634, %v638
      %v640 = vpack.c.bf16 %v639, %v639
      %641 = vrot.lane.b32.xlu0 %v528, 64
      %v642 = vpop.permute.xlu0 %641
      %v644 = vsel %vm396, %v640, 0
      %v647 = vsel %vm412, %v642, 0
      %649 = vmatprep.subr.bf16.mxu0 0
      %650 = vmatpush1.bf16.msra.mxu0 0
      %651 = vmatprep.subr.bf16.mxu0 0
      %652 = vmatpush1.bf16.msra.mxu0 0
      %653 = vmatprep.subr.bf16.mxu0 0
      %654 = vmatpush1.bf16.msra.mxu0 0
      %655 = vmatprep.subr.bf16.mxu0 0
      %656 = vmatpush1.bf16.msra.mxu0 0
      %657 = vmatprep.subr.bf16.mxu0 0
      %658 = vmatpush1.bf16.msra.mxu0 0
      %659 = vmatprep.subr.bf16.mxu0 0
      %660 = vmatpush1.bf16.msra.mxu0 0
      %661 = vmatprep.subr.bf16.mxu0 0
      %662 = vmatpush1.bf16.msra.mxu0 0
      %663 = vmatprep.subr.bf16.mxu0 0
      %664 = vmatpush1.bf16.msra.mxu0 %v647
      %665 = vmatprep.subr.bf16.mxu0 0
      %666 = vmatpush2.bf16.msra.mxu0 0
      %667 = vmatprep.subr.bf16.mxu0 0
      %668 = vmatpush2.bf16.msra.mxu0 0
      %669 = vmatprep.subr.bf16.mxu0 0
      %670 = vmatpush2.bf16.msra.mxu0 0
      %671 = vmatprep.subr.bf16.mxu0 0
      %672 = vmatpush2.bf16.msra.mxu0 0
      %673 = vmatprep.subr.bf16.mxu0 0
      %674 = vmatpush2.bf16.msra.mxu0 0
      %675 = vmatprep.subr.bf16.mxu0 0
      %676 = vmatpush2.bf16.msra.mxu0 0
      %677 = vmatprep.subr.bf16.mxu0 0
      %678 = vmatpush2.bf16.msra.mxu0 0
      %679 = vmatprep.subr.bf16.mxu0 0
      %680 = vmatpush2.bf16.msra.mxu0 0
      %681 = vmatprep.mubr.bf16.mxu0 0
      %682 = vmatmul.mubr.bf16.gmra.mxu0 %v644
      %v683 = vpop.f32.mrf.mxu0
      %v684 = vadd.f32 0.0, %v683
      %v685 = vpop.f32.mrf.mxu0
      %v686 = vpop.f32.mrf.mxu0
      %v687 = vpop.f32.mrf.mxu0
      %688 = vdwg.mxu0
      %689 = vrot.lane.b32.xlu0 %v458, 32
      %v690 = vpop.permute.xlu0 %689
      %691 = vrot.lane.b32.xlu0 %v463, 32
      %v692 = vpop.permute.xlu0 %691
      %v694 = vsel %vm347, %v690, 0
      %v697 = vsel %vm347, %v692, 0
      %699 = vmatprep.subr.bf16.mxu0 0
      %700 = vmatpush1.bf16.xpose.msra.mxu0 0
      %701 = vmatprep.subr.bf16.mxu0 0
      %702 = vmatpush1.bf16.xpose.msra.mxu0 0
      %703 = vmatprep.subr.bf16.mxu0 0
      %704 = vmatpush1.bf16.xpose.msra.mxu0 0
      %705 = vmatprep.subr.bf16.mxu0 0
      %706 = vmatpush1.bf16.xpose.msra.mxu0 0
      %707 = vmatprep.subr.bf16.mxu0 0
      %708 = vmatpush1.bf16.xpose.msra.mxu0 0
      %709 = vmatprep.subr.bf16.mxu0 0
      %710 = vmatpush1.bf16.xpose.msra.mxu0 0
      %711 = vmatprep.subr.bf16.mxu0 0
      %712 = vmatpush1.bf16.xpose.msra.mxu0 0
      %713 = vmatprep.subr.bf16.mxu0 0
      %714 = vmatpush1.bf16.xpose.msra.mxu0 %v697
      %715 = vmatprep.subr.bf16.mxu0 0
      %716 = vmatpush2.bf16.xpose.msra.mxu0 0
      %717 = vmatprep.subr.bf16.mxu0 0
      %718 = vmatpush2.bf16.xpose.msra.mxu0 0
      %719 = vmatprep.subr.bf16.mxu0 0
      %720 = vmatpush2.bf16.xpose.msra.mxu0 0
      %721 = vmatprep.subr.bf16.mxu0 0
      %722 = vmatpush2.bf16.xpose.msra.mxu0 0
      %723 = vmatprep.subr.bf16.mxu0 0
      %724 = vmatpush2.bf16.xpose.msra.mxu0 0
      %725 = vmatprep.subr.bf16.mxu0 0
      %726 = vmatpush2.bf16.xpose.msra.mxu0 0
      %727 = vmatprep.subr.bf16.mxu0 0
      %728 = vmatpush2.bf16.xpose.msra.mxu0 0
      %729 = vmatprep.subr.bf16.mxu0 0
      %730 = vmatpush2.bf16.xpose.msra.mxu0 0
      %731 = vmatprep.mubr.bf16.mxu0 0
      %732 = vmatmul.mubr.bf16.gmra.mxu0 %v694
      %v733 = vpop.f32.mrf.mxu0
      %v734 = vadd.f32 0.0, %v733
      %v735 = vpop.f32.mrf.mxu0
      %v736 = vpop.f32.mrf.mxu0
      %v737 = vpop.f32.mrf.mxu0
      %738 = vdwg.mxu0
      %v739 = vmul.f32 %v734, 0.17677669
      %v740 = vsel %vm343, -1e+09, %v739
      %v741 = vsel %vm396, %v740, -inf
      %742 = vmax.xlane.f32.xlu0 %v741
      %v743 = vpop.xlane.xlu0 %742
      %v744 = vsub.f32 %v740, %v743
      %v745 = vmul.f32 %v744, 1.442695
      %v746 = vpow.pop %v745
      %v747 = vsel %vm396, %v746, 0.0
      %748 = vadd.xlane.f32.xlu0 %v747
      %v749 = vpop.xlane.xlu0 %748
      %v750 = vrcp.pop %v749
      %v751 = vmul.f32 %v746, %v750
      %v752 = vpack.c.bf16 %v751, %v751
      %753 = vrot.lane.b32.xlu0 %v528, 32
      %v754 = vpop.permute.xlu0 %753
      %v756 = vsel %vm396, %v752, 0
      %v759 = vsel %vm412, %v754, 0
      %761 = vmatprep.subr.bf16.mxu0 0
      %762 = vmatpush1.bf16.msra.mxu0 0
      %763 = vmatprep.subr.bf16.mxu0 0
      %764 = vmatpush1.bf16.msra.mxu0 0
      %765 = vmatprep.subr.bf16.mxu0 0
      %766 = vmatpush1.bf16.msra.mxu0 0
      %767 = vmatprep.subr.bf16.mxu0 0
      %768 = vmatpush1.bf16.msra.mxu0 0
      %769 = vmatprep.subr.bf16.mxu0 0
      %770 = vmatpush1.bf16.msra.mxu0 0
      %771 = vmatprep.subr.bf16.mxu0 0
      %772 = vmatpush1.bf16.msra.mxu0 0
      %773 = vmatprep.subr.bf16.mxu0 0
      %774 = vmatpush1.bf16.msra.mxu0 0
      %775 = vmatprep.subr.bf16.mxu0 0
      %776 = vmatpush1.bf16.msra.mxu0 %v759
      %777 = vmatprep.subr.bf16.mxu0 0
      %778 = vmatpush2.bf16.msra.mxu0 0
      %779 = vmatprep.subr.bf16.mxu0 0
      %780 = vmatpush2.bf16.msra.mxu0 0
      %781 = vmatprep.subr.bf16.mxu0 0
      %782 = vmatpush2.bf16.msra.mxu0 0
      %783 = vmatprep.subr.bf16.mxu0 0
      %784 = vmatpush2.bf16.msra.mxu0 0
      %785 = vmatprep.subr.bf16.mxu0 0
      %786 = vmatpush2.bf16.msra.mxu0 0
      %787 = vmatprep.subr.bf16.mxu0 0
      %788 = vmatpush2.bf16.msra.mxu0 0
      %789 = vmatprep.subr.bf16.mxu0 0
      %790 = vmatpush2.bf16.msra.mxu0 0
      %791 = vmatprep.subr.bf16.mxu0 0
      %792 = vmatpush2.bf16.msra.mxu0 0
      %793 = vmatprep.mubr.bf16.mxu0 0
      %794 = vmatmul.mubr.bf16.gmra.mxu0 %v756
      %v795 = vpop.f32.mrf.mxu0
      %v796 = vadd.f32 0.0, %v795
      %v797 = vpop.f32.mrf.mxu0
      %v798 = vpop.f32.mrf.mxu0
      %v799 = vpop.f32.mrf.mxu0
      %800 = vdwg.mxu0
      %802 = vrot.lane.b32.xlu0 %v572, 32
      %v803 = vpop.permute.xlu0 %802
      %806 = vrot.lane.b32.xlu0 %v684, 64
      %v807 = vpop.permute.xlu0 %806
      %810 = vrot.lane.b32.xlu0 %v796, 96
      %v811 = vpop.permute.xlu0 %810
      %v813 = vsel %vm347, %v451, %v803
      %vm814 = vcmask 523264
      %v815 = vsel %vm814, %v813, %v807
      %vm816 = vcmask 785408
      %v817 = vsel %vm816, %v815, %v811
      %v818 = vpack.c.bf16 %v817, %v817
      %819 = vst [vmem:[%s326] sm:$0xf] %v818
      %p820 = scmp.lt.s32.totalorder %s20, 1
      %s821 = scalar_select %p820, %s20, 1
      %p822 = scmp.lt.s32.totalorder %s21, 0
      %s823 = scalar_select %p822, %s21, 0
      %s824 = sadd.s32 %s823, %s821
      %s825 = smul.addr %s824, 4
      %s826 = scalar_lea.vmem %s5, %s825
      // Predicated region
      $region41: #{transformer_decoder_forward.24} parent=39 // pred_check
        %p827 = pneg %p182
      $region42: #{transformer_decoder_forward.24} parent=39 // pred_check_branch
        %829 = sbr.rel (%p827) target = $region44
      $region43: #{transformer_decoder_forward.24} parent=39 // pred_region
        _
      $region44: #{transformer_decoder_forward.24} parent=39 // pred_fallthru
        _
    $region40: #{transformer_decoder_forward.24} parent=5 // pred_fallthru
      _
    %p830 = scmp.le.s32.totalorder 2, %s11
    // Predicated region
    $region45: #{transformer_decoder_forward.24} parent=5 // pred_check
      %p831 = pneg %p830
    $region46: #{transformer_decoder_forward.24} parent=5 // pred_check_branch
      %833 = sbr.rel (%p831) target = $region48
    $region47: #{transformer_decoder_forward.24} parent=5 // pred_region
      %s834 = ssub.s32 %s11, 2
      // Predicated region
      $region49: #{transformer_decoder_forward.24} parent=47 // pred_check
        %p835 = pneg %p188
      $region50: #{transformer_decoder_forward.24} parent=47 // pred_check_branch
        %837 = sbr.rel (%p835) target = $region52
      $region51: #{transformer_decoder_forward.24} parent=47 // pred_region
        %p838 = scmp.lt.s32.totalorder %s22, 1
        %s839 = scalar_select %p838, %s22, 1
        %p840 = scmp.lt.s32.totalorder %s23, 0
        %s841 = scalar_select %p840, %s23, 0
        %s842 = sadd.s32 %s841, %s839
        %s843 = smul.addr %s842, 4
        %s844 = scalar_lea.vmem %s5, %s843
      $region52: #{transformer_decoder_forward.24} parent=47 // pred_fallthru
        _
    $region48: #{transformer_decoder_forward.24} parent=5 // pred_fallthru
      _
  $region6: #{transformer_decoder_forward.24} parent=0 // loop_footer
    %s15 = sadd.s32 1, %s11
  $region7: #{transformer_decoder_forward.24} parent=0 // loop_footer_branch
    %10 = sbr.rel target = $region3
  $region8: #{transformer_decoder_forward.24} parent=0 // loop_exit
    _

// kernel: transformer_decoder_forward.37
$region0: #{transformer_decoder_forward.37}
  #allocation0 [shape = 'u32[]', space=smem, size = 0x4, offset = 0x4, fixed_abs, tag = 'smem constant byte address 0x4 - core index']
  #allocation1 [shape = 'u32[144,128]{1,0:T(1,128)}', space=vmem, size = 0x12000, scoped, tag = 'internal scratch']
  #allocation2 [shape = 'f32[16,256]{1,0:T(8,128)}', space=vmem, size = 0x4000, scoped, tag = 'scratch operand']
  %s0 = inlined_call_operand.vmem [shape: bf16[16,128], index: 0, kind: input, shape index: {}]
  %s1 = inlined_call_operand.vmem [shape: bf16[128,256], index: 1, kind: input, shape index: {}]
  %s2 = inlined_call_operand.vmem [shape: f32[1,256], index: 2, kind: input, shape index: {}]
  %s3 = inlined_call_operand.hbm [shape: f32[16,256], index: 3, kind: output, shape index: {}]
  %s4 = sld [smem:[#allocation0]]
  $region30: #{transformer_decoder_forward.37} parent=0
    _
  %s6 = ssub.s32 1, %s4
  %s7 = scalar_select 0, %s6, %s4
  $region1: #{transformer_decoder_forward.37} parent=0
    #allocation3 [shape = 'u8[16384]{0}', space=vmem, size = 0x4000, scoped, tag = 'output window, operand 0, single buffered']
    #allocation4 [shape = 's32[1]{0}', space=sflag, size = 0x4, scoped, tag = 'scoped memory for transformer_decoder_forward.37']
    %8 = vsyncpa [#allocation4], 0
    // Predicated region
    $region2: #{transformer_decoder_forward.37} parent=1 // pred_check
      _
    $region3: #{transformer_decoder_forward.37} parent=1 // pred_check_branch
      %10 = sbr.rel (0) target = $region5
    $region4: #{transformer_decoder_forward.37} parent=1 // pred_region
      _
    $region5: #{transformer_decoder_forward.37} parent=1 // pred_fallthru
      _
    // Predicated region
    $region6: #{transformer_decoder_forward.37} parent=1 // pred_check
      _
    $region7: #{transformer_decoder_forward.37} parent=1 // pred_check_branch
      %12 = sbr.rel (0) target = $region9
    $region8: #{transformer_decoder_forward.37} parent=1 // pred_region
      _
    $region9: #{transformer_decoder_forward.37} parent=1 // pred_fallthru
      _
    // Predicated region
    $region10: #{transformer_decoder_forward.37} parent=1 // pred_check
      _
    $region11: #{transformer_decoder_forward.37} parent=1 // pred_check_branch
      %14 = sbr.rel (0) target = $region13
    $region12: #{transformer_decoder_forward.37} parent=1 // pred_region
      _
    $region13: #{transformer_decoder_forward.37} parent=1 // pred_fallthru
      _
    %p16 = scmp.eq.s32.totalorder 0, 0
    // Predicated region
    $region14: #{transformer_decoder_forward.37} parent=1 // pred_check
      %p17 = pneg %p16
    $region15: #{transformer_decoder_forward.37} parent=1 // pred_check_branch
      %19 = sbr.rel (%p17) target = $region17
    $region16: #{transformer_decoder_forward.37} parent=1 // pred_region
      %20 = vst [vmem:[#allocation2] sm:$0xff] 0.0
      %21 = vst [vmem:[#allocation2 + $0x8] sm:$0xff] 0.0
      %22 = vst [vmem:[#allocation2 + $0x10] sm:$0xff] 0.0
      %23 = vst [vmem:[#allocation2 + $0x18] sm:$0xff] 0.0
    $region17: #{transformer_decoder_forward.37} parent=1 // pred_fallthru
      _
    %v24 = vld [vmem:[#allocation2] sm:$0xff]
    %v25 = vld [vmem:[#allocation2 + $0x8] sm:$0xff]
    %v26 = vld [vmem:[#allocation2 + $0x10] sm:$0xff]
    %v27 = vld [vmem:[#allocation2 + $0x18] sm:$0xff]
    %v28 = vld [vmem:[%s0] sm:$0xf]
    %v29 = vld [vmem:[%s0 + $0x4] sm:$0xf]
    %v30 = vld [vmem:[%s1] sm:$0xff]
    %v31 = vld [vmem:[%s1 + $0x8] sm:$0xff]
    %v32 = vld [vmem:[%s1 + $0x10] sm:$0xff]
    %v33 = vld [vmem:[%s1 + $0x18] sm:$0xff]
    %v34 = vld [vmem:[%s1 + $0x20] sm:$0xff]
    %v35 = vld [vmem:[%s1 + $0x28] sm:$0xff]
    %v36 = vld [vmem:[%s1 + $0x30] sm:$0xff]
    %v37 = vld [vmem:[%s1 + $0x38] sm:$0xff]
    %v38 = vld [vmem:[%s1 + $0x40] sm:$0xff]
    %v39 = vld [vmem:[%s1 + $0x48] sm:$0xff]
    %v40 = vld [vmem:[%s1 + $0x50] sm:$0xff]
    %v41 = vld [vmem:[%s1 + $0x58] sm:$0xff]
    %v42 = vld [vmem:[%s1 + $0x60] sm:$0xff]
    %v43 = vld [vmem:[%s1 + $0x68] sm:$0xff]
    %v44 = vld [vmem:[%s1 + $0x70] sm:$0xff]
    %v45 = vld [vmem:[%s1 + $0x78] sm:$0xff]
    %v48 = vunpack.c.l.b16 %v28
    %v49 = vunpack.c.l.b16 %v29
    %v50 = vpack.c.b16 %v49, %v48
    %v68 = vunpack.c.l.b16 %v30
    %v69 = vunpack.c.h.b16 %v30
    %v70 = vunpack.c.l.b16 %v31
    %v71 = vunpack.c.h.b16 %v31
    %v72 = vunpack.c.l.b16 %v32
    %v73 = vunpack.c.h.b16 %v32
    %v74 = vunpack.c.l.b16 %v33
    %v75 = vunpack.c.h.b16 %v33
    %v76 = vunpack.c.l.b16 %v34
    %v77 = vunpack.c.h.b16 %v34
    %v78 = vunpack.c.l.b16 %v35
    %v79 = vunpack.c.h.b16 %v35
    %v80 = vunpack.c.l.b16 %v36
    %v81 = vunpack.c.h.b16 %v36
    %v82 = vunpack.c.l.b16 %v37
    %v83 = vunpack.c.h.b16 %v37
    %v84 = vunpack.c.l.b16 %v38
    %v85 = vunpack.c.h.b16 %v38
    %v86 = vunpack.c.l.b16 %v39
    %v87 = vunpack.c.h.b16 %v39
    %v88 = vunpack.c.l.b16 %v40
    %v89 = vunpack.c.h.b16 %v40
    %v90 = vunpack.c.l.b16 %v41
    %v91 = vunpack.c.h.b16 %v41
    %v92 = vunpack.c.l.b16 %v42
    %v93 = vunpack.c.h.b16 %v42
    %v94 = vunpack.c.l.b16 %v43
    %v95 = vunpack.c.h.b16 %v43
    %v96 = vunpack.c.l.b16 %v44
    %v97 = vunpack.c.h.b16 %v44
    %v98 = vunpack.c.l.b16 %v45
    %v99 = vunpack.c.h.b16 %v45
    %v100 = vpack.c.b16 %v70, %v68
    %v101 = vpack.c.b16 %v71, %v69
    %v102 = vpack.c.b16 %v74, %v72
    %v103 = vpack.c.b16 %v75, %v73
    %v104 = vpack.c.b16 %v78, %v76
    %v105 = vpack.c.b16 %v79, %v77
    %v106 = vpack.c.b16 %v82, %v80
    %v107 = vpack.c.b16 %v83, %v81
    %v108 = vpack.c.b16 %v86, %v84
    %v109 = vpack.c.b16 %v87, %v85
    %v110 = vpack.c.b16 %v90, %v88
    %v111 = vpack.c.b16 %v91, %v89
    %v112 = vpack.c.b16 %v94, %v92
    %v113 = vpack.c.b16 %v95, %v93
    %v114 = vpack.c.b16 %v98, %v96
    %v115 = vpack.c.b16 %v99, %v97
    %132 = vmatprep.subr.bf16.mxu0 %v115
    %133 = vmatpush1.bf16.msra.mxu0 %v114
    %134 = vmatprep.subr.bf16.mxu0 %v113
    %135 = vmatpush1.bf16.msra.mxu0 %v112
    %136 = vmatprep.subr.bf16.mxu0 %v111
    %137 = vmatpush1.bf16.msra.mxu0 %v110
    %138 = vmatprep.subr.bf16.mxu0 %v109
    %139 = vmatpush1.bf16.msra.mxu0 %v108
    %140 = vmatprep.subr.bf16.mxu0 %v107
    %141 = vmatpush1.bf16.msra.mxu0 %v106
    %142 = vmatprep.subr.bf16.mxu0 %v105
    %143 = vmatpush1.bf16.msra.mxu0 %v104
    %144 = vmatprep.subr.bf16.mxu0 %v103
    %145 = vmatpush1.bf16.msra.mxu0 %v102
    %146 = vmatprep.subr.bf16.mxu0 %v101
    %147 = vmatpush1.bf16.msra.mxu0 %v100
    %148 = vmatprep.subr.bf16.mxu0 0
    %149 = vmatpush2.bf16.msra.mxu0 0
    %150 = vmatprep.subr.bf16.mxu0 0
    %151 = vmatpush2.bf16.msra.mxu0 0
    %152 = vmatprep.subr.bf16.mxu0 0
    %153 = vmatpush2.bf16.msra.mxu0 0
    %154 = vmatprep.subr.bf16.mxu0 0
    %155 = vmatpush2.bf16.msra.mxu0 0
    %156 = vmatprep.subr.bf16.mxu0 0
    %157 = vmatpush2.bf16.msra.mxu0 0
    %158 = vmatprep.subr.bf16.mxu0 0
    %159 = vmatpush2.bf16.msra.mxu0 0
    %160 = vmatprep.subr.bf16.mxu0 0
    %161 = vmatpush2.bf16.msra.mxu0 0
    %162 = vmatprep.subr.bf16.mxu0 0
    %163 = vmatpush2.bf16.msra.mxu0 0
    %164 = vmatprep.mubr.bf16.mxu0 0
    %165 = vmatmul.mubr.bf16.gmra.mxu0 %v50
    %v166 = vpop.f32.mrf.mxu0
    %v167 = vadd.f32 0.0, %v166
    %v168 = vpop.f32.mrf.mxu0
    %v169 = vadd.f32 0.0, %v168
    %v170 = vpop.f32.mrf.mxu0
    %v171 = vadd.f32 0.0, %v170
    %v172 = vpop.f32.mrf.mxu0
    %v173 = vadd.f32 0.0, %v172
    %174 = vdwg.mxu0
    %v175 = vadd.f32 %v24, %v167
    %v176 = vadd.f32 %v25, %v169
    %v177 = vadd.f32 %v26, %v171
    %v178 = vadd.f32 %v27, %v173
    %179 = vst [vmem:[#allocation2] sm:$0xff] %v175
    %180 = vst [vmem:[#allocation2 + $0x8] sm:$0xff] %v176
    %181 = vst [vmem:[#allocation2 + $0x10] sm:$0xff] %v177
    %182 = vst [vmem:[#allocation2 + $0x18] sm:$0xff] %v178
    // Predicated region
    $region18: #{transformer_decoder_forward.37} parent=1 // pred_check
      %p183 = pneg %p16
    $region19: #{transformer_decoder_forward.37} parent=1 // pred_check_branch
      %185 = sbr.rel (%p183) target = $region21
    $region20: #{transformer_decoder_forward.37} parent=1 // pred_region
      %v186 = vld [vmem:[#allocation2] sm:$0xff]
      %v187 = vld [vmem:[#allocation2 + $0x8] sm:$0xff]
      %v188 = vld [vmem:[#allocation2 + $0x10] sm:$0xff]
      %v189 = vld [vmem:[#allocation2 + $0x18] sm:$0xff]
      %v190 = vld [vmem:[%s2] sm:$0x3]
      %v192 = vlaneseq
      %v193 = vshrl.u32 %v192, 7
      %v194 = vsub.s32 0, %v193
      %v195 = vrot.slane %v190, %v194
      %v196 = vlaneseq
      %v197 = vshrl.u32 %v196, 7
      %v198 = vsub.s32 1, %v197
      %v199 = vrot.slane %v190, %v198
      %v202 = vadd.f32 %v186, %v195
      %v203 = vadd.f32 %v187, %v199
      %v204 = vadd.f32 %v188, %v195
      %v205 = vadd.f32 %v189, %v199
      %206 = vst [vmem:[#allocation3] sm:$0xff] %v202
      %207 = vst [vmem:[#allocation3 + $0x8] sm:$0xff] %v203
      %208 = vst [vmem:[#allocation3 + $0x10] sm:$0xff] %v204
      %209 = vst [vmem:[#allocation3 + $0x18] sm:$0xff] %v205
    $region21: #{transformer_decoder_forward.37} parent=1 // pred_fallthru
      _
    // Predicated region
    $region22: #{transformer_decoder_forward.37} parent=1 // pred_check
      _
    $region23: #{transformer_decoder_forward.37} parent=1 // pred_check_branch
      %211 = sbr.rel (0) target = $region25
    $region24: #{transformer_decoder_forward.37} parent=1 // pred_region
      %s213 = ssub.s32 512, 512
      %214 = vsyncadd [#allocation4], %s213
      %s215 = sshll.u32 [#allocation3], 4
      %s216 = int_to_ptr.vmem [resolvable:$true] %s215
      %221 = dma.vmem_to_hbm [thread:$0]  %s216, 512, %s3, [#allocation4], 256, 256, 16
    $region25: #{transformer_decoder_forward.37} parent=1 // pred_fallthru
      _
    // Predicated region
    $region26: #{transformer_decoder_forward.37} parent=1 // pred_check
      _
    $region27: #{transformer_decoder_forward.37} parent=1 // pred_check_branch
      %223 = sbr.rel (0) target = $region29
    $region28: #{transformer_decoder_forward.37} parent=1 // pred_region
      %224 = dma.done [#allocation4], 512
    $region29: #{transformer_decoder_forward.37} parent=1 // pred_fallthru
      _
    %225 = vsyncpa [#allocation4], 1

</llo_original>
